<compile_context>
chip_gen: v7x
topology: tpu7x:2x2x1
jax: 0.10.0
libtpu: 0.0.40
codegen_flags: <defaults>
</compile_context>

<pallas_src>
import functools
import math

import numpy as np
import jax
import jax.numpy as jnp
from jax.experimental import pallas as pl
from jax.experimental.pallas import tpu as pltpu  # noqa: F401  (TPU backend assumed)

# ---------------- synthetic model config ----------------
VOCAB = 100
MAXPOS = 16
HIDDEN = 32          # encoder.config.hidden_size
NUM_HEADS = 2
HEAD_DIM = HIDDEN // NUM_HEADS
INTER = 64
LN_EPS = 1e-12
NEG_INF = -1e9


# ---------------- shared helpers (kernel + reference) ----------------
def _layernorm(v, g, b):
    mu = jnp.mean(v, axis=-1, keepdims=True)
    var = jnp.mean((v - mu) ** 2, axis=-1, keepdims=True)
    return (v - mu) * jax.lax.rsqrt(var + LN_EPS) * g + b


def _lstm_cell(gx, h, c, whh, m, Hh):
    """One masked LSTM step. gx already contains x@Wih + bias. torch gate order i,f,g,o."""
    f32 = jnp.float32
    g = gx + jnp.dot(h, whh, preferred_element_type=f32)
    i_g = jax.nn.sigmoid(g[:, 0 * Hh:1 * Hh])
    f_g = jax.nn.sigmoid(g[:, 1 * Hh:2 * Hh])
    g_g = jnp.tanh(g[:, 2 * Hh:3 * Hh])
    o_g = jax.nn.sigmoid(g[:, 3 * Hh:4 * Hh])
    c_new = f_g * c + i_g * g_g
    h_new = o_g * jnp.tanh(c_new)
    c = m * c_new + (1.0 - m) * c          # carry state through padded steps
    h = m * h_new + (1.0 - m) * h
    return h, c, m * h_new                 # padded-step output is zero


# ============================================================
# Fully fused HierBert kernel
# ============================================================
def _hierbert_kernel(x_ref, tokmask_ref, segmask_ref,
                     wqkv_ref, bqkv_ref, wo_ref, w1_ref, b1_ref, w2_ref, vecs_ref,
                     wih_ref, bih_ref, whh_ref, wa_ref, vec2_ref,
                     out_ref, hid_ref, *, num_heads, head_dim, B, S):
    f32 = jnp.float32
    N, T, H = x_ref.shape
    Hh = H // 2
    scale = 1.0 / math.sqrt(head_dim)

    # -------- packed bias / LN vectors (one (8,H) slab, sliced in-register) --------
    vecs = vecs_ref[...]
    emb_g, emb_b = vecs[0:1, :], vecs[1:2, :]
    bo = vecs[2:3, :]
    ln1_g, ln1_b = vecs[3:4, :], vecs[4:5, :]
    b2 = vecs[5:6, :]
    ln2_g, ln2_b = vecs[6:7, :], vecs[7:8, :]

    # ==================== BERT layer (CLS-only downstream of K/V) ====================
    xf = _layernorm(x_ref[...].reshape(N * T, H), emb_g, emb_b)           # (N*T, H)

    # single packed QKV projection: one MXU pass with a lane-dense (N*T, 3H) output
    qkv = jnp.dot(xf, wqkv_ref[...], preferred_element_type=f32) + bqkv_ref[...]
    qkv3 = qkv.reshape(N, T, 3 * H)

    xf_cls = xf.reshape(N, T, H)[:, 0, :]                                 # (N, H) residual input
    bias = (1.0 - tokmask_ref[...]) * NEG_INF                             # (N, 1, T)

    # multi-head attention, CLS query only; head concat + Wo expressed as a
    # sum over row-blocks of Wo (avoids a minor-dim concatenate).
    attn = jnp.zeros((N, H), f32) + bo
    for h_i in range(num_heads):
        lo = h_i * head_dim
        hi = lo + head_dim
        q1 = qkv3[:, 0:1, lo:hi]                                          # (N, 1, d)
        kh = qkv3[:, :, H + lo:H + hi]                                    # (N, T, d)
        vh = qkv3[:, :, 2 * H + lo:2 * H + hi]                            # (N, T, d)
        s = jnp.einsum("bqd,bkd->bqk", q1, kh,
                       preferred_element_type=f32) * scale + bias         # (N, 1, T)
        s = s - jnp.max(s, axis=-1, keepdims=True)
        p = jnp.exp(s)
        p = p * pl.reciprocal(jnp.sum(p, axis=-1, keepdims=True), approx=True)
        ctx = jnp.einsum("bqk,bkd->bqd", p, vh,
                         preferred_element_type=f32)[:, 0, :]             # (N, d)
        attn = attn + jnp.dot(ctx, wo_ref[lo:hi, :], preferred_element_type=f32)

    # residual + LN, FFN, residual + LN — all on the (N, H) CLS rows only
    x1 = _layernorm(attn + xf_cls, ln1_g, ln1_b)
    ff = jax.nn.gelu(jnp.dot(x1, w1_ref[...], preferred_element_type=f32) + b1_ref[...])
    ff2 = jnp.dot(ff, w2_ref[...], preferred_element_type=f32) + b2
    cls = _layernorm(ff2 + x1, ln2_g, ln2_b)                              # (N, H) == (B*S, H)

    # ==================== LstmAttn segment pooler (in registers) ====================
    segm = segmask_ref[...]                                               # (B, S)
    lengths = jnp.maximum(jnp.sum(segm, axis=1, keepdims=True), 1.0)      # (B, 1)

    # hoisted input projection: one matmul for both directions & all timesteps
    gates_x = (jnp.dot(cls, wih_ref[...], preferred_element_type=f32)
               + bih_ref[...]).reshape(B, S, 8 * Hh)
    whh = whh_ref[...]
    whh_f, whh_b = whh[:, 0:4 * Hh], whh[:, 4 * Hh:8 * Hh]

    # forward direction
    h = jnp.zeros((B, Hh), f32)
    c = jnp.zeros((B, Hh), f32)
    outs_f = []
    for t in range(S):
        m = (lengths > float(t)).astype(f32)
        h, c, o_t = _lstm_cell(gates_x[:, t, 0:4 * Hh], h, c, whh_f, m, Hh)
        outs_f.append(o_t)

    # backward direction
    h = jnp.zeros((B, Hh), f32)
    c = jnp.zeros((B, Hh), f32)
    outs_b = [None] * S
    for t in range(S - 1, -1, -1):
        m = (lengths > float(t)).astype(f32)
        h, c, o_t = _lstm_cell(gates_x[:, t, 4 * Hh:8 * Hh], h, c, whh_b, m, Hh)
        outs_b[t] = o_t

    # attention pooling — reuse register values, never read out_ref back
    vec2 = vec2_ref[...]
    ba, ctxv = vec2[0:1, :], vec2[1:2, :]

    o_full = []
    score_cols = []
    for t in range(S):
        o_t = jnp.concatenate([outs_f[t], outs_b[t]], axis=-1)            # (B, H)
        o_full.append(o_t)
        out_ref[:, t, :] = o_t                                            # full-width store
        act_t = jnp.tanh(jnp.dot(o_t, wa_ref[...], preferred_element_type=f32) + ba)
        score_cols.append(jnp.sum(act_t * ctxv, axis=-1, keepdims=True))  # (B, 1)

    scores = jnp.concatenate(score_cols, axis=-1)                         # (B, S)
    masked = jnp.where(segm > 0.5, scores, jnp.float32(-1e-32))           # faithful to torch code
    masked = masked - jnp.max(masked, axis=1, keepdims=True)
    wexp = jnp.exp(masked)
    w = wexp * pl.reciprocal(jnp.sum(wexp, axis=1, keepdims=True), approx=True)

    hid = jnp.zeros((B, H), f32)
    for t in range(S):
        hid = hid + w[:, t:t + 1] * o_full[t]
    hid_ref[...] = hid


def pallas_hierbert(x_emb, tok_mask3, seg_maskf, weights, B, S):
    """x_emb: (N,T,H); tok_mask3: (N,1,T); seg_maskf: (B,S) -> ((B,S,H), (B,H))."""
    N, T, H = x_emb.shape
    kern = functools.partial(_hierbert_kernel, num_heads=NUM_HEADS,
                             head_dim=HEAD_DIM, B=B, S=S)
    return pl.pallas_call(
        kern,
        out_shape=(jax.ShapeDtypeStruct((B, S, H), jnp.float32),
                   jax.ShapeDtypeStruct((B, H), jnp.float32)),
    )(x_emb, tok_mask3, seg_maskf, *weights)


# ============================================================
# Pure-JAX references (numerical sanity check)
# ============================================================
def ref_bert_cls(x_emb, maskf, p):
    N, T, H = x_emb.shape
    scale = 1.0 / math.sqrt(HEAD_DIM)

    xf = _layernorm(x_emb.reshape(N * T, H), p["emb_ln_g"].reshape(1, -1),
                    p["emb_ln_b"].reshape(1, -1))
    q = (xf @ p["wq"] + p["bq"]).reshape(N, T, H)
    k = (xf @ p["wk"] + p["bk"]).reshape(N, T, H)
    v = (xf @ p["wv"] + p["bv"]).reshape(N, T, H)
    bias = (1.0 - maskf)[:, None, :] * NEG_INF
    heads = []
    for h_i in range(NUM_HEADS):
        sl = slice(h_i * HEAD_DIM, (h_i + 1) * HEAD_DIM)
        s = jnp.einsum("bqd,bkd->bqk", q[..., sl], k[..., sl]) * scale + bias
        pattn = jax.nn.softmax(s, axis=-1)
        heads.append(jnp.einsum("bqk,bkd->bqd", pattn, v[..., sl]))
    ctx = jnp.concatenate(heads, axis=-1).reshape(N * T, H)
    attn = ctx @ p["wo"] + p["bo"]
    x1 = _layernorm(attn + xf, p["ln1_g"].reshape(1, -1), p["ln1_b"].reshape(1, -1))
    ff = jax.nn.gelu(x1 @ p["w1"] + p["b1"])
    ff2 = ff @ p["w2"] + p["b2"]
    x2 = _layernorm(ff2 + x1, p["ln2_g"].reshape(1, -1), p["ln2_b"].reshape(1, -1))
    return x2.reshape(N, T, H)[:, 0, :]


def ref_lstm_attn(x, maskf, wih_fb, b_fb, sp):
    f32 = jnp.float32
    B, T, H = x.shape
    Hh = H // 2
    lengths = jnp.maximum(jnp.sum(maskf, axis=1, keepdims=True), 1.0)
    gates_x = (x.reshape(B * T, H) @ wih_fb + b_fb).reshape(B, T, 8 * Hh)

    h = jnp.zeros((B, Hh), f32)
    c = jnp.zeros((B, Hh), f32)
    outs_f = []
    for t in range(T):
        m = (lengths > float(t)).astype(f32)
        h, c, o = _lstm_cell(gates_x[:, t, 0:4 * Hh], h, c, sp["whh_f"], m, Hh)
        outs_f.append(o)

    h = jnp.zeros((B, Hh), f32)
    c = jnp.zeros((B, Hh), f32)
    outs_b = [None] * T
    for t in range(T - 1, -1, -1):
        m = (lengths > float(t)).astype(f32)
        h, c, o = _lstm_cell(gates_x[:, t, 4 * Hh:8 * Hh], h, c, sp["whh_b"], m, Hh)
        outs_b[t] = o

    outputs = jnp.concatenate([jnp.stack(outs_f, axis=1),
                               jnp.stack(outs_b, axis=1)], axis=-1)     # (B, T, H)
    act = jnp.tanh(outputs.reshape(B * T, H) @ sp["wa"] + sp["ba"].reshape(1, -1)).reshape(B, T, H)
    scores = jnp.sum(act * sp["ctx"].reshape(1, 1, H), axis=-1)
    masked = jnp.where(maskf > 0.5, scores, jnp.float32(-1e-32))
    w = jax.nn.softmax(masked, axis=1)
    hidden = jnp.sum(outputs * w[:, :, None], axis=1)
    return outputs, hidden


# ============================================================
# HierBert forward
# ============================================================
def hierbert_forward(params, input_ids, attention_mask, *, use_pallas=True):
    B, S, T = input_ids.shape
    N = B * S
    H = HIDDEN
    ids_flat = input_ids.reshape(N, T)
    tok_maskf = attention_mask.reshape(N, T).astype(jnp.float32)
    seg_maskf = jnp.any(attention_mask.astype(bool), axis=2).astype(jnp.float32)  # (B, S)

    p = params["bert"]
    sp = params["seg"]

    # token-embedding gather + position add stays in the XLA wrapper (one take)
    x_emb = jnp.take(p["word_emb"], ids_flat, axis=0) + p["pos_emb"][:T][None, :, :]

    # packed weight slabs (lane-dense, few DMA descriptors)
    wqkv = jnp.concatenate([p["wq"], p["wk"], p["wv"]], axis=1)           # (H, 3H)
    bqkv = jnp.concatenate([p["bq"], p["bk"], p["bv"]]).reshape(1, 3 * H)
    vecs = jnp.stack([p["emb_ln_g"], p["emb_ln_b"], p["bo"], p["ln1_g"],
                      p["ln1_b"], p["b2"], p["ln2_g"], p["ln2_b"]], axis=0)  # (8, H)
    wih_fb = jnp.concatenate([sp["wih_f"], sp["wih_b"]], axis=1)          # (H, 8*Hh)
    b_fb = jnp.concatenate([sp["b_f"], sp["b_b"]]).reshape(1, -1)         # (1, 8*Hh)
    whh_fb = jnp.concatenate([sp["whh_f"], sp["whh_b"]], axis=1)          # (Hh, 8*Hh)
    vec2 = jnp.stack([sp["ba"], sp["ctx"]], axis=0)                       # (2, H)

    if use_pallas:
        weights = (wqkv, bqkv, p["wo"], p["w1"], p["b1"].reshape(1, INTER), p["w2"], vecs,
                   wih_fb, b_fb, whh_fb, sp["wa"], vec2)
        outputs, hidden = pallas_hierbert(x_emb, tok_maskf.reshape(N, 1, T),
                                          seg_maskf, weights, B, S)
    else:
        cls = ref_bert_cls(x_emb, tok_maskf, p)
        enc = cls.reshape(B, S, H)
        outputs, hidden = ref_lstm_attn(enc, seg_maskf, wih_fb, b_fb, sp)
    return outputs, hidden


# ============================================================
# deterministic parameter init (synthetic — no checkpoint)
# ============================================================
def init_params(key):
    H, Hh, I = HIDDEN, HIDDEN // 2, INTER
    ks = list(jax.random.split(key, 24))

    def nrm(shape, s=0.05):
        return jax.random.normal(ks.pop(), shape, jnp.float32) * s

    bert = dict(
        word_emb=nrm((VOCAB, H)), pos_emb=nrm((MAXPOS, H)),
        emb_ln_g=jnp.ones((H,), jnp.float32), emb_ln_b=jnp.zeros((H,), jnp.float32),
        wq=nrm((H, H)), bq=jnp.zeros((H,), jnp.float32),
        wk=nrm((H, H)), bk=jnp.zeros((H,), jnp.float32),
        wv=nrm((H, H)), bv=jnp.zeros((H,), jnp.float32),
        wo=nrm((H, H)), bo=jnp.zeros((H,), jnp.float32),
        ln1_g=jnp.ones((H,), jnp.float32), ln1_b=jnp.zeros((H,), jnp.float32),
        w1=nrm((H, I)), b1=jnp.zeros((I,), jnp.float32),
        w2=nrm((I, H)), b2=jnp.zeros((H,), jnp.float32),
        ln2_g=jnp.ones((H,), jnp.float32), ln2_b=jnp.zeros((H,), jnp.float32),
    )
    seg = dict(
        wih_f=nrm((H, 4 * Hh), 0.1), whh_f=nrm((Hh, 4 * Hh), 0.1), b_f=nrm((4 * Hh,), 0.1),
        wih_b=nrm((H, 4 * Hh), 0.1), whh_b=nrm((Hh, 4 * Hh), 0.1), b_b=nrm((4 * Hh,), 0.1),
        wa=nrm((H, H), 0.1), ba=jnp.zeros((H,), jnp.float32),
        ctx=jax.random.uniform(ks.pop(), (H,), jnp.float32),   # torch.rand(hidden)
    )
    return {"bert": bert, "seg": seg}


# ============================================================
if __name__ == "__main__":
    key = jax.random.PRNGKey(0)
    pkey, dkey = jax.random.split(key)
    params = init_params(pkey)

    B, S, T = 2, 4, 8           # batch, max_num_segments, max_segment_size
    input_ids = jax.random.randint(dkey, (B, S, T), 0, VOCAB, dtype=jnp.int32)
    attention_mask = jnp.ones((B, S, T), jnp.int32)
    attention_mask = attention_mask.at[1, 1, 5:].set(0)   # partial segment
    attention_mask = attention_mask.at[1, 2, 3:].set(0)   # partial segment
    attention_mask = attention_mask.at[1, 3, :].set(0)    # fully masked segment

    fwd = jax.jit(hierbert_forward, static_argnames=("use_pallas",))
    outputs, hidden = fwd(params, input_ids, attention_mask, use_pallas=True)
    jax.block_until_ready((outputs, hidden))

    # pure-JAX reference sanity check
    ref_out, ref_hid = hierbert_forward(params, input_ids, attention_mask, use_pallas=False)
    assert outputs.shape == (B, S, HIDDEN) and hidden.shape == (B, HIDDEN)
    np.testing.assert_allclose(np.asarray(outputs), np.asarray(ref_out), rtol=2e-2, atol=2e-2)
    np.testing.assert_allclose(np.asarray(hidden), np.asarray(ref_hid), rtol=2e-2, atol=2e-2)

    print("KERNEL_OK")
</pallas_src>

<mosaic_0001>
module attributes {stable_mosaic.version = 11 : i64} {
  func.func @_hierbert_kernel(%arg0: memref<8x8x32xf32, #tpu.memory_space<vmem>>, %arg1: memref<8x1x8xf32, #tpu.memory_space<vmem>>, %arg2: memref<2x4xf32, #tpu.memory_space<vmem>>, %arg3: memref<32x96xf32, #tpu.memory_space<vmem>>, %arg4: memref<1x96xf32, #tpu.memory_space<vmem>>, %arg5: memref<32x32xf32, #tpu.memory_space<vmem>>, %arg6: memref<32x64xf32, #tpu.memory_space<vmem>>, %arg7: memref<1x64xf32, #tpu.memory_space<vmem>>, %arg8: memref<64x32xf32, #tpu.memory_space<vmem>>, %arg9: memref<8x32xf32, #tpu.memory_space<vmem>>, %arg10: memref<32x128xf32, #tpu.memory_space<vmem>>, %arg11: memref<1x128xf32, #tpu.memory_space<vmem>>, %arg12: memref<16x128xf32, #tpu.memory_space<vmem>>, %arg13: memref<32x32xf32, #tpu.memory_space<vmem>>, %arg14: memref<2x32xf32, #tpu.memory_space<vmem>>, %arg15: memref<2x4x32xf32, #tpu.memory_space<vmem>>, %arg16: memref<2x32xf32, #tpu.memory_space<vmem>>) attributes {dimension_semantics = [], scalar_prefetch = 0 : i64, scratch_operands = 0 : i64, tpu.core_type = #tpu.core_type<tc>} {
    %c0 = arith.constant 0 : index
    %c0_0 = arith.constant 0 : index
    %0 = vector.load %arg9[%c0, %c0_0] : memref<8x32xf32, #tpu.memory_space<vmem>>, vector<8x32xf32>
    %1 = vector.extract_strided_slice %0 {offsets = [0, 0], sizes = [1, 32], strides = [1, 1]} : vector<8x32xf32> to vector<1x32xf32>
    %2 = vector.extract_strided_slice %0 {offsets = [1, 0], sizes = [1, 32], strides = [1, 1]} : vector<8x32xf32> to vector<1x32xf32>
    %3 = vector.extract_strided_slice %0 {offsets = [2, 0], sizes = [1, 32], strides = [1, 1]} : vector<8x32xf32> to vector<1x32xf32>
    %4 = vector.extract_strided_slice %0 {offsets = [3, 0], sizes = [1, 32], strides = [1, 1]} : vector<8x32xf32> to vector<1x32xf32>
    %5 = vector.extract_strided_slice %0 {offsets = [4, 0], sizes = [1, 32], strides = [1, 1]} : vector<8x32xf32> to vector<1x32xf32>
    %6 = vector.extract_strided_slice %0 {offsets = [5, 0], sizes = [1, 32], strides = [1, 1]} : vector<8x32xf32> to vector<1x32xf32>
    %7 = vector.extract_strided_slice %0 {offsets = [6, 0], sizes = [1, 32], strides = [1, 1]} : vector<8x32xf32> to vector<1x32xf32>
    %8 = vector.extract_strided_slice %0 {offsets = [7, 0], sizes = [1, 32], strides = [1, 1]} : vector<8x32xf32> to vector<1x32xf32>
    %c0_1 = arith.constant 0 : index
    %c0_2 = arith.constant 0 : index
    %c0_3 = arith.constant 0 : index
    %9 = vector.load %arg0[%c0_1, %c0_2, %c0_3] : memref<8x8x32xf32, #tpu.memory_space<vmem>>, vector<8x8x32xf32>
    %10 = vector.shape_cast %9 : vector<8x8x32xf32> to vector<64x32xf32>
    %cst = arith.constant dense<0.000000e+00> : vector<64xf32>
    %11 = vector.multi_reduction <add>, %10, %cst [1] : vector<64x32xf32> to vector<64xf32>
    %12 = vector.shape_cast %11 : vector<64xf32> to vector<64x1xf32>
    %cst_4 = arith.constant 3.200000e+01 : f32
    %13 = vector.broadcast %cst_4 : f32 to vector<64x1xf32>
    %14 = arith.divf %12, %13 : vector<64x1xf32>
    %15 = vector.broadcast %14 : vector<64x1xf32> to vector<64x32xf32>
    %16 = arith.subf %10, %15 : vector<64x32xf32>
    %17 = arith.mulf %16, %16 : vector<64x32xf32>
    %cst_5 = arith.constant dense<0.000000e+00> : vector<64xf32>
    %18 = vector.multi_reduction <add>, %17, %cst_5 [1] : vector<64x32xf32> to vector<64xf32>
    %19 = vector.shape_cast %18 : vector<64xf32> to vector<64x1xf32>
    %cst_6 = arith.constant 3.200000e+01 : f32
    %20 = vector.broadcast %cst_6 : f32 to vector<64x1xf32>
    %21 = arith.divf %19, %20 : vector<64x1xf32>
    %22 = vector.broadcast %14 : vector<64x1xf32> to vector<64x32xf32>
    %23 = arith.subf %10, %22 : vector<64x32xf32>
    %cst_7 = arith.constant 9.99999996E-13 : f32
    %24 = vector.broadcast %cst_7 : f32 to vector<64x1xf32>
    %25 = arith.addf %21, %24 : vector<64x1xf32>
    %26 = math.rsqrt %25 : vector<64x1xf32>
    %27 = vector.broadcast %26 : vector<64x1xf32> to vector<64x32xf32>
    %28 = arith.mulf %23, %27 : vector<64x32xf32>
    %29 = vector.broadcast %1 : vector<1x32xf32> to vector<64x32xf32>
    %30 = arith.mulf %28, %29 : vector<64x32xf32>
    %31 = vector.broadcast %2 : vector<1x32xf32> to vector<64x32xf32>
    %32 = arith.addf %30, %31 : vector<64x32xf32>
    %c0_8 = arith.constant 0 : index
    %c0_9 = arith.constant 0 : index
    %33 = vector.load %arg3[%c0_8, %c0_9] : memref<32x96xf32, #tpu.memory_space<vmem>>, vector<32x96xf32>
    %cst_10 = arith.constant dense<0.000000e+00> : vector<64x96xf32>
    %34 = tpu.matmul %32, %33, %cst_10 {dimension_numbers = #tpu.dot_dimension_numbers<[1], [0], [0], [1], [0, 0, 1, 1], [], []>} : vector<64x32xf32>, vector<32x96xf32>, vector<64x96xf32> -> vector<64x96xf32>
    %c0_11 = arith.constant 0 : index
    %c0_12 = arith.constant 0 : index
    %35 = vector.load %arg4[%c0_11, %c0_12] : memref<1x96xf32, #tpu.memory_space<vmem>>, vector<1x96xf32>
    %36 = vector.broadcast %35 : vector<1x96xf32> to vector<64x96xf32>
    %37 = arith.addf %34, %36 : vector<64x96xf32>
    %38 = vector.shape_cast %37 : vector<64x96xf32> to vector<8x8x96xf32>
    %39 = vector.shape_cast %32 : vector<64x32xf32> to vector<8x8x32xf32>
    %40 = vector.extract_strided_slice %39 {offsets = [0, 0, 0], sizes = [8, 1, 32], strides = [1, 1, 1]} : vector<8x8x32xf32> to vector<8x1x32xf32>
    %41 = vector.shape_cast %40 : vector<8x1x32xf32> to vector<8x32xf32>
    %c0_13 = arith.constant 0 : index
    %c0_14 = arith.constant 0 : index
    %c0_15 = arith.constant 0 : index
    %42 = vector.load %arg1[%c0_13, %c0_14, %c0_15] : memref<8x1x8xf32, #tpu.memory_space<vmem>>, vector<8x1x8xf32>
    %cst_16 = arith.constant 1.000000e+00 : f32
    %43 = vector.broadcast %cst_16 : f32 to vector<8x1x8xf32>
    %44 = arith.subf %43, %42 : vector<8x1x8xf32>
    %cst_17 = arith.constant -1.000000e+09 : f32
    %45 = vector.broadcast %cst_17 : f32 to vector<8x1x8xf32>
    %46 = arith.mulf %44, %45 : vector<8x1x8xf32>
    %cst_18 = arith.constant 0.000000e+00 : f32
    %47 = vector.broadcast %cst_18 : f32 to vector<8x32xf32>
    %48 = vector.broadcast %3 : vector<1x32xf32> to vector<8x32xf32>
    %49 = arith.addf %47, %48 : vector<8x32xf32>
    %50 = vector.extract_strided_slice %38 {offsets = [0, 0, 0], sizes = [8, 1, 16], strides = [1, 1, 1]} : vector<8x8x96xf32> to vector<8x1x16xf32>
    %51 = vector.extract_strided_slice %38 {offsets = [0, 0, 32], sizes = [8, 8, 16], strides = [1, 1, 1]} : vector<8x8x96xf32> to vector<8x8x16xf32>
    %52 = vector.extract_strided_slice %38 {offsets = [0, 0, 64], sizes = [8, 8, 16], strides = [1, 1, 1]} : vector<8x8x96xf32> to vector<8x8x16xf32>
    "tpu.trace_start"() <{level = 10 : i32, message = "bqd,bkd->bqk"}> : () -> ()
    %cst_19 = arith.constant dense<0.000000e+00> : vector<8x1x8xf32>
    %53 = tpu.matmul %50, %51, %cst_19 {dimension_numbers = #tpu.dot_dimension_numbers<[2], [2], [1], [1], [0, 0, 0, 1, 1, 1], [0], [0]>} : vector<8x1x16xf32>, vector<8x8x16xf32>, vector<8x1x8xf32> -> vector<8x1x8xf32>
    "tpu.trace_stop"() : () -> ()
    %cst_20 = arith.constant 2.500000e-01 : f32
    %54 = vector.broadcast %cst_20 : f32 to vector<8x1x8xf32>
    %55 = arith.mulf %53, %54 : vector<8x1x8xf32>
    %56 = arith.addf %55, %46 : vector<8x1x8xf32>
    %cst_21 = arith.constant dense<0xFF800000> : vector<8x1xf32>
    %57 = vector.multi_reduction <maximumf>, %56, %cst_21 [2] : vector<8x1x8xf32> to vector<8x1xf32>
    %58 = vector.shape_cast %57 : vector<8x1xf32> to vector<8x1x1xf32>
    %59 = vector.broadcast %58 : vector<8x1x1xf32> to vector<8x1x8xf32>
    %60 = arith.subf %56, %59 : vector<8x1x8xf32>
    %61 = math.exp %60 : vector<8x1x8xf32>
    %cst_22 = arith.constant dense<0.000000e+00> : vector<8x1xf32>
    %62 = vector.multi_reduction <add>, %61, %cst_22 [2] : vector<8x1x8xf32> to vector<8x1xf32>
    %63 = vector.shape_cast %62 : vector<8x1xf32> to vector<8x1x1xf32>
    %64 = tpu.reciprocal %63 {approx = true} : vector<8x1x1xf32> -> vector<8x1x1xf32>
    %65 = vector.broadcast %64 : vector<8x1x1xf32> to vector<8x1x8xf32>
    %66 = arith.mulf %61, %65 : vector<8x1x8xf32>
    "tpu.trace_start"() <{level = 10 : i32, message = "bqk,bkd->bqd"}> : () -> ()
    %cst_23 = arith.constant dense<0.000000e+00> : vector<8x1x16xf32>
    %67 = tpu.matmul %66, %52, %cst_23 {dimension_numbers = #tpu.dot_dimension_numbers<[2], [1], [1], [2], [0, 0, 0, 1, 1, 2], [0], [0]>} : vector<8x1x8xf32>, vector<8x8x16xf32>, vector<8x1x16xf32> -> vector<8x1x16xf32>
    "tpu.trace_stop"() : () -> ()
    %68 = vector.shape_cast %67 : vector<8x1x16xf32> to vector<8x16xf32>
    %c0_24 = arith.constant 0 : index
    %c0_25 = arith.constant 0 : index
    %69 = vector.load %arg5[%c0_24, %c0_25] : memref<32x32xf32, #tpu.memory_space<vmem>>, vector<16x32xf32>
    %cst_26 = arith.constant dense<0.000000e+00> : vector<8x32xf32>
    %70 = tpu.matmul %68, %69, %cst_26 {dimension_numbers = #tpu.dot_dimension_numbers<[1], [0], [0], [1], [0, 0, 1, 1], [], []>} : vector<8x16xf32>, vector<16x32xf32>, vector<8x32xf32> -> vector<8x32xf32>
    %71 = arith.addf %49, %70 : vector<8x32xf32>
    %72 = vector.extract_strided_slice %38 {offsets = [0, 0, 16], sizes = [8, 1, 16], strides = [1, 1, 1]} : vector<8x8x96xf32> to vector<8x1x16xf32>
    %73 = vector.extract_strided_slice %38 {offsets = [0, 0, 48], sizes = [8, 8, 16], strides = [1, 1, 1]} : vector<8x8x96xf32> to vector<8x8x16xf32>
    %74 = vector.extract_strided_slice %38 {offsets = [0, 0, 80], sizes = [8, 8, 16], strides = [1, 1, 1]} : vector<8x8x96xf32> to vector<8x8x16xf32>
    "tpu.trace_start"() <{level = 10 : i32, message = "bqd,bkd->bqk"}> : () -> ()
    %cst_27 = arith.constant dense<0.000000e+00> : vector<8x1x8xf32>
    %75 = tpu.matmul %72, %73, %cst_27 {dimension_numbers = #tpu.dot_dimension_numbers<[2], [2], [1], [1], [0, 0, 0, 1, 1, 1], [0], [0]>} : vector<8x1x16xf32>, vector<8x8x16xf32>, vector<8x1x8xf32> -> vector<8x1x8xf32>
    "tpu.trace_stop"() : () -> ()
    %cst_28 = arith.constant 2.500000e-01 : f32
    %76 = vector.broadcast %cst_28 : f32 to vector<8x1x8xf32>
    %77 = arith.mulf %75, %76 : vector<8x1x8xf32>
    %78 = arith.addf %77, %46 : vector<8x1x8xf32>
    %cst_29 = arith.constant dense<0xFF800000> : vector<8x1xf32>
    %79 = vector.multi_reduction <maximumf>, %78, %cst_29 [2] : vector<8x1x8xf32> to vector<8x1xf32>
    %80 = vector.shape_cast %79 : vector<8x1xf32> to vector<8x1x1xf32>
    %81 = vector.broadcast %80 : vector<8x1x1xf32> to vector<8x1x8xf32>
    %82 = arith.subf %78, %81 : vector<8x1x8xf32>
    %83 = math.exp %82 : vector<8x1x8xf32>
    %cst_30 = arith.constant dense<0.000000e+00> : vector<8x1xf32>
    %84 = vector.multi_reduction <add>, %83, %cst_30 [2] : vector<8x1x8xf32> to vector<8x1xf32>
    %85 = vector.shape_cast %84 : vector<8x1xf32> to vector<8x1x1xf32>
    %86 = tpu.reciprocal %85 {approx = true} : vector<8x1x1xf32> -> vector<8x1x1xf32>
    %87 = vector.broadcast %86 : vector<8x1x1xf32> to vector<8x1x8xf32>
    %88 = arith.mulf %83, %87 : vector<8x1x8xf32>
    "tpu.trace_start"() <{level = 10 : i32, message = "bqk,bkd->bqd"}> : () -> ()
    %cst_31 = arith.constant dense<0.000000e+00> : vector<8x1x16xf32>
    %89 = tpu.matmul %88, %74, %cst_31 {dimension_numbers = #tpu.dot_dimension_numbers<[2], [1], [1], [2], [0, 0, 0, 1, 1, 2], [0], [0]>} : vector<8x1x8xf32>, vector<8x8x16xf32>, vector<8x1x16xf32> -> vector<8x1x16xf32>
    "tpu.trace_stop"() : () -> ()
    %90 = vector.shape_cast %89 : vector<8x1x16xf32> to vector<8x16xf32>
    %c16 = arith.constant 16 : index
    %c0_32 = arith.constant 0 : index
    %91 = vector.load %arg5[%c16, %c0_32] : memref<32x32xf32, #tpu.memory_space<vmem>>, vector<16x32xf32>
    %cst_33 = arith.constant dense<0.000000e+00> : vector<8x32xf32>
    %92 = tpu.matmul %90, %91, %cst_33 {dimension_numbers = #tpu.dot_dimension_numbers<[1], [0], [0], [1], [0, 0, 1, 1], [], []>} : vector<8x16xf32>, vector<16x32xf32>, vector<8x32xf32> -> vector<8x32xf32>
    %93 = arith.addf %71, %92 : vector<8x32xf32>
    %94 = arith.addf %93, %41 : vector<8x32xf32>
    %cst_34 = arith.constant dense<0.000000e+00> : vector<8xf32>
    %95 = vector.multi_reduction <add>, %94, %cst_34 [1] : vector<8x32xf32> to vector<8xf32>
    %96 = vector.shape_cast %95 : vector<8xf32> to vector<8x1xf32>
    %cst_35 = arith.constant 3.200000e+01 : f32
    %97 = vector.broadcast %cst_35 : f32 to vector<8x1xf32>
    %98 = arith.divf %96, %97 : vector<8x1xf32>
    %99 = vector.broadcast %98 : vector<8x1xf32> to vector<8x32xf32>
    %100 = arith.subf %94, %99 : vector<8x32xf32>
    %101 = arith.mulf %100, %100 : vector<8x32xf32>
    %cst_36 = arith.constant dense<0.000000e+00> : vector<8xf32>
    %102 = vector.multi_reduction <add>, %101, %cst_36 [1] : vector<8x32xf32> to vector<8xf32>
    %103 = vector.shape_cast %102 : vector<8xf32> to vector<8x1xf32>
    %cst_37 = arith.constant 3.200000e+01 : f32
    %104 = vector.broadcast %cst_37 : f32 to vector<8x1xf32>
    %105 = arith.divf %103, %104 : vector<8x1xf32>
    %106 = vector.broadcast %98 : vector<8x1xf32> to vector<8x32xf32>
    %107 = arith.subf %94, %106 : vector<8x32xf32>
    %cst_38 = arith.constant 9.99999996E-13 : f32
    %108 = vector.broadcast %cst_38 : f32 to vector<8x1xf32>
    %109 = arith.addf %105, %108 : vector<8x1xf32>
    %110 = math.rsqrt %109 : vector<8x1xf32>
    %111 = vector.broadcast %110 : vector<8x1xf32> to vector<8x32xf32>
    %112 = arith.mulf %107, %111 : vector<8x32xf32>
    %113 = vector.broadcast %4 : vector<1x32xf32> to vector<8x32xf32>
    %114 = arith.mulf %112, %113 : vector<8x32xf32>
    %115 = vector.broadcast %5 : vector<1x32xf32> to vector<8x32xf32>
    %116 = arith.addf %114, %115 : vector<8x32xf32>
    %c0_39 = arith.constant 0 : index
    %c0_40 = arith.constant 0 : index
    %117 = vector.load %arg6[%c0_39, %c0_40] : memref<32x64xf32, #tpu.memory_space<vmem>>, vector<32x64xf32>
    %cst_41 = arith.constant dense<0.000000e+00> : vector<8x64xf32>
    %118 = tpu.matmul %116, %117, %cst_41 {dimension_numbers = #tpu.dot_dimension_numbers<[1], [0], [0], [1], [0, 0, 1, 1], [], []>} : vector<8x32xf32>, vector<32x64xf32>, vector<8x64xf32> -> vector<8x64xf32>
    %c0_42 = arith.constant 0 : index
    %c0_43 = arith.constant 0 : index
    %119 = vector.load %arg7[%c0_42, %c0_43] : memref<1x64xf32, #tpu.memory_space<vmem>>, vector<1x64xf32>
    %120 = vector.broadcast %119 : vector<1x64xf32> to vector<8x64xf32>
    %121 = arith.addf %118, %120 : vector<8x64xf32>
    %122 = arith.mulf %121, %121 : vector<8x64xf32>
    %123 = arith.mulf %121, %122 : vector<8x64xf32>
    %cst_44 = arith.constant 4.471500e-02 : f32
    %124 = vector.broadcast %cst_44 : f32 to vector<8x64xf32>
    %125 = arith.mulf %124, %123 : vector<8x64xf32>
    %126 = arith.addf %121, %125 : vector<8x64xf32>
    %cst_45 = arith.constant 0.797884583 : f32
    %127 = vector.broadcast %cst_45 : f32 to vector<8x64xf32>
    %128 = arith.mulf %127, %126 : vector<8x64xf32>
    %129 = math.tanh %128 : vector<8x64xf32>
    %cst_46 = arith.constant 1.000000e+00 : f32
    %130 = vector.broadcast %cst_46 : f32 to vector<8x64xf32>
    %131 = arith.addf %130, %129 : vector<8x64xf32>
    %cst_47 = arith.constant 5.000000e-01 : f32
    %132 = vector.broadcast %cst_47 : f32 to vector<8x64xf32>
    %133 = arith.mulf %132, %131 : vector<8x64xf32>
    %134 = arith.mulf %121, %133 : vector<8x64xf32>
    %c0_48 = arith.constant 0 : index
    %c0_49 = arith.constant 0 : index
    %135 = vector.load %arg8[%c0_48, %c0_49] : memref<64x32xf32, #tpu.memory_space<vmem>>, vector<64x32xf32>
    %cst_50 = arith.constant dense<0.000000e+00> : vector<8x32xf32>
    %136 = tpu.matmul %134, %135, %cst_50 {dimension_numbers = #tpu.dot_dimension_numbers<[1], [0], [0], [1], [0, 0, 1, 1], [], []>} : vector<8x64xf32>, vector<64x32xf32>, vector<8x32xf32> -> vector<8x32xf32>
    %137 = vector.broadcast %6 : vector<1x32xf32> to vector<8x32xf32>
    %138 = arith.addf %136, %137 : vector<8x32xf32>
    %139 = arith.addf %138, %116 : vector<8x32xf32>
    %cst_51 = arith.constant dense<0.000000e+00> : vector<8xf32>
    %140 = vector.multi_reduction <add>, %139, %cst_51 [1] : vector<8x32xf32> to vector<8xf32>
    %141 = vector.shape_cast %140 : vector<8xf32> to vector<8x1xf32>
    %cst_52 = arith.constant 3.200000e+01 : f32
    %142 = vector.broadcast %cst_52 : f32 to vector<8x1xf32>
    %143 = arith.divf %141, %142 : vector<8x1xf32>
    %144 = vector.broadcast %143 : vector<8x1xf32> to vector<8x32xf32>
    %145 = arith.subf %139, %144 : vector<8x32xf32>
    %146 = arith.mulf %145, %145 : vector<8x32xf32>
    %cst_53 = arith.constant dense<0.000000e+00> : vector<8xf32>
    %147 = vector.multi_reduction <add>, %146, %cst_53 [1] : vector<8x32xf32> to vector<8xf32>
    %148 = vector.shape_cast %147 : vector<8xf32> to vector<8x1xf32>
    %cst_54 = arith.constant 3.200000e+01 : f32
    %149 = vector.broadcast %cst_54 : f32 to vector<8x1xf32>
    %150 = arith.divf %148, %149 : vector<8x1xf32>
    %151 = vector.broadcast %143 : vector<8x1xf32> to vector<8x32xf32>
    %152 = arith.subf %139, %151 : vector<8x32xf32>
    %cst_55 = arith.constant 9.99999996E-13 : f32
    %153 = vector.broadcast %cst_55 : f32 to vector<8x1xf32>
    %154 = arith.addf %150, %153 : vector<8x1xf32>
    %155 = math.rsqrt %154 : vector<8x1xf32>
    %156 = vector.broadcast %155 : vector<8x1xf32> to vector<8x32xf32>
    %157 = arith.mulf %152, %156 : vector<8x32xf32>
    %158 = vector.broadcast %7 : vector<1x32xf32> to vector<8x32xf32>
    %159 = arith.mulf %157, %158 : vector<8x32xf32>
    %160 = vector.broadcast %8 : vector<1x32xf32> to vector<8x32xf32>
    %161 = arith.addf %159, %160 : vector<8x32xf32>
    %c0_56 = arith.constant 0 : index
    %c0_57 = arith.constant 0 : index
    %162 = vector.load %arg2[%c0_56, %c0_57] : memref<2x4xf32, #tpu.memory_space<vmem>>, vector<2x4xf32>
    %cst_58 = arith.constant dense<0.000000e+00> : vector<2xf32>
    %163 = vector.multi_reduction <add>, %162, %cst_58 [1] : vector<2x4xf32> to vector<2xf32>
    %164 = vector.shape_cast %163 : vector<2xf32> to vector<2x1xf32>
    %cst_59 = arith.constant 1.000000e+00 : f32
    %165 = vector.broadcast %cst_59 : f32 to vector<2x1xf32>
    %166 = arith.maximumf %164, %165 : vector<2x1xf32>
    %c0_60 = arith.constant 0 : index
    %c0_61 = arith.constant 0 : index
    %167 = vector.load %arg10[%c0_60, %c0_61] : memref<32x128xf32, #tpu.memory_space<vmem>>, vector<32x128xf32>
    %cst_62 = arith.constant dense<0.000000e+00> : vector<8x128xf32>
    %168 = tpu.matmul %161, %167, %cst_62 {dimension_numbers = #tpu.dot_dimension_numbers<[1], [0], [0], [1], [0, 0, 1, 1], [], []>} : vector<8x32xf32>, vector<32x128xf32>, vector<8x128xf32> -> vector<8x128xf32>
    %c0_63 = arith.constant 0 : index
    %c0_64 = arith.constant 0 : index
    %169 = vector.load %arg11[%c0_63, %c0_64] : memref<1x128xf32, #tpu.memory_space<vmem>>, vector<1x128xf32>
    %170 = vector.broadcast %169 : vector<1x128xf32> to vector<8x128xf32>
    %171 = arith.addf %168, %170 : vector<8x128xf32>
    %172 = vector.shape_cast %171 : vector<8x128xf32> to vector<2x4x128xf32>
    %c0_65 = arith.constant 0 : index
    %c0_66 = arith.constant 0 : index
    %173 = vector.load %arg12[%c0_65, %c0_66] : memref<16x128xf32, #tpu.memory_space<vmem>>, vector<16x128xf32>
    %174 = vector.extract_strided_slice %173 {offsets = [0, 0], sizes = [16, 64], strides = [1, 1]} : vector<16x128xf32> to vector<16x64xf32>
    %175 = vector.extract_strided_slice %173 {offsets = [0, 64], sizes = [16, 64], strides = [1, 1]} : vector<16x128xf32> to vector<16x64xf32>
    %cst_67 = arith.constant 0.000000e+00 : f32
    %176 = vector.broadcast %cst_67 : f32 to vector<2x16xf32>
    %cst_68 = arith.constant 0.000000e+00 : f32
    %177 = vector.broadcast %cst_68 : f32 to vector<2x16xf32>
    %cst_69 = arith.constant 0.000000e+00 : f32
    %178 = vector.broadcast %cst_69 : f32 to vector<2x1xf32>
    %179 = arith.cmpf ogt, %166, %178 : vector<2x1xf32>
    %180 = arith.extui %179 : vector<2x1xi1> to vector<2x1xi32>
    %181 = arith.sitofp %180 : vector<2x1xi32> to vector<2x1xf32>
    %182 = vector.extract_strided_slice %172 {offsets = [0, 0, 0], sizes = [2, 1, 64], strides = [1, 1, 1]} : vector<2x4x128xf32> to vector<2x1x64xf32>
    %183 = vector.shape_cast %182 : vector<2x1x64xf32> to vector<2x64xf32>
    %cst_70 = arith.constant dense<0.000000e+00> : vector<2x64xf32>
    %184 = tpu.matmul %176, %174, %cst_70 {dimension_numbers = #tpu.dot_dimension_numbers<[1], [0], [0], [1], [0, 0, 1, 1], [], []>} : vector<2x16xf32>, vector<16x64xf32>, vector<2x64xf32> -> vector<2x64xf32>
    %185 = arith.addf %183, %184 : vector<2x64xf32>
    %186 = vector.extract_strided_slice %185 {offsets = [0, 0], sizes = [2, 16], strides = [1, 1]} : vector<2x64xf32> to vector<2x16xf32>
    %187 = arith.negf %186 : vector<2x16xf32>
    %188 = math.exp %187 : vector<2x16xf32>
    %cst_71 = arith.constant 1.000000e+00 : f32
    %189 = vector.broadcast %cst_71 : f32 to vector<2x16xf32>
    %190 = arith.addf %189, %188 : vector<2x16xf32>
    %191 = arith.divf %189, %190 : vector<2x16xf32>
    %192 = vector.extract_strided_slice %185 {offsets = [0, 16], sizes = [2, 16], strides = [1, 1]} : vector<2x64xf32> to vector<2x16xf32>
    %193 = arith.negf %192 : vector<2x16xf32>
    %194 = math.exp %193 : vector<2x16xf32>
    %cst_72 = arith.constant 1.000000e+00 : f32
    %195 = vector.broadcast %cst_72 : f32 to vector<2x16xf32>
    %196 = arith.addf %195, %194 : vector<2x16xf32>
    %197 = arith.divf %195, %196 : vector<2x16xf32>
    %198 = vector.extract_strided_slice %185 {offsets = [0, 32], sizes = [2, 16], strides = [1, 1]} : vector<2x64xf32> to vector<2x16xf32>
    %199 = math.tanh %198 : vector<2x16xf32>
    %200 = vector.extract_strided_slice %185 {offsets = [0, 48], sizes = [2, 16], strides = [1, 1]} : vector<2x64xf32> to vector<2x16xf32>
    %201 = arith.negf %200 : vector<2x16xf32>
    %202 = math.exp %201 : vector<2x16xf32>
    %cst_73 = arith.constant 1.000000e+00 : f32
    %203 = vector.broadcast %cst_73 : f32 to vector<2x16xf32>
    %204 = arith.addf %203, %202 : vector<2x16xf32>
    %205 = arith.divf %203, %204 : vector<2x16xf32>
    %206 = arith.mulf %197, %177 : vector<2x16xf32>
    %207 = arith.mulf %191, %199 : vector<2x16xf32>
    %208 = arith.addf %206, %207 : vector<2x16xf32>
    %209 = math.tanh %208 : vector<2x16xf32>
    %210 = arith.mulf %205, %209 : vector<2x16xf32>
    %211 = vector.broadcast %181 : vector<2x1xf32> to vector<2x16xf32>
    %212 = arith.mulf %211, %208 : vector<2x16xf32>
    %cst_74 = arith.constant 1.000000e+00 : f32
    %213 = vector.broadcast %cst_74 : f32 to vector<2x1xf32>
    %214 = arith.subf %213, %181 : vector<2x1xf32>
    %215 = vector.broadcast %214 : vector<2x1xf32> to vector<2x16xf32>
    %216 = arith.mulf %215, %177 : vector<2x16xf32>
    %217 = arith.addf %212, %216 : vector<2x16xf32>
    %218 = vector.broadcast %181 : vector<2x1xf32> to vector<2x16xf32>
    %219 = arith.mulf %218, %210 : vector<2x16xf32>
    %cst_75 = arith.constant 1.000000e+00 : f32
    %220 = vector.broadcast %cst_75 : f32 to vector<2x1xf32>
    %221 = arith.subf %220, %181 : vector<2x1xf32>
    %222 = vector.broadcast %221 : vector<2x1xf32> to vector<2x16xf32>
    %223 = arith.mulf %222, %176 : vector<2x16xf32>
    %224 = arith.addf %219, %223 : vector<2x16xf32>
    %225 = vector.broadcast %181 : vector<2x1xf32> to vector<2x16xf32>
    %226 = arith.mulf %225, %210 : vector<2x16xf32>
    %cst_76 = arith.constant 1.000000e+00 : f32
    %227 = vector.broadcast %cst_76 : f32 to vector<2x1xf32>
    %228 = arith.cmpf ogt, %166, %227 : vector<2x1xf32>
    %229 = arith.extui %228 : vector<2x1xi1> to vector<2x1xi32>
    %230 = arith.sitofp %229 : vector<2x1xi32> to vector<2x1xf32>
    %231 = vector.extract_strided_slice %172 {offsets = [0, 1, 0], sizes = [2, 1, 64], strides = [1, 1, 1]} : vector<2x4x128xf32> to vector<2x1x64xf32>
    %232 = vector.shape_cast %231 : vector<2x1x64xf32> to vector<2x64xf32>
    %cst_77 = arith.constant dense<0.000000e+00> : vector<2x64xf32>
    %233 = tpu.matmul %224, %174, %cst_77 {dimension_numbers = #tpu.dot_dimension_numbers<[1], [0], [0], [1], [0, 0, 1, 1], [], []>} : vector<2x16xf32>, vector<16x64xf32>, vector<2x64xf32> -> vector<2x64xf32>
    %234 = arith.addf %232, %233 : vector<2x64xf32>
    %235 = vector.extract_strided_slice %234 {offsets = [0, 0], sizes = [2, 16], strides = [1, 1]} : vector<2x64xf32> to vector<2x16xf32>
    %236 = arith.negf %235 : vector<2x16xf32>
    %237 = math.exp %236 : vector<2x16xf32>
    %cst_78 = arith.constant 1.000000e+00 : f32
    %238 = vector.broadcast %cst_78 : f32 to vector<2x16xf32>
    %239 = arith.addf %238, %237 : vector<2x16xf32>
    %240 = arith.divf %238, %239 : vector<2x16xf32>
    %241 = vector.extract_strided_slice %234 {offsets = [0, 16], sizes = [2, 16], strides = [1, 1]} : vector<2x64xf32> to vector<2x16xf32>
    %242 = arith.negf %241 : vector<2x16xf32>
    %243 = math.exp %242 : vector<2x16xf32>
    %cst_79 = arith.constant 1.000000e+00 : f32
    %244 = vector.broadcast %cst_79 : f32 to vector<2x16xf32>
    %245 = arith.addf %244, %243 : vector<2x16xf32>
    %246 = arith.divf %244, %245 : vector<2x16xf32>
    %247 = vector.extract_strided_slice %234 {offsets = [0, 32], sizes = [2, 16], strides = [1, 1]} : vector<2x64xf32> to vector<2x16xf32>
    %248 = math.tanh %247 : vector<2x16xf32>
    %249 = vector.extract_strided_slice %234 {offsets = [0, 48], sizes = [2, 16], strides = [1, 1]} : vector<2x64xf32> to vector<2x16xf32>
    %250 = arith.negf %249 : vector<2x16xf32>
    %251 = math.exp %250 : vector<2x16xf32>
    %cst_80 = arith.constant 1.000000e+00 : f32
    %252 = vector.broadcast %cst_80 : f32 to vector<2x16xf32>
    %253 = arith.addf %252, %251 : vector<2x16xf32>
    %254 = arith.divf %252, %253 : vector<2x16xf32>
    %255 = arith.mulf %246, %217 : vector<2x16xf32>
    %256 = arith.mulf %240, %248 : vector<2x16xf32>
    %257 = arith.addf %255, %256 : vector<2x16xf32>
    %258 = math.tanh %257 : vector<2x16xf32>
    %259 = arith.mulf %254, %258 : vector<2x16xf32>
    %260 = vector.broadcast %230 : vector<2x1xf32> to vector<2x16xf32>
    %261 = arith.mulf %260, %257 : vector<2x16xf32>
    %cst_81 = arith.constant 1.000000e+00 : f32
    %262 = vector.broadcast %cst_81 : f32 to vector<2x1xf32>
    %263 = arith.subf %262, %230 : vector<2x1xf32>
    %264 = vector.broadcast %263 : vector<2x1xf32> to vector<2x16xf32>
    %265 = arith.mulf %264, %217 : vector<2x16xf32>
    %266 = arith.addf %261, %265 : vector<2x16xf32>
    %267 = vector.broadcast %230 : vector<2x1xf32> to vector<2x16xf32>
    %268 = arith.mulf %267, %259 : vector<2x16xf32>
    %cst_82 = arith.constant 1.000000e+00 : f32
    %269 = vector.broadcast %cst_82 : f32 to vector<2x1xf32>
    %270 = arith.subf %269, %230 : vector<2x1xf32>
    %271 = vector.broadcast %270 : vector<2x1xf32> to vector<2x16xf32>
    %272 = arith.mulf %271, %224 : vector<2x16xf32>
    %273 = arith.addf %268, %272 : vector<2x16xf32>
    %274 = vector.broadcast %230 : vector<2x1xf32> to vector<2x16xf32>
    %275 = arith.mulf %274, %259 : vector<2x16xf32>
    %cst_83 = arith.constant 2.000000e+00 : f32
    %276 = vector.broadcast %cst_83 : f32 to vector<2x1xf32>
    %277 = arith.cmpf ogt, %166, %276 : vector<2x1xf32>
    %278 = arith.extui %277 : vector<2x1xi1> to vector<2x1xi32>
    %279 = arith.sitofp %278 : vector<2x1xi32> to vector<2x1xf32>
    %280 = vector.extract_strided_slice %172 {offsets = [0, 2, 0], sizes = [2, 1, 64], strides = [1, 1, 1]} : vector<2x4x128xf32> to vector<2x1x64xf32>
    %281 = vector.shape_cast %280 : vector<2x1x64xf32> to vector<2x64xf32>
    %cst_84 = arith.constant dense<0.000000e+00> : vector<2x64xf32>
    %282 = tpu.matmul %273, %174, %cst_84 {dimension_numbers = #tpu.dot_dimension_numbers<[1], [0], [0], [1], [0, 0, 1, 1], [], []>} : vector<2x16xf32>, vector<16x64xf32>, vector<2x64xf32> -> vector<2x64xf32>
    %283 = arith.addf %281, %282 : vector<2x64xf32>
    %284 = vector.extract_strided_slice %283 {offsets = [0, 0], sizes = [2, 16], strides = [1, 1]} : vector<2x64xf32> to vector<2x16xf32>
    %285 = arith.negf %284 : vector<2x16xf32>
    %286 = math.exp %285 : vector<2x16xf32>
    %cst_85 = arith.constant 1.000000e+00 : f32
    %287 = vector.broadcast %cst_85 : f32 to vector<2x16xf32>
    %288 = arith.addf %287, %286 : vector<2x16xf32>
    %289 = arith.divf %287, %288 : vector<2x16xf32>
    %290 = vector.extract_strided_slice %283 {offsets = [0, 16], sizes = [2, 16], strides = [1, 1]} : vector<2x64xf32> to vector<2x16xf32>
    %291 = arith.negf %290 : vector<2x16xf32>
    %292 = math.exp %291 : vector<2x16xf32>
    %cst_86 = arith.constant 1.000000e+00 : f32
    %293 = vector.broadcast %cst_86 : f32 to vector<2x16xf32>
    %294 = arith.addf %293, %292 : vector<2x16xf32>
    %295 = arith.divf %293, %294 : vector<2x16xf32>
    %296 = vector.extract_strided_slice %283 {offsets = [0, 32], sizes = [2, 16], strides = [1, 1]} : vector<2x64xf32> to vector<2x16xf32>
    %297 = math.tanh %296 : vector<2x16xf32>
    %298 = vector.extract_strided_slice %283 {offsets = [0, 48], sizes = [2, 16], strides = [1, 1]} : vector<2x64xf32> to vector<2x16xf32>
    %299 = arith.negf %298 : vector<2x16xf32>
    %300 = math.exp %299 : vector<2x16xf32>
    %cst_87 = arith.constant 1.000000e+00 : f32
    %301 = vector.broadcast %cst_87 : f32 to vector<2x16xf32>
    %302 = arith.addf %301, %300 : vector<2x16xf32>
    %303 = arith.divf %301, %302 : vector<2x16xf32>
    %304 = arith.mulf %295, %266 : vector<2x16xf32>
    %305 = arith.mulf %289, %297 : vector<2x16xf32>
    %306 = arith.addf %304, %305 : vector<2x16xf32>
    %307 = math.tanh %306 : vector<2x16xf32>
    %308 = arith.mulf %303, %307 : vector<2x16xf32>
    %309 = vector.broadcast %279 : vector<2x1xf32> to vector<2x16xf32>
    %310 = arith.mulf %309, %306 : vector<2x16xf32>
    %cst_88 = arith.constant 1.000000e+00 : f32
    %311 = vector.broadcast %cst_88 : f32 to vector<2x1xf32>
    %312 = arith.subf %311, %279 : vector<2x1xf32>
    %313 = vector.broadcast %312 : vector<2x1xf32> to vector<2x16xf32>
    %314 = arith.mulf %313, %266 : vector<2x16xf32>
    %315 = arith.addf %310, %314 : vector<2x16xf32>
    %316 = vector.broadcast %279 : vector<2x1xf32> to vector<2x16xf32>
    %317 = arith.mulf %316, %308 : vector<2x16xf32>
    %cst_89 = arith.constant 1.000000e+00 : f32
    %318 = vector.broadcast %cst_89 : f32 to vector<2x1xf32>
    %319 = arith.subf %318, %279 : vector<2x1xf32>
    %320 = vector.broadcast %319 : vector<2x1xf32> to vector<2x16xf32>
    %321 = arith.mulf %320, %273 : vector<2x16xf32>
    %322 = arith.addf %317, %321 : vector<2x16xf32>
    %323 = vector.broadcast %279 : vector<2x1xf32> to vector<2x16xf32>
    %324 = arith.mulf %323, %308 : vector<2x16xf32>
    %cst_90 = arith.constant 3.000000e+00 : f32
    %325 = vector.broadcast %cst_90 : f32 to vector<2x1xf32>
    %326 = arith.cmpf ogt, %166, %325 : vector<2x1xf32>
    %327 = arith.extui %326 : vector<2x1xi1> to vector<2x1xi32>
    %328 = arith.sitofp %327 : vector<2x1xi32> to vector<2x1xf32>
    %329 = vector.extract_strided_slice %172 {offsets = [0, 3, 0], sizes = [2, 1, 64], strides = [1, 1, 1]} : vector<2x4x128xf32> to vector<2x1x64xf32>
    %330 = vector.shape_cast %329 : vector<2x1x64xf32> to vector<2x64xf32>
    %cst_91 = arith.constant dense<0.000000e+00> : vector<2x64xf32>
    %331 = tpu.matmul %322, %174, %cst_91 {dimension_numbers = #tpu.dot_dimension_numbers<[1], [0], [0], [1], [0, 0, 1, 1], [], []>} : vector<2x16xf32>, vector<16x64xf32>, vector<2x64xf32> -> vector<2x64xf32>
    %332 = arith.addf %330, %331 : vector<2x64xf32>
    %333 = vector.extract_strided_slice %332 {offsets = [0, 0], sizes = [2, 16], strides = [1, 1]} : vector<2x64xf32> to vector<2x16xf32>
    %334 = arith.negf %333 : vector<2x16xf32>
    %335 = math.exp %334 : vector<2x16xf32>
    %cst_92 = arith.constant 1.000000e+00 : f32
    %336 = vector.broadcast %cst_92 : f32 to vector<2x16xf32>
    %337 = arith.addf %336, %335 : vector<2x16xf32>
    %338 = arith.divf %336, %337 : vector<2x16xf32>
    %339 = vector.extract_strided_slice %332 {offsets = [0, 16], sizes = [2, 16], strides = [1, 1]} : vector<2x64xf32> to vector<2x16xf32>
    %340 = arith.negf %339 : vector<2x16xf32>
    %341 = math.exp %340 : vector<2x16xf32>
    %cst_93 = arith.constant 1.000000e+00 : f32
    %342 = vector.broadcast %cst_93 : f32 to vector<2x16xf32>
    %343 = arith.addf %342, %341 : vector<2x16xf32>
    %344 = arith.divf %342, %343 : vector<2x16xf32>
    %345 = vector.extract_strided_slice %332 {offsets = [0, 32], sizes = [2, 16], strides = [1, 1]} : vector<2x64xf32> to vector<2x16xf32>
    %346 = math.tanh %345 : vector<2x16xf32>
    %347 = vector.extract_strided_slice %332 {offsets = [0, 48], sizes = [2, 16], strides = [1, 1]} : vector<2x64xf32> to vector<2x16xf32>
    %348 = arith.negf %347 : vector<2x16xf32>
    %349 = math.exp %348 : vector<2x16xf32>
    %cst_94 = arith.constant 1.000000e+00 : f32
    %350 = vector.broadcast %cst_94 : f32 to vector<2x16xf32>
    %351 = arith.addf %350, %349 : vector<2x16xf32>
    %352 = arith.divf %350, %351 : vector<2x16xf32>
    %353 = arith.mulf %344, %315 : vector<2x16xf32>
    %354 = arith.mulf %338, %346 : vector<2x16xf32>
    %355 = arith.addf %353, %354 : vector<2x16xf32>
    %356 = math.tanh %355 : vector<2x16xf32>
    %357 = arith.mulf %352, %356 : vector<2x16xf32>
    %358 = vector.broadcast %328 : vector<2x1xf32> to vector<2x16xf32>
    %359 = arith.mulf %358, %357 : vector<2x16xf32>
    %cst_95 = arith.constant 0.000000e+00 : f32
    %360 = vector.broadcast %cst_95 : f32 to vector<2x16xf32>
    %cst_96 = arith.constant 0.000000e+00 : f32
    %361 = vector.broadcast %cst_96 : f32 to vector<2x16xf32>
    %cst_97 = arith.constant 3.000000e+00 : f32
    %362 = vector.broadcast %cst_97 : f32 to vector<2x1xf32>
    %363 = arith.cmpf ogt, %166, %362 : vector<2x1xf32>
    %364 = arith.extui %363 : vector<2x1xi1> to vector<2x1xi32>
    %365 = arith.sitofp %364 : vector<2x1xi32> to vector<2x1xf32>
    %366 = vector.extract_strided_slice %172 {offsets = [0, 3, 64], sizes = [2, 1, 64], strides = [1, 1, 1]} : vector<2x4x128xf32> to vector<2x1x64xf32>
    %367 = vector.shape_cast %366 : vector<2x1x64xf32> to vector<2x64xf32>
    %cst_98 = arith.constant dense<0.000000e+00> : vector<2x64xf32>
    %368 = tpu.matmul %360, %175, %cst_98 {dimension_numbers = #tpu.dot_dimension_numbers<[1], [0], [0], [1], [0, 0, 1, 1], [], []>} : vector<2x16xf32>, vector<16x64xf32>, vector<2x64xf32> -> vector<2x64xf32>
    %369 = arith.addf %367, %368 : vector<2x64xf32>
    %370 = vector.extract_strided_slice %369 {offsets = [0, 0], sizes = [2, 16], strides = [1, 1]} : vector<2x64xf32> to vector<2x16xf32>
    %371 = arith.negf %370 : vector<2x16xf32>
    %372 = math.exp %371 : vector<2x16xf32>
    %cst_99 = arith.constant 1.000000e+00 : f32
    %373 = vector.broadcast %cst_99 : f32 to vector<2x16xf32>
    %374 = arith.addf %373, %372 : vector<2x16xf32>
    %375 = arith.divf %373, %374 : vector<2x16xf32>
    %376 = vector.extract_strided_slice %369 {offsets = [0, 16], sizes = [2, 16], strides = [1, 1]} : vector<2x64xf32> to vector<2x16xf32>
    %377 = arith.negf %376 : vector<2x16xf32>
    %378 = math.exp %377 : vector<2x16xf32>
    %cst_100 = arith.constant 1.000000e+00 : f32
    %379 = vector.broadcast %cst_100 : f32 to vector<2x16xf32>
    %380 = arith.addf %379, %378 : vector<2x16xf32>
    %381 = arith.divf %379, %380 : vector<2x16xf32>
    %382 = vector.extract_strided_slice %369 {offsets = [0, 32], sizes = [2, 16], strides = [1, 1]} : vector<2x64xf32> to vector<2x16xf32>
    %383 = math.tanh %382 : vector<2x16xf32>
    %384 = vector.extract_strided_slice %369 {offsets = [0, 48], sizes = [2, 16], strides = [1, 1]} : vector<2x64xf32> to vector<2x16xf32>
    %385 = arith.negf %384 : vector<2x16xf32>
    %386 = math.exp %385 : vector<2x16xf32>
    %cst_101 = arith.constant 1.000000e+00 : f32
    %387 = vector.broadcast %cst_101 : f32 to vector<2x16xf32>
    %388 = arith.addf %387, %386 : vector<2x16xf32>
    %389 = arith.divf %387, %388 : vector<2x16xf32>
    %390 = arith.mulf %381, %361 : vector<2x16xf32>
    %391 = arith.mulf %375, %383 : vector<2x16xf32>
    %392 = arith.addf %390, %391 : vector<2x16xf32>
    %393 = math.tanh %392 : vector<2x16xf32>
    %394 = arith.mulf %389, %393 : vector<2x16xf32>
    %395 = vector.broadcast %365 : vector<2x1xf32> to vector<2x16xf32>
    %396 = arith.mulf %395, %392 : vector<2x16xf32>
    %cst_102 = arith.constant 1.000000e+00 : f32
    %397 = vector.broadcast %cst_102 : f32 to vector<2x1xf32>
    %398 = arith.subf %397, %365 : vector<2x1xf32>
    %399 = vector.broadcast %398 : vector<2x1xf32> to vector<2x16xf32>
    %400 = arith.mulf %399, %361 : vector<2x16xf32>
    %401 = arith.addf %396, %400 : vector<2x16xf32>
    %402 = vector.broadcast %365 : vector<2x1xf32> to vector<2x16xf32>
    %403 = arith.mulf %402, %394 : vector<2x16xf32>
    %cst_103 = arith.constant 1.000000e+00 : f32
    %404 = vector.broadcast %cst_103 : f32 to vector<2x1xf32>
    %405 = arith.subf %404, %365 : vector<2x1xf32>
    %406 = vector.broadcast %405 : vector<2x1xf32> to vector<2x16xf32>
    %407 = arith.mulf %406, %360 : vector<2x16xf32>
    %408 = arith.addf %403, %407 : vector<2x16xf32>
    %409 = vector.broadcast %365 : vector<2x1xf32> to vector<2x16xf32>
    %410 = arith.mulf %409, %394 : vector<2x16xf32>
    %cst_104 = arith.constant 2.000000e+00 : f32
    %411 = vector.broadcast %cst_104 : f32 to vector<2x1xf32>
    %412 = arith.cmpf ogt, %166, %411 : vector<2x1xf32>
    %413 = arith.extui %412 : vector<2x1xi1> to vector<2x1xi32>
    %414 = arith.sitofp %413 : vector<2x1xi32> to vector<2x1xf32>
    %415 = vector.extract_strided_slice %172 {offsets = [0, 2, 64], sizes = [2, 1, 64], strides = [1, 1, 1]} : vector<2x4x128xf32> to vector<2x1x64xf32>
    %416 = vector.shape_cast %415 : vector<2x1x64xf32> to vector<2x64xf32>
    %cst_105 = arith.constant dense<0.000000e+00> : vector<2x64xf32>
    %417 = tpu.matmul %408, %175, %cst_105 {dimension_numbers = #tpu.dot_dimension_numbers<[1], [0], [0], [1], [0, 0, 1, 1], [], []>} : vector<2x16xf32>, vector<16x64xf32>, vector<2x64xf32> -> vector<2x64xf32>
    %418 = arith.addf %416, %417 : vector<2x64xf32>
    %419 = vector.extract_strided_slice %418 {offsets = [0, 0], sizes = [2, 16], strides = [1, 1]} : vector<2x64xf32> to vector<2x16xf32>
    %420 = arith.negf %419 : vector<2x16xf32>
    %421 = math.exp %420 : vector<2x16xf32>
    %cst_106 = arith.constant 1.000000e+00 : f32
    %422 = vector.broadcast %cst_106 : f32 to vector<2x16xf32>
    %423 = arith.addf %422, %421 : vector<2x16xf32>
    %424 = arith.divf %422, %423 : vector<2x16xf32>
    %425 = vector.extract_strided_slice %418 {offsets = [0, 16], sizes = [2, 16], strides = [1, 1]} : vector<2x64xf32> to vector<2x16xf32>
    %426 = arith.negf %425 : vector<2x16xf32>
    %427 = math.exp %426 : vector<2x16xf32>
    %cst_107 = arith.constant 1.000000e+00 : f32
    %428 = vector.broadcast %cst_107 : f32 to vector<2x16xf32>
    %429 = arith.addf %428, %427 : vector<2x16xf32>
    %430 = arith.divf %428, %429 : vector<2x16xf32>
    %431 = vector.extract_strided_slice %418 {offsets = [0, 32], sizes = [2, 16], strides = [1, 1]} : vector<2x64xf32> to vector<2x16xf32>
    %432 = math.tanh %431 : vector<2x16xf32>
    %433 = vector.extract_strided_slice %418 {offsets = [0, 48], sizes = [2, 16], strides = [1, 1]} : vector<2x64xf32> to vector<2x16xf32>
    %434 = arith.negf %433 : vector<2x16xf32>
    %435 = math.exp %434 : vector<2x16xf32>
    %cst_108 = arith.constant 1.000000e+00 : f32
    %436 = vector.broadcast %cst_108 : f32 to vector<2x16xf32>
    %437 = arith.addf %436, %435 : vector<2x16xf32>
    %438 = arith.divf %436, %437 : vector<2x16xf32>
    %439 = arith.mulf %430, %401 : vector<2x16xf32>
    %440 = arith.mulf %424, %432 : vector<2x16xf32>
    %441 = arith.addf %439, %440 : vector<2x16xf32>
    %442 = math.tanh %441 : vector<2x16xf32>
    %443 = arith.mulf %438, %442 : vector<2x16xf32>
    %444 = vector.broadcast %414 : vector<2x1xf32> to vector<2x16xf32>
    %445 = arith.mulf %444, %441 : vector<2x16xf32>
    %cst_109 = arith.constant 1.000000e+00 : f32
    %446 = vector.broadcast %cst_109 : f32 to vector<2x1xf32>
    %447 = arith.subf %446, %414 : vector<2x1xf32>
    %448 = vector.broadcast %447 : vector<2x1xf32> to vector<2x16xf32>
    %449 = arith.mulf %448, %401 : vector<2x16xf32>
    %450 = arith.addf %445, %449 : vector<2x16xf32>
    %451 = vector.broadcast %414 : vector<2x1xf32> to vector<2x16xf32>
    %452 = arith.mulf %451, %443 : vector<2x16xf32>
    %cst_110 = arith.constant 1.000000e+00 : f32
    %453 = vector.broadcast %cst_110 : f32 to vector<2x1xf32>
    %454 = arith.subf %453, %414 : vector<2x1xf32>
    %455 = vector.broadcast %454 : vector<2x1xf32> to vector<2x16xf32>
    %456 = arith.mulf %455, %408 : vector<2x16xf32>
    %457 = arith.addf %452, %456 : vector<2x16xf32>
    %458 = vector.broadcast %414 : vector<2x1xf32> to vector<2x16xf32>
    %459 = arith.mulf %458, %443 : vector<2x16xf32>
    %cst_111 = arith.constant 1.000000e+00 : f32
    %460 = vector.broadcast %cst_111 : f32 to vector<2x1xf32>
    %461 = arith.cmpf ogt, %166, %460 : vector<2x1xf32>
    %462 = arith.extui %461 : vector<2x1xi1> to vector<2x1xi32>
    %463 = arith.sitofp %462 : vector<2x1xi32> to vector<2x1xf32>
    %464 = vector.extract_strided_slice %172 {offsets = [0, 1, 64], sizes = [2, 1, 64], strides = [1, 1, 1]} : vector<2x4x128xf32> to vector<2x1x64xf32>
    %465 = vector.shape_cast %464 : vector<2x1x64xf32> to vector<2x64xf32>
    %cst_112 = arith.constant dense<0.000000e+00> : vector<2x64xf32>
    %466 = tpu.matmul %457, %175, %cst_112 {dimension_numbers = #tpu.dot_dimension_numbers<[1], [0], [0], [1], [0, 0, 1, 1], [], []>} : vector<2x16xf32>, vector<16x64xf32>, vector<2x64xf32> -> vector<2x64xf32>
    %467 = arith.addf %465, %466 : vector<2x64xf32>
    %468 = vector.extract_strided_slice %467 {offsets = [0, 0], sizes = [2, 16], strides = [1, 1]} : vector<2x64xf32> to vector<2x16xf32>
    %469 = arith.negf %468 : vector<2x16xf32>
    %470 = math.exp %469 : vector<2x16xf32>
    %cst_113 = arith.constant 1.000000e+00 : f32
    %471 = vector.broadcast %cst_113 : f32 to vector<2x16xf32>
    %472 = arith.addf %471, %470 : vector<2x16xf32>
    %473 = arith.divf %471, %472 : vector<2x16xf32>
    %474 = vector.extract_strided_slice %467 {offsets = [0, 16], sizes = [2, 16], strides = [1, 1]} : vector<2x64xf32> to vector<2x16xf32>
    %475 = arith.negf %474 : vector<2x16xf32>
    %476 = math.exp %475 : vector<2x16xf32>
    %cst_114 = arith.constant 1.000000e+00 : f32
    %477 = vector.broadcast %cst_114 : f32 to vector<2x16xf32>
    %478 = arith.addf %477, %476 : vector<2x16xf32>
    %479 = arith.divf %477, %478 : vector<2x16xf32>
    %480 = vector.extract_strided_slice %467 {offsets = [0, 32], sizes = [2, 16], strides = [1, 1]} : vector<2x64xf32> to vector<2x16xf32>
    %481 = math.tanh %480 : vector<2x16xf32>
    %482 = vector.extract_strided_slice %467 {offsets = [0, 48], sizes = [2, 16], strides = [1, 1]} : vector<2x64xf32> to vector<2x16xf32>
    %483 = arith.negf %482 : vector<2x16xf32>
    %484 = math.exp %483 : vector<2x16xf32>
    %cst_115 = arith.constant 1.000000e+00 : f32
    %485 = vector.broadcast %cst_115 : f32 to vector<2x16xf32>
    %486 = arith.addf %485, %484 : vector<2x16xf32>
    %487 = arith.divf %485, %486 : vector<2x16xf32>
    %488 = arith.mulf %479, %450 : vector<2x16xf32>
    %489 = arith.mulf %473, %481 : vector<2x16xf32>
    %490 = arith.addf %488, %489 : vector<2x16xf32>
    %491 = math.tanh %490 : vector<2x16xf32>
    %492 = arith.mulf %487, %491 : vector<2x16xf32>
    %493 = vector.broadcast %463 : vector<2x1xf32> to vector<2x16xf32>
    %494 = arith.mulf %493, %490 : vector<2x16xf32>
    %cst_116 = arith.constant 1.000000e+00 : f32
    %495 = vector.broadcast %cst_116 : f32 to vector<2x1xf32>
    %496 = arith.subf %495, %463 : vector<2x1xf32>
    %497 = vector.broadcast %496 : vector<2x1xf32> to vector<2x16xf32>
    %498 = arith.mulf %497, %450 : vector<2x16xf32>
    %499 = arith.addf %494, %498 : vector<2x16xf32>
    %500 = vector.broadcast %463 : vector<2x1xf32> to vector<2x16xf32>
    %501 = arith.mulf %500, %492 : vector<2x16xf32>
    %cst_117 = arith.constant 1.000000e+00 : f32
    %502 = vector.broadcast %cst_117 : f32 to vector<2x1xf32>
    %503 = arith.subf %502, %463 : vector<2x1xf32>
    %504 = vector.broadcast %503 : vector<2x1xf32> to vector<2x16xf32>
    %505 = arith.mulf %504, %457 : vector<2x16xf32>
    %506 = arith.addf %501, %505 : vector<2x16xf32>
    %507 = vector.broadcast %463 : vector<2x1xf32> to vector<2x16xf32>
    %508 = arith.mulf %507, %492 : vector<2x16xf32>
    %cst_118 = arith.constant 0.000000e+00 : f32
    %509 = vector.broadcast %cst_118 : f32 to vector<2x1xf32>
    %510 = arith.cmpf ogt, %166, %509 : vector<2x1xf32>
    %511 = arith.extui %510 : vector<2x1xi1> to vector<2x1xi32>
    %512 = arith.sitofp %511 : vector<2x1xi32> to vector<2x1xf32>
    %513 = vector.extract_strided_slice %172 {offsets = [0, 0, 64], sizes = [2, 1, 64], strides = [1, 1, 1]} : vector<2x4x128xf32> to vector<2x1x64xf32>
    %514 = vector.shape_cast %513 : vector<2x1x64xf32> to vector<2x64xf32>
    %cst_119 = arith.constant dense<0.000000e+00> : vector<2x64xf32>
    %515 = tpu.matmul %506, %175, %cst_119 {dimension_numbers = #tpu.dot_dimension_numbers<[1], [0], [0], [1], [0, 0, 1, 1], [], []>} : vector<2x16xf32>, vector<16x64xf32>, vector<2x64xf32> -> vector<2x64xf32>
    %516 = arith.addf %514, %515 : vector<2x64xf32>
    %517 = vector.extract_strided_slice %516 {offsets = [0, 0], sizes = [2, 16], strides = [1, 1]} : vector<2x64xf32> to vector<2x16xf32>
    %518 = arith.negf %517 : vector<2x16xf32>
    %519 = math.exp %518 : vector<2x16xf32>
    %cst_120 = arith.constant 1.000000e+00 : f32
    %520 = vector.broadcast %cst_120 : f32 to vector<2x16xf32>
    %521 = arith.addf %520, %519 : vector<2x16xf32>
    %522 = arith.divf %520, %521 : vector<2x16xf32>
    %523 = vector.extract_strided_slice %516 {offsets = [0, 16], sizes = [2, 16], strides = [1, 1]} : vector<2x64xf32> to vector<2x16xf32>
    %524 = arith.negf %523 : vector<2x16xf32>
    %525 = math.exp %524 : vector<2x16xf32>
    %cst_121 = arith.constant 1.000000e+00 : f32
    %526 = vector.broadcast %cst_121 : f32 to vector<2x16xf32>
    %527 = arith.addf %526, %525 : vector<2x16xf32>
    %528 = arith.divf %526, %527 : vector<2x16xf32>
    %529 = vector.extract_strided_slice %516 {offsets = [0, 32], sizes = [2, 16], strides = [1, 1]} : vector<2x64xf32> to vector<2x16xf32>
    %530 = math.tanh %529 : vector<2x16xf32>
    %531 = vector.extract_strided_slice %516 {offsets = [0, 48], sizes = [2, 16], strides = [1, 1]} : vector<2x64xf32> to vector<2x16xf32>
    %532 = arith.negf %531 : vector<2x16xf32>
    %533 = math.exp %532 : vector<2x16xf32>
    %cst_122 = arith.constant 1.000000e+00 : f32
    %534 = vector.broadcast %cst_122 : f32 to vector<2x16xf32>
    %535 = arith.addf %534, %533 : vector<2x16xf32>
    %536 = arith.divf %534, %535 : vector<2x16xf32>
    %537 = arith.mulf %528, %499 : vector<2x16xf32>
    %538 = arith.mulf %522, %530 : vector<2x16xf32>
    %539 = arith.addf %537, %538 : vector<2x16xf32>
    %540 = math.tanh %539 : vector<2x16xf32>
    %541 = arith.mulf %536, %540 : vector<2x16xf32>
    %542 = vector.broadcast %512 : vector<2x1xf32> to vector<2x16xf32>
    %543 = arith.mulf %542, %541 : vector<2x16xf32>
    %c0_123 = arith.constant 0 : index
    %c0_124 = arith.constant 0 : index
    %544 = vector.load %arg14[%c0_123, %c0_124] : memref<2x32xf32, #tpu.memory_space<vmem>>, vector<2x32xf32>
    %545 = vector.extract_strided_slice %544 {offsets = [0, 0], sizes = [1, 32], strides = [1, 1]} : vector<2x32xf32> to vector<1x32xf32>
    %546 = vector.extract_strided_slice %544 {offsets = [1, 0], sizes = [1, 32], strides = [1, 1]} : vector<2x32xf32> to vector<1x32xf32>
    %547 = tpu.concatenate %226, %543 in 1 : vector<2x16xf32>, vector<2x16xf32> -> vector<2x32xf32>
    %c0_125 = arith.constant 0 : index
    %c0_126 = arith.constant 0 : index
    %c0_127 = arith.constant 0 : index
    %548 = vector.load %arg15[%c0_125, %c0_126, %c0_127] : memref<2x4x32xf32, #tpu.memory_space<vmem>>, vector<2x1x32xf32>
    %549 = vector.shape_cast %548 : vector<2x1x32xf32> to vector<2x32xf32>
    %550 = vector.shape_cast %547 : vector<2x32xf32> to vector<2x1x32xf32>
    tpu.vector_store %arg15[%c0_125, %c0_126, %c0_127], %550 {strides = array<i32>} : memref<2x4x32xf32, #tpu.memory_space<vmem>>, vector<2x1x32xf32>,
    %c0_128 = arith.constant 0 : index
    %c0_129 = arith.constant 0 : index
    %551 = vector.load %arg13[%c0_128, %c0_129] : memref<32x32xf32, #tpu.memory_space<vmem>>, vector<32x32xf32>
    %cst_130 = arith.constant dense<0.000000e+00> : vector<2x32xf32>
    %552 = tpu.matmul %547, %551, %cst_130 {dimension_numbers = #tpu.dot_dimension_numbers<[1], [0], [0], [1], [0, 0, 1, 1], [], []>} : vector<2x32xf32>, vector<32x32xf32>, vector<2x32xf32> -> vector<2x32xf32>
    %553 = vector.broadcast %545 : vector<1x32xf32> to vector<2x32xf32>
    %554 = arith.addf %552, %553 : vector<2x32xf32>
    %555 = math.tanh %554 : vector<2x32xf32>
    %556 = vector.broadcast %546 : vector<1x32xf32> to vector<2x32xf32>
    %557 = arith.mulf %555, %556 : vector<2x32xf32>
    %cst_131 = arith.constant dense<0.000000e+00> : vector<2xf32>
    %558 = vector.multi_reduction <add>, %557, %cst_131 [1] : vector<2x32xf32> to vector<2xf32>
    %559 = vector.shape_cast %558 : vector<2xf32> to vector<2x1xf32>
    %560 = tpu.concatenate %275, %508 in 1 : vector<2x16xf32>, vector<2x16xf32> -> vector<2x32xf32>
    %c0_132 = arith.constant 0 : index
    %c1 = arith.constant 1 : index
    %c0_133 = arith.constant 0 : index
    %561 = vector.load %arg15[%c0_132, %c1, %c0_133] : memref<2x4x32xf32, #tpu.memory_space<vmem>>, vector<2x1x32xf32>
    %562 = vector.shape_cast %561 : vector<2x1x32xf32> to vector<2x32xf32>
    %563 = vector.shape_cast %560 : vector<2x32xf32> to vector<2x1x32xf32>
    tpu.vector_store %arg15[%c0_132, %c1, %c0_133], %563 {strides = array<i32>} : memref<2x4x32xf32, #tpu.memory_space<vmem>>, vector<2x1x32xf32>,
    %c0_134 = arith.constant 0 : index
    %c0_135 = arith.constant 0 : index
    %564 = vector.load %arg13[%c0_134, %c0_135] : memref<32x32xf32, #tpu.memory_space<vmem>>, vector<32x32xf32>
    %cst_136 = arith.constant dense<0.000000e+00> : vector<2x32xf32>
    %565 = tpu.matmul %560, %564, %cst_136 {dimension_numbers = #tpu.dot_dimension_numbers<[1], [0], [0], [1], [0, 0, 1, 1], [], []>} : vector<2x32xf32>, vector<32x32xf32>, vector<2x32xf32> -> vector<2x32xf32>
    %566 = vector.broadcast %545 : vector<1x32xf32> to vector<2x32xf32>
    %567 = arith.addf %565, %566 : vector<2x32xf32>
    %568 = math.tanh %567 : vector<2x32xf32>
    %569 = vector.broadcast %546 : vector<1x32xf32> to vector<2x32xf32>
    %570 = arith.mulf %568, %569 : vector<2x32xf32>
    %cst_137 = arith.constant dense<0.000000e+00> : vector<2xf32>
    %571 = vector.multi_reduction <add>, %570, %cst_137 [1] : vector<2x32xf32> to vector<2xf32>
    %572 = vector.shape_cast %571 : vector<2xf32> to vector<2x1xf32>
    %573 = tpu.concatenate %324, %459 in 1 : vector<2x16xf32>, vector<2x16xf32> -> vector<2x32xf32>
    %c0_138 = arith.constant 0 : index
    %c2 = arith.constant 2 : index
    %c0_139 = arith.constant 0 : index
    %574 = vector.load %arg15[%c0_138, %c2, %c0_139] : memref<2x4x32xf32, #tpu.memory_space<vmem>>, vector<2x1x32xf32>
    %575 = vector.shape_cast %574 : vector<2x1x32xf32> to vector<2x32xf32>
    %576 = vector.shape_cast %573 : vector<2x32xf32> to vector<2x1x32xf32>
    tpu.vector_store %arg15[%c0_138, %c2, %c0_139], %576 {strides = array<i32>} : memref<2x4x32xf32, #tpu.memory_space<vmem>>, vector<2x1x32xf32>,
    %c0_140 = arith.constant 0 : index
    %c0_141 = arith.constant 0 : index
    %577 = vector.load %arg13[%c0_140, %c0_141] : memref<32x32xf32, #tpu.memory_space<vmem>>, vector<32x32xf32>
    %cst_142 = arith.constant dense<0.000000e+00> : vector<2x32xf32>
    %578 = tpu.matmul %573, %577, %cst_142 {dimension_numbers = #tpu.dot_dimension_numbers<[1], [0], [0], [1], [0, 0, 1, 1], [], []>} : vector<2x32xf32>, vector<32x32xf32>, vector<2x32xf32> -> vector<2x32xf32>
    %579 = vector.broadcast %545 : vector<1x32xf32> to vector<2x32xf32>
    %580 = arith.addf %578, %579 : vector<2x32xf32>
    %581 = math.tanh %580 : vector<2x32xf32>
    %582 = vector.broadcast %546 : vector<1x32xf32> to vector<2x32xf32>
    %583 = arith.mulf %581, %582 : vector<2x32xf32>
    %cst_143 = arith.constant dense<0.000000e+00> : vector<2xf32>
    %584 = vector.multi_reduction <add>, %583, %cst_143 [1] : vector<2x32xf32> to vector<2xf32>
    %585 = vector.shape_cast %584 : vector<2xf32> to vector<2x1xf32>
    %586 = tpu.concatenate %359, %410 in 1 : vector<2x16xf32>, vector<2x16xf32> -> vector<2x32xf32>
    %c0_144 = arith.constant 0 : index
    %c3 = arith.constant 3 : index
    %c0_145 = arith.constant 0 : index
    %587 = vector.load %arg15[%c0_144, %c3, %c0_145] : memref<2x4x32xf32, #tpu.memory_space<vmem>>, vector<2x1x32xf32>
    %588 = vector.shape_cast %587 : vector<2x1x32xf32> to vector<2x32xf32>
    %589 = vector.shape_cast %586 : vector<2x32xf32> to vector<2x1x32xf32>
    tpu.vector_store %arg15[%c0_144, %c3, %c0_145], %589 {strides = array<i32>} : memref<2x4x32xf32, #tpu.memory_space<vmem>>, vector<2x1x32xf32>,
    %c0_146 = arith.constant 0 : index
    %c0_147 = arith.constant 0 : index
    %590 = vector.load %arg13[%c0_146, %c0_147] : memref<32x32xf32, #tpu.memory_space<vmem>>, vector<32x32xf32>
    %cst_148 = arith.constant dense<0.000000e+00> : vector<2x32xf32>
    %591 = tpu.matmul %586, %590, %cst_148 {dimension_numbers = #tpu.dot_dimension_numbers<[1], [0], [0], [1], [0, 0, 1, 1], [], []>} : vector<2x32xf32>, vector<32x32xf32>, vector<2x32xf32> -> vector<2x32xf32>
    %592 = vector.broadcast %545 : vector<1x32xf32> to vector<2x32xf32>
    %593 = arith.addf %591, %592 : vector<2x32xf32>
    %594 = math.tanh %593 : vector<2x32xf32>
    %595 = vector.broadcast %546 : vector<1x32xf32> to vector<2x32xf32>
    %596 = arith.mulf %594, %595 : vector<2x32xf32>
    %cst_149 = arith.constant dense<0.000000e+00> : vector<2xf32>
    %597 = vector.multi_reduction <add>, %596, %cst_149 [1] : vector<2x32xf32> to vector<2xf32>
    %598 = vector.shape_cast %597 : vector<2xf32> to vector<2x1xf32>
    %599 = tpu.concatenate %559, %572, %585, %598 in 1 : vector<2x1xf32>, vector<2x1xf32>, vector<2x1xf32>, vector<2x1xf32> -> vector<2x4xf32>
    %cst_150 = arith.constant 5.000000e-01 : f32
    %600 = vector.broadcast %cst_150 : f32 to vector<2x4xf32>
    %601 = arith.cmpf ogt, %162, %600 : vector<2x4xf32>
    %cst_151 = arith.constant -1.000000e-32 : f32
    %602 = vector.broadcast %cst_151 : f32 to vector<2x4xf32>
    %603 = arith.select %601, %599, %602 : vector<2x4xi1>, vector<2x4xf32>
    %cst_152 = arith.constant dense<0xFF800000> : vector<2xf32>
    %604 = vector.multi_reduction <maximumf>, %603, %cst_152 [1] : vector<2x4xf32> to vector<2xf32>
    %605 = vector.shape_cast %604 : vector<2xf32> to vector<2x1xf32>
    %606 = vector.broadcast %605 : vector<2x1xf32> to vector<2x4xf32>
    %607 = arith.subf %603, %606 : vector<2x4xf32>
    %608 = math.exp %607 : vector<2x4xf32>
    %cst_153 = arith.constant dense<0.000000e+00> : vector<2xf32>
    %609 = vector.multi_reduction <add>, %608, %cst_153 [1] : vector<2x4xf32> to vector<2xf32>
    %610 = vector.shape_cast %609 : vector<2xf32> to vector<2x1xf32>
    %611 = tpu.reciprocal %610 {approx = true} : vector<2x1xf32> -> vector<2x1xf32>
    %612 = vector.broadcast %611 : vector<2x1xf32> to vector<2x4xf32>
    %613 = arith.mulf %608, %612 : vector<2x4xf32>
    %cst_154 = arith.constant 0.000000e+00 : f32
    %614 = vector.broadcast %cst_154 : f32 to vector<2x32xf32>
    %615 = vector.extract_strided_slice %613 {offsets = [0, 0], sizes = [2, 1], strides = [1, 1]} : vector<2x4xf32> to vector<2x1xf32>
    %616 = vector.broadcast %615 : vector<2x1xf32> to vector<2x32xf32>
    %617 = arith.mulf %616, %547 : vector<2x32xf32>
    %618 = arith.addf %614, %617 : vector<2x32xf32>
    %619 = vector.extract_strided_slice %613 {offsets = [0, 1], sizes = [2, 1], strides = [1, 1]} : vector<2x4xf32> to vector<2x1xf32>
    %620 = vector.broadcast %619 : vector<2x1xf32> to vector<2x32xf32>
    %621 = arith.mulf %620, %560 : vector<2x32xf32>
    %622 = arith.addf %618, %621 : vector<2x32xf32>
    %623 = vector.extract_strided_slice %613 {offsets = [0, 2], sizes = [2, 1], strides = [1, 1]} : vector<2x4xf32> to vector<2x1xf32>
    %624 = vector.broadcast %623 : vector<2x1xf32> to vector<2x32xf32>
    %625 = arith.mulf %624, %573 : vector<2x32xf32>
    %626 = arith.addf %622, %625 : vector<2x32xf32>
    %627 = vector.extract_strided_slice %613 {offsets = [0, 3], sizes = [2, 1], strides = [1, 1]} : vector<2x4xf32> to vector<2x1xf32>
    %628 = vector.broadcast %627 : vector<2x1xf32> to vector<2x32xf32>
    %629 = arith.mulf %628, %586 : vector<2x32xf32>
    %630 = arith.addf %626, %629 : vector<2x32xf32>
    %c0_155 = arith.constant 0 : index
    %c0_156 = arith.constant 0 : index
    %631 = vector.load %arg16[%c0_155, %c0_156] : memref<2x32xf32, #tpu.memory_space<vmem>>, vector<2x32xf32>
    tpu.vector_store %arg16[%c0_155, %c0_156], %630 {strides = array<i32>} : memref<2x32xf32, #tpu.memory_space<vmem>>, vector<2x32xf32>,
    return
  }
}

</mosaic_0001>

<llo_original>
// kernel: hierbert_forward.1
$region0: #{hierbert_forward.1}
  #allocation0 [shape = 'u32[]', space=smem, size = 0x4, offset = 0x4, fixed_abs, tag = 'smem constant byte address 0x4 - core index']
  #allocation1 [shape = 'u32[144,128]{1,0:T(1,128)}', space=vmem, size = 0x12000, scoped, tag = 'internal scratch']
  %s0 = inlined_call_operand.vmem [shape: f32[8,8,32], index: 0, kind: input, shape index: {}]
  %s1 = inlined_call_operand.vmem [shape: f32[8,1,8], index: 1, kind: input, shape index: {}]
  %s2 = inlined_call_operand.vmem [shape: f32[2,4], index: 2, kind: input, shape index: {}]
  %s3 = inlined_call_operand.vmem [shape: f32[32,96], index: 3, kind: input, shape index: {}]
  %s4 = inlined_call_operand.vmem [shape: f32[1,96], index: 4, kind: input, shape index: {}]
  %s5 = inlined_call_operand.vmem [shape: f32[32,32], index: 5, kind: input, shape index: {}]
  %s6 = inlined_call_operand.vmem [shape: f32[32,64], index: 6, kind: input, shape index: {}]
  %s7 = inlined_call_operand.vmem [shape: f32[1,64], index: 7, kind: input, shape index: {}]
  %s8 = inlined_call_operand.vmem [shape: f32[64,32], index: 8, kind: input, shape index: {}]
  %s9 = inlined_call_operand.vmem [shape: f32[8,32], index: 9, kind: input, shape index: {}]
  %s10 = inlined_call_operand.vmem [shape: f32[32,128], index: 10, kind: input, shape index: {}]
  %s11 = inlined_call_operand.vmem [shape: f32[1,128], index: 11, kind: input, shape index: {}]
  %s12 = inlined_call_operand.vmem [shape: f32[16,128], index: 12, kind: input, shape index: {}]
  %s13 = inlined_call_operand.vmem [shape: f32[32,32], index: 13, kind: input, shape index: {}]
  %s14 = inlined_call_operand.vmem [shape: f32[2,32], index: 14, kind: input, shape index: {}]
  %s15 = inlined_call_operand.hbm [shape: f32[2,4,32], index: 15, kind: output, shape index: {0}]
  %s16 = inlined_call_operand.hbm [shape: f32[2,32], index: 16, kind: output, shape index: {1}]
  %17 = xla_tuple %s15, %s16
  %s18 = sld [smem:[#allocation0]]
  $region78: #{hierbert_forward.1} parent=0
    _
  %s20 = ssub.s32 1, %s18
  %s21 = scalar_select 0, %s20, %s18
  $region1: #{hierbert_forward.1} parent=0
    #allocation2 [shape = 'u8[4096]{0}', space=vmem, size = 0x1000, scoped, tag = 'output window, operand 0, single buffered']
    #allocation3 [shape = 's32[1]{0}', space=sflag, size = 0x4, scoped, tag = 'scoped memory for hierbert_forward.1']
    #allocation4 [shape = 'u8[1024]{0}', space=vmem, size = 0x400, scoped, tag = 'output window, operand 1, single buffered']
    #allocation5 [shape = 's32[1]{0}', space=sflag, size = 0x4, scoped, tag = 'scoped memory for hierbert_forward.1']
    %22 = vsyncpa [#allocation3], 0
    %23 = vsyncpa [#allocation5], 0
    // Predicated region
    $region2: #{hierbert_forward.1} parent=1 // pred_check
      _
    $region3: #{hierbert_forward.1} parent=1 // pred_check_branch
      %25 = sbr.rel (0) target = $region5
    $region4: #{hierbert_forward.1} parent=1 // pred_region
      _
    $region5: #{hierbert_forward.1} parent=1 // pred_fallthru
      _
    // Predicated region
    $region6: #{hierbert_forward.1} parent=1 // pred_check
      _
    $region7: #{hierbert_forward.1} parent=1 // pred_check_branch
      %27 = sbr.rel (0) target = $region9
    $region8: #{hierbert_forward.1} parent=1 // pred_region
      _
    $region9: #{hierbert_forward.1} parent=1 // pred_fallthru
      _
    // Predicated region
    $region10: #{hierbert_forward.1} parent=1 // pred_check
      _
    $region11: #{hierbert_forward.1} parent=1 // pred_check_branch
      %29 = sbr.rel (0) target = $region13
    $region12: #{hierbert_forward.1} parent=1 // pred_region
      _
    $region13: #{hierbert_forward.1} parent=1 // pred_fallthru
      _
    // Predicated region
    $region14: #{hierbert_forward.1} parent=1 // pred_check
      _
    $region15: #{hierbert_forward.1} parent=1 // pred_check_branch
      %31 = sbr.rel (0) target = $region17
    $region16: #{hierbert_forward.1} parent=1 // pred_region
      _
    $region17: #{hierbert_forward.1} parent=1 // pred_fallthru
      _
    // Predicated region
    $region18: #{hierbert_forward.1} parent=1 // pred_check
      _
    $region19: #{hierbert_forward.1} parent=1 // pred_check_branch
      %33 = sbr.rel (0) target = $region21
    $region20: #{hierbert_forward.1} parent=1 // pred_region
      _
    $region21: #{hierbert_forward.1} parent=1 // pred_fallthru
      _
    // Predicated region
    $region22: #{hierbert_forward.1} parent=1 // pred_check
      _
    $region23: #{hierbert_forward.1} parent=1 // pred_check_branch
      %35 = sbr.rel (0) target = $region25
    $region24: #{hierbert_forward.1} parent=1 // pred_region
      _
    $region25: #{hierbert_forward.1} parent=1 // pred_fallthru
      _
    // Predicated region
    $region26: #{hierbert_forward.1} parent=1 // pred_check
      _
    $region27: #{hierbert_forward.1} parent=1 // pred_check_branch
      %37 = sbr.rel (0) target = $region29
    $region28: #{hierbert_forward.1} parent=1 // pred_region
      _
    $region29: #{hierbert_forward.1} parent=1 // pred_fallthru
      _
    // Predicated region
    $region30: #{hierbert_forward.1} parent=1 // pred_check
      _
    $region31: #{hierbert_forward.1} parent=1 // pred_check_branch
      %39 = sbr.rel (0) target = $region33
    $region32: #{hierbert_forward.1} parent=1 // pred_region
      _
    $region33: #{hierbert_forward.1} parent=1 // pred_fallthru
      _
    // Predicated region
    $region34: #{hierbert_forward.1} parent=1 // pred_check
      _
    $region35: #{hierbert_forward.1} parent=1 // pred_check_branch
      %41 = sbr.rel (0) target = $region37
    $region36: #{hierbert_forward.1} parent=1 // pred_region
      _
    $region37: #{hierbert_forward.1} parent=1 // pred_fallthru
      _
    // Predicated region
    $region38: #{hierbert_forward.1} parent=1 // pred_check
      _
    $region39: #{hierbert_forward.1} parent=1 // pred_check_branch
      %43 = sbr.rel (0) target = $region41
    $region40: #{hierbert_forward.1} parent=1 // pred_region
      _
    $region41: #{hierbert_forward.1} parent=1 // pred_fallthru
      _
    // Predicated region
    $region42: #{hierbert_forward.1} parent=1 // pred_check
      _
    $region43: #{hierbert_forward.1} parent=1 // pred_check_branch
      %45 = sbr.rel (0) target = $region45
    $region44: #{hierbert_forward.1} parent=1 // pred_region
      _
    $region45: #{hierbert_forward.1} parent=1 // pred_fallthru
      _
    // Predicated region
    $region46: #{hierbert_forward.1} parent=1 // pred_check
      _
    $region47: #{hierbert_forward.1} parent=1 // pred_check_branch
      %47 = sbr.rel (0) target = $region49
    $region48: #{hierbert_forward.1} parent=1 // pred_region
      _
    $region49: #{hierbert_forward.1} parent=1 // pred_fallthru
      _
    // Predicated region
    $region50: #{hierbert_forward.1} parent=1 // pred_check
      _
    $region51: #{hierbert_forward.1} parent=1 // pred_check_branch
      %49 = sbr.rel (0) target = $region53
    $region52: #{hierbert_forward.1} parent=1 // pred_region
      _
    $region53: #{hierbert_forward.1} parent=1 // pred_fallthru
      _
    // Predicated region
    $region54: #{hierbert_forward.1} parent=1 // pred_check
      _
    $region55: #{hierbert_forward.1} parent=1 // pred_check_branch
      %51 = sbr.rel (0) target = $region57
    $region56: #{hierbert_forward.1} parent=1 // pred_region
      _
    $region57: #{hierbert_forward.1} parent=1 // pred_fallthru
      _
    // Predicated region
    $region58: #{hierbert_forward.1} parent=1 // pred_check
      _
    $region59: #{hierbert_forward.1} parent=1 // pred_check_branch
      %53 = sbr.rel (0) target = $region61
    $region60: #{hierbert_forward.1} parent=1 // pred_region
      _
    $region61: #{hierbert_forward.1} parent=1 // pred_fallthru
      _
    %v54 = vld [vmem:[%s9] sm:$0xff]
    %v55 = vld [vmem:[%s0] sm:$0xff]
    %v56 = vld [vmem:[%s0 + $0x8] sm:$0xff]
    %v57 = vld [vmem:[%s0 + $0x10] sm:$0xff]
    %v58 = vld [vmem:[%s0 + $0x18] sm:$0xff]
    %v59 = vld [vmem:[%s0 + $0x20] sm:$0xff]
    %v60 = vld [vmem:[%s0 + $0x28] sm:$0xff]
    %v61 = vld [vmem:[%s0 + $0x30] sm:$0xff]
    %v62 = vld [vmem:[%s0 + $0x38] sm:$0xff]
    %vm63 = vcmask 261120
    %v64 = vsel %vm63, %v55, 0.0
    %65 = vadd.xlane.f32.xlu0 %v64
    %v66 = vpop.xlane.xlu0 %65
    %v67 = vsel %vm63, %v56, 0.0
    %68 = vadd.xlane.f32.xlu0 %v67
    %v69 = vpop.xlane.xlu0 %68
    %v70 = vsel %vm63, %v57, 0.0
    %71 = vadd.xlane.f32.xlu0 %v70
    %v72 = vpop.xlane.xlu0 %71
    %v73 = vsel %vm63, %v58, 0.0
    %74 = vadd.xlane.f32.xlu0 %v73
    %v75 = vpop.xlane.xlu0 %74
    %v76 = vsel %vm63, %v59, 0.0
    %77 = vadd.xlane.f32.xlu0 %v76
    %v78 = vpop.xlane.xlu0 %77
    %v79 = vsel %vm63, %v60, 0.0
    %80 = vadd.xlane.f32.xlu0 %v79
    %v81 = vpop.xlane.xlu0 %80
    %v82 = vsel %vm63, %v61, 0.0
    %83 = vadd.xlane.f32.xlu0 %v82
    %v84 = vpop.xlane.xlu0 %83
    %v85 = vsel %vm63, %v62, 0.0
    %86 = vadd.xlane.f32.xlu0 %v85
    %v87 = vpop.xlane.xlu0 %86
    %v88 = vrcp.pop 32.0
    %v89 = vmul.f32 %v66, %v88
    %v90 = vmul.f32 %v69, %v88
    %v91 = vmul.f32 %v72, %v88
    %v92 = vmul.f32 %v75, %v88
    %v93 = vmul.f32 %v78, %v88
    %v94 = vmul.f32 %v81, %v88
    %v95 = vmul.f32 %v84, %v88
    %v96 = vmul.f32 %v87, %v88
    %v97 = vsub.f32 %v55, %v89
    %v98 = vsub.f32 %v56, %v90
    %v99 = vsub.f32 %v57, %v91
    %v100 = vsub.f32 %v58, %v92
    %v101 = vsub.f32 %v59, %v93
    %v102 = vsub.f32 %v60, %v94
    %v103 = vsub.f32 %v61, %v95
    %v104 = vsub.f32 %v62, %v96
    %v105 = vmul.f32 %v97, %v97
    %v106 = vmul.f32 %v98, %v98
    %v107 = vmul.f32 %v99, %v99
    %v108 = vmul.f32 %v100, %v100
    %v109 = vmul.f32 %v101, %v101
    %v110 = vmul.f32 %v102, %v102
    %v111 = vmul.f32 %v103, %v103
    %v112 = vmul.f32 %v104, %v104
    %v113 = vsel %vm63, %v105, 0.0
    %114 = vadd.xlane.f32.xlu0 %v113
    %v115 = vpop.xlane.xlu0 %114
    %v116 = vsel %vm63, %v106, 0.0
    %117 = vadd.xlane.f32.xlu0 %v116
    %v118 = vpop.xlane.xlu0 %117
    %v119 = vsel %vm63, %v107, 0.0
    %120 = vadd.xlane.f32.xlu0 %v119
    %v121 = vpop.xlane.xlu0 %120
    %v122 = vsel %vm63, %v108, 0.0
    %123 = vadd.xlane.f32.xlu0 %v122
    %v124 = vpop.xlane.xlu0 %123
    %v125 = vsel %vm63, %v109, 0.0
    %126 = vadd.xlane.f32.xlu0 %v125
    %v127 = vpop.xlane.xlu0 %126
    %v128 = vsel %vm63, %v110, 0.0
    %129 = vadd.xlane.f32.xlu0 %v128
    %v130 = vpop.xlane.xlu0 %129
    %v131 = vsel %vm63, %v111, 0.0
    %132 = vadd.xlane.f32.xlu0 %v131
    %v133 = vpop.xlane.xlu0 %132
    %v134 = vsel %vm63, %v112, 0.0
    %135 = vadd.xlane.f32.xlu0 %v134
    %v136 = vpop.xlane.xlu0 %135
    %v137 = vmul.f32 %v115, %v88
    %v138 = vmul.f32 %v118, %v88
    %v139 = vmul.f32 %v121, %v88
    %v140 = vmul.f32 %v124, %v88
    %v141 = vmul.f32 %v127, %v88
    %v142 = vmul.f32 %v130, %v88
    %v143 = vmul.f32 %v133, %v88
    %v144 = vmul.f32 %v136, %v88
    %v145 = vadd.f32 %v137, 1e-12
    %v146 = vadd.f32 %v138, 1e-12
    %v147 = vadd.f32 %v139, 1e-12
    %v148 = vadd.f32 %v140, 1e-12
    %v149 = vadd.f32 %v141, 1e-12
    %v150 = vadd.f32 %v142, 1e-12
    %v151 = vadd.f32 %v143, 1e-12
    %v152 = vadd.f32 %v144, 1e-12
    %v153 = vrsqrt.pop %v145
    %v154 = vrsqrt.pop %v146
    %v155 = vrsqrt.pop %v147
    %v156 = vrsqrt.pop %v148
    %v157 = vrsqrt.pop %v149
    %v158 = vrsqrt.pop %v150
    %v159 = vrsqrt.pop %v151
    %v160 = vrsqrt.pop %v152
    %v161 = vmul.f32 %v97, %v153
    %v162 = vmul.f32 %v98, %v154
    %v163 = vmul.f32 %v99, %v155
    %v164 = vmul.f32 %v100, %v156
    %v165 = vmul.f32 %v101, %v157
    %v166 = vmul.f32 %v102, %v158
    %v167 = vmul.f32 %v103, %v159
    %v168 = vmul.f32 %v104, %v160
    %v169 = vlaneseq
    %v170 = vshrl.u32 %v169, 7
    %v171 = vsub.s32 0, %v170
    %v172 = vrot.slane %v54, %v171
    %v173 = vmul.f32 %v161, %v172
    %v174 = vmul.f32 %v162, %v172
    %v175 = vmul.f32 %v163, %v172
    %v176 = vmul.f32 %v164, %v172
    %v177 = vmul.f32 %v165, %v172
    %v178 = vmul.f32 %v166, %v172
    %v179 = vmul.f32 %v167, %v172
    %v180 = vmul.f32 %v168, %v172
    %v181 = vlaneseq
    %v182 = vshrl.u32 %v181, 7
    %v183 = vsub.s32 1, %v182
    %v184 = vrot.slane %v54, %v183
    %v185 = vadd.f32 %v173, %v184
    %v186 = vadd.f32 %v174, %v184
    %v187 = vadd.f32 %v175, %v184
    %v188 = vadd.f32 %v176, %v184
    %v189 = vadd.f32 %v177, %v184
    %v190 = vadd.f32 %v178, %v184
    %v191 = vadd.f32 %v179, %v184
    %v192 = vadd.f32 %v180, %v184
    %v193 = vld [vmem:[%s3] sm:$0xff]
    %v194 = vld [vmem:[%s3 + $0x8] sm:$0xff]
    %v195 = vld [vmem:[%s3 + $0x10] sm:$0xff]
    %v196 = vld [vmem:[%s3 + $0x18] sm:$0xff]
    %v197 = vld [vmem:[%s4] sm:$0x1]
    %v199 = vlaneseq
    %v200 = vshrl.u32 %v199, 7
    %v201 = vsub.s32 0, %v200
    %v202 = vrot.slane %v197, %v201
    %v205 = vsel %vm63, %v185, 0
    %v208 = vsel %vm63, %v186, 0
    %v211 = vsel %vm63, %v187, 0
    %v214 = vsel %vm63, %v188, 0
    %v217 = vsel %vm63, %v189, 0
    %v220 = vsel %vm63, %v190, 0
    %v223 = vsel %vm63, %v191, 0
    %v226 = vsel %vm63, %v192, 0
    %228 = vmatprep.subr.mxu0 0.0
    %229 = vmatpush1.msra.mxu0 %v193
    %230 = vmatprep.subr.mxu0 0.0
    %231 = vmatpush1.msra.mxu0 %v194
    %232 = vmatprep.subr.mxu0 0.0
    %233 = vmatpush1.msra.mxu0 %v195
    %234 = vmatprep.subr.mxu0 0.0
    %235 = vmatpush1.msra.mxu0 %v196
    %236 = vmatprep.subr.mxu0 0.0
    %237 = vmatpush1.msra.mxu0 0.0
    %238 = vmatprep.subr.mxu0 0.0
    %239 = vmatpush1.msra.mxu0 0.0
    %240 = vmatprep.subr.mxu0 0.0
    %241 = vmatpush1.msra.mxu0 0.0
    %242 = vmatprep.subr.mxu0 0.0
    %243 = vmatpush1.msra.mxu0 0.0
    %244 = vmatprep.subr.mxu0 0.0
    %245 = vmatpush1.msra.mxu0 0.0
    %246 = vmatprep.subr.mxu0 0.0
    %247 = vmatpush1.msra.mxu0 0.0
    %248 = vmatprep.subr.mxu0 0.0
    %249 = vmatpush1.msra.mxu0 0.0
    %250 = vmatprep.subr.mxu0 0.0
    %251 = vmatpush1.msra.mxu0 0.0
    %252 = vmatprep.subr.mxu0 0.0
    %253 = vmatpush1.msra.mxu0 0.0
    %254 = vmatprep.subr.mxu0 0.0
    %255 = vmatpush1.msra.mxu0 0.0
    %256 = vmatprep.subr.mxu0 0.0
    %257 = vmatpush1.msra.mxu0 0.0
    %258 = vmatprep.subr.mxu0 0.0
    %259 = vmatpush1.msra.mxu0 0.0
    %260 = vmatprep.subr.mxu0 0.0
    %261 = vmatpush1.msra.mxu0 0.0
    %262 = vmatprep.subr.mxu0 0.0
    %263 = vmatpush1.msra.mxu0 0.0
    %264 = vmatprep.subr.mxu0 0.0
    %265 = vmatpush1.msra.mxu0 0.0
    %266 = vmatprep.subr.mxu0 0.0
    %267 = vmatpush1.msra.mxu0 0.0
    %268 = vmatprep.subr.mxu0 0.0
    %269 = vmatpush1.msra.mxu0 0.0
    %270 = vmatprep.subr.mxu0 0.0
    %271 = vmatpush1.msra.mxu0 0.0
    %272 = vmatprep.subr.mxu0 0.0
    %273 = vmatpush1.msra.mxu0 0.0
    %274 = vmatprep.subr.mxu0 0.0
    %275 = vmatpush1.msra.mxu0 0.0
    %276 = vmatprep.subr.mxu0 0.0
    %277 = vmatpush1.msra.mxu0 0.0
    %278 = vmatprep.subr.mxu0 0.0
    %279 = vmatpush1.msra.mxu0 0.0
    %280 = vmatprep.subr.mxu0 0.0
    %281 = vmatpush1.msra.mxu0 0.0
    %282 = vmatprep.subr.mxu0 0.0
    %283 = vmatpush1.msra.mxu0 0.0
    %284 = vmatprep.subr.mxu0 0.0
    %285 = vmatpush1.msra.mxu0 0.0
    %286 = vmatprep.subr.mxu0 0.0
    %287 = vmatpush1.msra.mxu0 0.0
    %288 = vmatprep.subr.mxu0 0.0
    %289 = vmatpush1.msra.mxu0 0.0
    %290 = vmatprep.subr.mxu0 0.0
    %291 = vmatpush1.msra.mxu0 0.0
    %292 = vmatprep.mubr.f32.mxu0 0.0
    %293 = vmatmul.mubr.f32.gmra.mrb[0].mxu0 %v205
    %v294 = vpop.f32.mrb[0].mxu0
    %v295 = vadd.f32 %v202, %v294
    %v296 = vpop.f32.mrb[0].mxu0
    %297 = vmatprep.mubr.f32.mxu0 0.0
    %298 = vmatmul.mubr.f32.gmra.mrb[0].mxu0 %v208
    %v299 = vpop.f32.mrb[0].mxu0
    %v300 = vadd.f32 %v202, %v299
    %v301 = vpop.f32.mrb[0].mxu0
    %302 = vmatprep.mubr.f32.mxu0 0.0
    %303 = vmatmul.mubr.f32.gmra.mrb[0].mxu0 %v211
    %v304 = vpop.f32.mrb[0].mxu0
    %v305 = vadd.f32 %v202, %v304
    %v306 = vpop.f32.mrb[0].mxu0
    %307 = vmatprep.mubr.f32.mxu0 0.0
    %308 = vmatmul.mubr.f32.gmra.mrb[0].mxu0 %v214
    %v309 = vpop.f32.mrb[0].mxu0
    %v310 = vadd.f32 %v202, %v309
    %v311 = vpop.f32.mrb[0].mxu0
    %312 = vmatprep.mubr.f32.mxu0 0.0
    %313 = vmatmul.mubr.f32.gmra.mrb[0].mxu0 %v217
    %v314 = vpop.f32.mrb[0].mxu0
    %v315 = vadd.f32 %v202, %v314
    %v316 = vpop.f32.mrb[0].mxu0
    %317 = vmatprep.mubr.f32.mxu0 0.0
    %318 = vmatmul.mubr.f32.gmra.mrb[0].mxu0 %v220
    %v319 = vpop.f32.mrb[0].mxu0
    %v320 = vadd.f32 %v202, %v319
    %v321 = vpop.f32.mrb[0].mxu0
    %322 = vmatprep.mubr.f32.mxu0 0.0
    %323 = vmatmul.mubr.f32.gmra.mrb[0].mxu0 %v223
    %v324 = vpop.f32.mrb[0].mxu0
    %v325 = vadd.f32 %v202, %v324
    %v326 = vpop.f32.mrb[0].mxu0
    %327 = vmatprep.mubr.f32.mxu0 0.0
    %328 = vmatmul.mubr.f32.gmra.mrb[0].mxu0 %v226
    %v329 = vpop.f32.mrb[0].mxu0
    %v330 = vadd.f32 %v202, %v329
    %v331 = vpop.f32.mrb[0].mxu0
    %332 = vdwg.mxu0
    %v333 = vld [vmem:[%s1] sm:$0x1]
    %v334 = vld [vmem:[%s1 + $0x1] sm:$0x1]
    %v335 = vld [vmem:[%s1 + $0x2] sm:$0x1]
    %v336 = vld [vmem:[%s1 + $0x3] sm:$0x1]
    %v337 = vld [vmem:[%s1 + $0x4] sm:$0x1]
    %v338 = vld [vmem:[%s1 + $0x5] sm:$0x1]
    %v339 = vld [vmem:[%s1 + $0x6] sm:$0x1]
    %v340 = vld [vmem:[%s1 + $0x7] sm:$0x1]
    %v341 = vsub.f32 1.0, %v333
    %v342 = vsub.f32 1.0, %v334
    %v343 = vsub.f32 1.0, %v335
    %v344 = vsub.f32 1.0, %v336
    %v345 = vsub.f32 1.0, %v337
    %v346 = vsub.f32 1.0, %v338
    %v347 = vsub.f32 1.0, %v339
    %v348 = vsub.f32 1.0, %v340
    %v349 = vmul.f32 %v341, -1e+09
    %v350 = vmul.f32 %v342, -1e+09
    %v351 = vmul.f32 %v343, -1e+09
    %v352 = vmul.f32 %v344, -1e+09
    %v353 = vmul.f32 %v345, -1e+09
    %v354 = vmul.f32 %v346, -1e+09
    %v355 = vmul.f32 %v347, -1e+09
    %v356 = vmul.f32 %v348, -1e+09
    %v357 = vlaneseq
    %v358 = vshrl.u32 %v357, 7
    %v359 = vsub.s32 2, %v358
    %v360 = vrot.slane %v54, %v359
    %v361 = vadd.f32 %v360, 0.0
    %363 = vrot.lane.b32.xlu0 %v295, 96
    %v364 = vpop.permute.xlu0 %363
    %vm365 = vcmask 130048
    %v366 = vsel %vm365, %v295, 0
    %v368 = vsel %vm365, %v364, 0
    %370 = vmatprep.subr.mxu0 0.0
    %371 = vmatpush1.xpose.msra.mxu0 %v368
    %372 = vmatprep.subr.mxu0 0.0
    %373 = vmatpush1.xpose.msra.mxu0 0.0
    %374 = vmatprep.subr.mxu0 0.0
    %375 = vmatpush1.xpose.msra.mxu0 0.0
    %376 = vmatprep.subr.mxu0 0.0
    %377 = vmatpush1.xpose.msra.mxu0 0.0
    %378 = vmatprep.subr.mxu0 0.0
    %379 = vmatpush1.xpose.msra.mxu0 0.0
    %380 = vmatprep.subr.mxu0 0.0
    %381 = vmatpush1.xpose.msra.mxu0 0.0
    %382 = vmatprep.subr.mxu0 0.0
    %383 = vmatpush1.xpose.msra.mxu0 0.0
    %384 = vmatprep.subr.mxu0 0.0
    %385 = vmatpush1.xpose.msra.mxu0 0.0
    %386 = vmatprep.subr.mxu0 0.0
    %387 = vmatpush1.xpose.msra.mxu0 0.0
    %388 = vmatprep.subr.mxu0 0.0
    %389 = vmatpush1.xpose.msra.mxu0 0.0
    %390 = vmatprep.subr.mxu0 0.0
    %391 = vmatpush1.xpose.msra.mxu0 0.0
    %392 = vmatprep.subr.mxu0 0.0
    %393 = vmatpush1.xpose.msra.mxu0 0.0
    %394 = vmatprep.subr.mxu0 0.0
    %395 = vmatpush1.xpose.msra.mxu0 0.0
    %396 = vmatprep.subr.mxu0 0.0
    %397 = vmatpush1.xpose.msra.mxu0 0.0
    %398 = vmatprep.subr.mxu0 0.0
    %399 = vmatpush1.xpose.msra.mxu0 0.0
    %400 = vmatprep.subr.mxu0 0.0
    %401 = vmatpush1.xpose.msra.mxu0 0.0
    %402 = vmatprep.subr.mxu0 0.0
    %403 = vmatpush1.xpose.msra.mxu0 0.0
    %404 = vmatprep.subr.mxu0 0.0
    %405 = vmatpush1.xpose.msra.mxu0 0.0
    %406 = vmatprep.subr.mxu0 0.0
    %407 = vmatpush1.xpose.msra.mxu0 0.0
    %408 = vmatprep.subr.mxu0 0.0
    %409 = vmatpush1.xpose.msra.mxu0 0.0
    %410 = vmatprep.subr.mxu0 0.0
    %411 = vmatpush1.xpose.msra.mxu0 0.0
    %412 = vmatprep.subr.mxu0 0.0
    %413 = vmatpush1.xpose.msra.mxu0 0.0
    %414 = vmatprep.subr.mxu0 0.0
    %415 = vmatpush1.xpose.msra.mxu0 0.0
    %416 = vmatprep.subr.mxu0 0.0
    %417 = vmatpush1.xpose.msra.mxu0 0.0
    %418 = vmatprep.subr.mxu0 0.0
    %419 = vmatpush1.xpose.msra.mxu0 0.0
    %420 = vmatprep.subr.mxu0 0.0
    %421 = vmatpush1.xpose.msra.mxu0 0.0
    %422 = vmatprep.subr.mxu0 0.0
    %423 = vmatpush1.xpose.msra.mxu0 0.0
    %424 = vmatprep.subr.mxu0 0.0
    %425 = vmatpush1.xpose.msra.mxu0 0.0
    %426 = vmatprep.subr.mxu0 0.0
    %427 = vmatpush1.xpose.msra.mxu0 0.0
    %428 = vmatprep.subr.mxu0 0.0
    %429 = vmatpush1.xpose.msra.mxu0 0.0
    %430 = vmatprep.subr.mxu0 0.0
    %431 = vmatpush1.xpose.msra.mxu0 0.0
    %432 = vmatprep.subr.mxu0 0.0
    %433 = vmatpush1.xpose.msra.mxu0 0.0
    %434 = vmatprep.mubr.f32.mxu0 0.0
    %435 = vmatmul.mubr.f32.gmra.mrb[0].mxu0 %v366
    %v436 = vpop.f32.mrb[0].mxu0
    %v437 = vadd.f32 0.0, %v436
    %v438 = vpop.f32.mrb[0].mxu0
    %439 = vdwg.mxu0
    %441 = vrot.lane.b32.xlu0 %v300, 96
    %v442 = vpop.permute.xlu0 %441
    %v443 = vsel %vm365, %v300, 0
    %v445 = vsel %vm365, %v442, 0
    %447 = vmatprep.subr.mxu0 0.0
    %448 = vmatpush1.xpose.msra.mxu0 %v445
    %449 = vmatprep.subr.mxu0 0.0
    %450 = vmatpush1.xpose.msra.mxu0 0.0
    %451 = vmatprep.subr.mxu0 0.0
    %452 = vmatpush1.xpose.msra.mxu0 0.0
    %453 = vmatprep.subr.mxu0 0.0
    %454 = vmatpush1.xpose.msra.mxu0 0.0
    %455 = vmatprep.subr.mxu0 0.0
    %456 = vmatpush1.xpose.msra.mxu0 0.0
    %457 = vmatprep.subr.mxu0 0.0
    %458 = vmatpush1.xpose.msra.mxu0 0.0
    %459 = vmatprep.subr.mxu0 0.0
    %460 = vmatpush1.xpose.msra.mxu0 0.0
    %461 = vmatprep.subr.mxu0 0.0
    %462 = vmatpush1.xpose.msra.mxu0 0.0
    %463 = vmatprep.subr.mxu0 0.0
    %464 = vmatpush1.xpose.msra.mxu0 0.0
    %465 = vmatprep.subr.mxu0 0.0
    %466 = vmatpush1.xpose.msra.mxu0 0.0
    %467 = vmatprep.subr.mxu0 0.0
    %468 = vmatpush1.xpose.msra.mxu0 0.0
    %469 = vmatprep.subr.mxu0 0.0
    %470 = vmatpush1.xpose.msra.mxu0 0.0
    %471 = vmatprep.subr.mxu0 0.0
    %472 = vmatpush1.xpose.msra.mxu0 0.0
    %473 = vmatprep.subr.mxu0 0.0
    %474 = vmatpush1.xpose.msra.mxu0 0.0
    %475 = vmatprep.subr.mxu0 0.0
    %476 = vmatpush1.xpose.msra.mxu0 0.0
    %477 = vmatprep.subr.mxu0 0.0
    %478 = vmatpush1.xpose.msra.mxu0 0.0
    %479 = vmatprep.subr.mxu0 0.0
    %480 = vmatpush1.xpose.msra.mxu0 0.0
    %481 = vmatprep.subr.mxu0 0.0
    %482 = vmatpush1.xpose.msra.mxu0 0.0
    %483 = vmatprep.subr.mxu0 0.0
    %484 = vmatpush1.xpose.msra.mxu0 0.0
    %485 = vmatprep.subr.mxu0 0.0
    %486 = vmatpush1.xpose.msra.mxu0 0.0
    %487 = vmatprep.subr.mxu0 0.0
    %488 = vmatpush1.xpose.msra.mxu0 0.0
    %489 = vmatprep.subr.mxu0 0.0
    %490 = vmatpush1.xpose.msra.mxu0 0.0
    %491 = vmatprep.subr.mxu0 0.0
    %492 = vmatpush1.xpose.msra.mxu0 0.0
    %493 = vmatprep.subr.mxu0 0.0
    %494 = vmatpush1.xpose.msra.mxu0 0.0
    %495 = vmatprep.subr.mxu0 0.0
    %496 = vmatpush1.xpose.msra.mxu0 0.0
    %497 = vmatprep.subr.mxu0 0.0
    %498 = vmatpush1.xpose.msra.mxu0 0.0
    %499 = vmatprep.subr.mxu0 0.0
    %500 = vmatpush1.xpose.msra.mxu0 0.0
    %501 = vmatprep.subr.mxu0 0.0
    %502 = vmatpush1.xpose.msra.mxu0 0.0
    %503 = vmatprep.subr.mxu0 0.0
    %504 = vmatpush1.xpose.msra.mxu0 0.0
    %505 = vmatprep.subr.mxu0 0.0
    %506 = vmatpush1.xpose.msra.mxu0 0.0
    %507 = vmatprep.subr.mxu0 0.0
    %508 = vmatpush1.xpose.msra.mxu0 0.0
    %509 = vmatprep.subr.mxu0 0.0
    %510 = vmatpush1.xpose.msra.mxu0 0.0
    %511 = vmatprep.mubr.f32.mxu0 0.0
    %512 = vmatmul.mubr.f32.gmra.mrb[0].mxu0 %v443
    %v513 = vpop.f32.mrb[0].mxu0
    %v514 = vadd.f32 0.0, %v513
    %v515 = vpop.f32.mrb[0].mxu0
    %516 = vdwg.mxu0
    %518 = vrot.lane.b32.xlu0 %v305, 96
    %v519 = vpop.permute.xlu0 %518
    %v520 = vsel %vm365, %v305, 0
    %v522 = vsel %vm365, %v519, 0
    %524 = vmatprep.subr.mxu0 0.0
    %525 = vmatpush1.xpose.msra.mxu0 %v522
    %526 = vmatprep.subr.mxu0 0.0
    %527 = vmatpush1.xpose.msra.mxu0 0.0
    %528 = vmatprep.subr.mxu0 0.0
    %529 = vmatpush1.xpose.msra.mxu0 0.0
    %530 = vmatprep.subr.mxu0 0.0
    %531 = vmatpush1.xpose.msra.mxu0 0.0
    %532 = vmatprep.subr.mxu0 0.0
    %533 = vmatpush1.xpose.msra.mxu0 0.0
    %534 = vmatprep.subr.mxu0 0.0
    %535 = vmatpush1.xpose.msra.mxu0 0.0
    %536 = vmatprep.subr.mxu0 0.0
    %537 = vmatpush1.xpose.msra.mxu0 0.0
    %538 = vmatprep.subr.mxu0 0.0
    %539 = vmatpush1.xpose.msra.mxu0 0.0
    %540 = vmatprep.subr.mxu0 0.0
    %541 = vmatpush1.xpose.msra.mxu0 0.0
    %542 = vmatprep.subr.mxu0 0.0
    %543 = vmatpush1.xpose.msra.mxu0 0.0
    %544 = vmatprep.subr.mxu0 0.0
    %545 = vmatpush1.xpose.msra.mxu0 0.0
    %546 = vmatprep.subr.mxu0 0.0
    %547 = vmatpush1.xpose.msra.mxu0 0.0
    %548 = vmatprep.subr.mxu0 0.0
    %549 = vmatpush1.xpose.msra.mxu0 0.0
    %550 = vmatprep.subr.mxu0 0.0
    %551 = vmatpush1.xpose.msra.mxu0 0.0
    %552 = vmatprep.subr.mxu0 0.0
    %553 = vmatpush1.xpose.msra.mxu0 0.0
    %554 = vmatprep.subr.mxu0 0.0
    %555 = vmatpush1.xpose.msra.mxu0 0.0
    %556 = vmatprep.subr.mxu0 0.0
    %557 = vmatpush1.xpose.msra.mxu0 0.0
    %558 = vmatprep.subr.mxu0 0.0
    %559 = vmatpush1.xpose.msra.mxu0 0.0
    %560 = vmatprep.subr.mxu0 0.0
    %561 = vmatpush1.xpose.msra.mxu0 0.0
    %562 = vmatprep.subr.mxu0 0.0
    %563 = vmatpush1.xpose.msra.mxu0 0.0
    %564 = vmatprep.subr.mxu0 0.0
    %565 = vmatpush1.xpose.msra.mxu0 0.0
    %566 = vmatprep.subr.mxu0 0.0
    %567 = vmatpush1.xpose.msra.mxu0 0.0
    %568 = vmatprep.subr.mxu0 0.0
    %569 = vmatpush1.xpose.msra.mxu0 0.0
    %570 = vmatprep.subr.mxu0 0.0
    %571 = vmatpush1.xpose.msra.mxu0 0.0
    %572 = vmatprep.subr.mxu0 0.0
    %573 = vmatpush1.xpose.msra.mxu0 0.0
    %574 = vmatprep.subr.mxu0 0.0
    %575 = vmatpush1.xpose.msra.mxu0 0.0
    %576 = vmatprep.subr.mxu0 0.0
    %577 = vmatpush1.xpose.msra.mxu0 0.0
    %578 = vmatprep.subr.mxu0 0.0
    %579 = vmatpush1.xpose.msra.mxu0 0.0
    %580 = vmatprep.subr.mxu0 0.0
    %581 = vmatpush1.xpose.msra.mxu0 0.0
    %582 = vmatprep.subr.mxu0 0.0
    %583 = vmatpush1.xpose.msra.mxu0 0.0
    %584 = vmatprep.subr.mxu0 0.0
    %585 = vmatpush1.xpose.msra.mxu0 0.0
    %586 = vmatprep.subr.mxu0 0.0
    %587 = vmatpush1.xpose.msra.mxu0 0.0
    %588 = vmatprep.mubr.f32.mxu0 0.0
    %589 = vmatmul.mubr.f32.gmra.mrb[0].mxu0 %v520
    %v590 = vpop.f32.mrb[0].mxu0
    %v591 = vadd.f32 0.0, %v590
    %v592 = vpop.f32.mrb[0].mxu0
    %593 = vdwg.mxu0
    %595 = vrot.lane.b32.xlu0 %v310, 96
    %v596 = vpop.permute.xlu0 %595
    %v597 = vsel %vm365, %v310, 0
    %v599 = vsel %vm365, %v596, 0
    %601 = vmatprep.subr.mxu0 0.0
    %602 = vmatpush1.xpose.msra.mxu0 %v599
    %603 = vmatprep.subr.mxu0 0.0
    %604 = vmatpush1.xpose.msra.mxu0 0.0
    %605 = vmatprep.subr.mxu0 0.0
    %606 = vmatpush1.xpose.msra.mxu0 0.0
    %607 = vmatprep.subr.mxu0 0.0
    %608 = vmatpush1.xpose.msra.mxu0 0.0
    %609 = vmatprep.subr.mxu0 0.0
    %610 = vmatpush1.xpose.msra.mxu0 0.0
    %611 = vmatprep.subr.mxu0 0.0
    %612 = vmatpush1.xpose.msra.mxu0 0.0
    %613 = vmatprep.subr.mxu0 0.0
    %614 = vmatpush1.xpose.msra.mxu0 0.0
    %615 = vmatprep.subr.mxu0 0.0
    %616 = vmatpush1.xpose.msra.mxu0 0.0
    %617 = vmatprep.subr.mxu0 0.0
    %618 = vmatpush1.xpose.msra.mxu0 0.0
    %619 = vmatprep.subr.mxu0 0.0
    %620 = vmatpush1.xpose.msra.mxu0 0.0
    %621 = vmatprep.subr.mxu0 0.0
    %622 = vmatpush1.xpose.msra.mxu0 0.0
    %623 = vmatprep.subr.mxu0 0.0
    %624 = vmatpush1.xpose.msra.mxu0 0.0
    %625 = vmatprep.subr.mxu0 0.0
    %626 = vmatpush1.xpose.msra.mxu0 0.0
    %627 = vmatprep.subr.mxu0 0.0
    %628 = vmatpush1.xpose.msra.mxu0 0.0
    %629 = vmatprep.subr.mxu0 0.0
    %630 = vmatpush1.xpose.msra.mxu0 0.0
    %631 = vmatprep.subr.mxu0 0.0
    %632 = vmatpush1.xpose.msra.mxu0 0.0
    %633 = vmatprep.subr.mxu0 0.0
    %634 = vmatpush1.xpose.msra.mxu0 0.0
    %635 = vmatprep.subr.mxu0 0.0
    %636 = vmatpush1.xpose.msra.mxu0 0.0
    %637 = vmatprep.subr.mxu0 0.0
    %638 = vmatpush1.xpose.msra.mxu0 0.0
    %639 = vmatprep.subr.mxu0 0.0
    %640 = vmatpush1.xpose.msra.mxu0 0.0
    %641 = vmatprep.subr.mxu0 0.0
    %642 = vmatpush1.xpose.msra.mxu0 0.0
    %643 = vmatprep.subr.mxu0 0.0
    %644 = vmatpush1.xpose.msra.mxu0 0.0
    %645 = vmatprep.subr.mxu0 0.0
    %646 = vmatpush1.xpose.msra.mxu0 0.0
    %647 = vmatprep.subr.mxu0 0.0
    %648 = vmatpush1.xpose.msra.mxu0 0.0
    %649 = vmatprep.subr.mxu0 0.0
    %650 = vmatpush1.xpose.msra.mxu0 0.0
    %651 = vmatprep.subr.mxu0 0.0
    %652 = vmatpush1.xpose.msra.mxu0 0.0
    %653 = vmatprep.subr.mxu0 0.0
    %654 = vmatpush1.xpose.msra.mxu0 0.0
    %655 = vmatprep.subr.mxu0 0.0
    %656 = vmatpush1.xpose.msra.mxu0 0.0
    %657 = vmatprep.subr.mxu0 0.0
    %658 = vmatpush1.xpose.msra.mxu0 0.0
    %659 = vmatprep.subr.mxu0 0.0
    %660 = vmatpush1.xpose.msra.mxu0 0.0
    %661 = vmatprep.subr.mxu0 0.0
    %662 = vmatpush1.xpose.msra.mxu0 0.0
    %663 = vmatprep.subr.mxu0 0.0
    %664 = vmatpush1.xpose.msra.mxu0 0.0
    %665 = vmatprep.mubr.f32.mxu0 0.0
    %666 = vmatmul.mubr.f32.gmra.mrb[0].mxu0 %v597
    %v667 = vpop.f32.mrb[0].mxu0
    %v668 = vadd.f32 0.0, %v667
    %v669 = vpop.f32.mrb[0].mxu0
    %670 = vdwg.mxu0
    %672 = vrot.lane.b32.xlu0 %v315, 96
    %v673 = vpop.permute.xlu0 %672
    %v674 = vsel %vm365, %v315, 0
    %v676 = vsel %vm365, %v673, 0
    %678 = vmatprep.subr.mxu0 0.0
    %679 = vmatpush1.xpose.msra.mxu0 %v676
    %680 = vmatprep.subr.mxu0 0.0
    %681 = vmatpush1.xpose.msra.mxu0 0.0
    %682 = vmatprep.subr.mxu0 0.0
    %683 = vmatpush1.xpose.msra.mxu0 0.0
    %684 = vmatprep.subr.mxu0 0.0
    %685 = vmatpush1.xpose.msra.mxu0 0.0
    %686 = vmatprep.subr.mxu0 0.0
    %687 = vmatpush1.xpose.msra.mxu0 0.0
    %688 = vmatprep.subr.mxu0 0.0
    %689 = vmatpush1.xpose.msra.mxu0 0.0
    %690 = vmatprep.subr.mxu0 0.0
    %691 = vmatpush1.xpose.msra.mxu0 0.0
    %692 = vmatprep.subr.mxu0 0.0
    %693 = vmatpush1.xpose.msra.mxu0 0.0
    %694 = vmatprep.subr.mxu0 0.0
    %695 = vmatpush1.xpose.msra.mxu0 0.0
    %696 = vmatprep.subr.mxu0 0.0
    %697 = vmatpush1.xpose.msra.mxu0 0.0
    %698 = vmatprep.subr.mxu0 0.0
    %699 = vmatpush1.xpose.msra.mxu0 0.0
    %700 = vmatprep.subr.mxu0 0.0
    %701 = vmatpush1.xpose.msra.mxu0 0.0
    %702 = vmatprep.subr.mxu0 0.0
    %703 = vmatpush1.xpose.msra.mxu0 0.0
    %704 = vmatprep.subr.mxu0 0.0
    %705 = vmatpush1.xpose.msra.mxu0 0.0
    %706 = vmatprep.subr.mxu0 0.0
    %707 = vmatpush1.xpose.msra.mxu0 0.0
    %708 = vmatprep.subr.mxu0 0.0
    %709 = vmatpush1.xpose.msra.mxu0 0.0
    %710 = vmatprep.subr.mxu0 0.0
    %711 = vmatpush1.xpose.msra.mxu0 0.0
    %712 = vmatprep.subr.mxu0 0.0
    %713 = vmatpush1.xpose.msra.mxu0 0.0
    %714 = vmatprep.subr.mxu0 0.0
    %715 = vmatpush1.xpose.msra.mxu0 0.0
    %716 = vmatprep.subr.mxu0 0.0
    %717 = vmatpush1.xpose.msra.mxu0 0.0
    %718 = vmatprep.subr.mxu0 0.0
    %719 = vmatpush1.xpose.msra.mxu0 0.0
    %720 = vmatprep.subr.mxu0 0.0
    %721 = vmatpush1.xpose.msra.mxu0 0.0
    %722 = vmatprep.subr.mxu0 0.0
    %723 = vmatpush1.xpose.msra.mxu0 0.0
    %724 = vmatprep.subr.mxu0 0.0
    %725 = vmatpush1.xpose.msra.mxu0 0.0
    %726 = vmatprep.subr.mxu0 0.0
    %727 = vmatpush1.xpose.msra.mxu0 0.0
    %728 = vmatprep.subr.mxu0 0.0
    %729 = vmatpush1.xpose.msra.mxu0 0.0
    %730 = vmatprep.subr.mxu0 0.0
    %731 = vmatpush1.xpose.msra.mxu0 0.0
    %732 = vmatprep.subr.mxu0 0.0
    %733 = vmatpush1.xpose.msra.mxu0 0.0
    %734 = vmatprep.subr.mxu0 0.0
    %735 = vmatpush1.xpose.msra.mxu0 0.0
    %736 = vmatprep.subr.mxu0 0.0
    %737 = vmatpush1.xpose.msra.mxu0 0.0
    %738 = vmatprep.subr.mxu0 0.0
    %739 = vmatpush1.xpose.msra.mxu0 0.0
    %740 = vmatprep.subr.mxu0 0.0
    %741 = vmatpush1.xpose.msra.mxu0 0.0
    %742 = vmatprep.mubr.f32.mxu0 0.0
    %743 = vmatmul.mubr.f32.gmra.mrb[0].mxu0 %v674
    %v744 = vpop.f32.mrb[0].mxu0
    %v745 = vadd.f32 0.0, %v744
    %v746 = vpop.f32.mrb[0].mxu0
    %747 = vdwg.mxu0
    %749 = vrot.lane.b32.xlu0 %v320, 96
    %v750 = vpop.permute.xlu0 %749
    %v751 = vsel %vm365, %v320, 0
    %v753 = vsel %vm365, %v750, 0
    %755 = vmatprep.subr.mxu0 0.0
    %756 = vmatpush1.xpose.msra.mxu0 %v753
    %757 = vmatprep.subr.mxu0 0.0
    %758 = vmatpush1.xpose.msra.mxu0 0.0
    %759 = vmatprep.subr.mxu0 0.0
    %760 = vmatpush1.xpose.msra.mxu0 0.0
    %761 = vmatprep.subr.mxu0 0.0
    %762 = vmatpush1.xpose.msra.mxu0 0.0
    %763 = vmatprep.subr.mxu0 0.0
    %764 = vmatpush1.xpose.msra.mxu0 0.0
    %765 = vmatprep.subr.mxu0 0.0
    %766 = vmatpush1.xpose.msra.mxu0 0.0
    %767 = vmatprep.subr.mxu0 0.0
    %768 = vmatpush1.xpose.msra.mxu0 0.0
    %769 = vmatprep.subr.mxu0 0.0
    %770 = vmatpush1.xpose.msra.mxu0 0.0
    %771 = vmatprep.subr.mxu0 0.0
    %772 = vmatpush1.xpose.msra.mxu0 0.0
    %773 = vmatprep.subr.mxu0 0.0
    %774 = vmatpush1.xpose.msra.mxu0 0.0
    %775 = vmatprep.subr.mxu0 0.0
    %776 = vmatpush1.xpose.msra.mxu0 0.0
    %777 = vmatprep.subr.mxu0 0.0
    %778 = vmatpush1.xpose.msra.mxu0 0.0
    %779 = vmatprep.subr.mxu0 0.0
    %780 = vmatpush1.xpose.msra.mxu0 0.0
    %781 = vmatprep.subr.mxu0 0.0
    %782 = vmatpush1.xpose.msra.mxu0 0.0
    %783 = vmatprep.subr.mxu0 0.0
    %784 = vmatpush1.xpose.msra.mxu0 0.0
    %785 = vmatprep.subr.mxu0 0.0
    %786 = vmatpush1.xpose.msra.mxu0 0.0
    %787 = vmatprep.subr.mxu0 0.0
    %788 = vmatpush1.xpose.msra.mxu0 0.0
    %789 = vmatprep.subr.mxu0 0.0
    %790 = vmatpush1.xpose.msra.mxu0 0.0
    %791 = vmatprep.subr.mxu0 0.0
    %792 = vmatpush1.xpose.msra.mxu0 0.0
    %793 = vmatprep.subr.mxu0 0.0
    %794 = vmatpush1.xpose.msra.mxu0 0.0
    %795 = vmatprep.subr.mxu0 0.0
    %796 = vmatpush1.xpose.msra.mxu0 0.0
    %797 = vmatprep.subr.mxu0 0.0
    %798 = vmatpush1.xpose.msra.mxu0 0.0
    %799 = vmatprep.subr.mxu0 0.0
    %800 = vmatpush1.xpose.msra.mxu0 0.0
    %801 = vmatprep.subr.mxu0 0.0
    %802 = vmatpush1.xpose.msra.mxu0 0.0
    %803 = vmatprep.subr.mxu0 0.0
    %804 = vmatpush1.xpose.msra.mxu0 0.0
    %805 = vmatprep.subr.mxu0 0.0
    %806 = vmatpush1.xpose.msra.mxu0 0.0
    %807 = vmatprep.subr.mxu0 0.0
    %808 = vmatpush1.xpose.msra.mxu0 0.0
    %809 = vmatprep.subr.mxu0 0.0
    %810 = vmatpush1.xpose.msra.mxu0 0.0
    %811 = vmatprep.subr.mxu0 0.0
    %812 = vmatpush1.xpose.msra.mxu0 0.0
    %813 = vmatprep.subr.mxu0 0.0
    %814 = vmatpush1.xpose.msra.mxu0 0.0
    %815 = vmatprep.subr.mxu0 0.0
    %816 = vmatpush1.xpose.msra.mxu0 0.0
    %817 = vmatprep.subr.mxu0 0.0
    %818 = vmatpush1.xpose.msra.mxu0 0.0
    %819 = vmatprep.mubr.f32.mxu0 0.0
    %820 = vmatmul.mubr.f32.gmra.mrb[0].mxu0 %v751
    %v821 = vpop.f32.mrb[0].mxu0
    %v822 = vadd.f32 0.0, %v821
    %v823 = vpop.f32.mrb[0].mxu0
    %824 = vdwg.mxu0
    %826 = vrot.lane.b32.xlu0 %v325, 96
    %v827 = vpop.permute.xlu0 %826
    %v828 = vsel %vm365, %v325, 0
    %v830 = vsel %vm365, %v827, 0
    %832 = vmatprep.subr.mxu0 0.0
    %833 = vmatpush1.xpose.msra.mxu0 %v830
    %834 = vmatprep.subr.mxu0 0.0
    %835 = vmatpush1.xpose.msra.mxu0 0.0
    %836 = vmatprep.subr.mxu0 0.0
    %837 = vmatpush1.xpose.msra.mxu0 0.0
    %838 = vmatprep.subr.mxu0 0.0
    %839 = vmatpush1.xpose.msra.mxu0 0.0
    %840 = vmatprep.subr.mxu0 0.0
    %841 = vmatpush1.xpose.msra.mxu0 0.0
    %842 = vmatprep.subr.mxu0 0.0
    %843 = vmatpush1.xpose.msra.mxu0 0.0
    %844 = vmatprep.subr.mxu0 0.0
    %845 = vmatpush1.xpose.msra.mxu0 0.0
    %846 = vmatprep.subr.mxu0 0.0
    %847 = vmatpush1.xpose.msra.mxu0 0.0
    %848 = vmatprep.subr.mxu0 0.0
    %849 = vmatpush1.xpose.msra.mxu0 0.0
    %850 = vmatprep.subr.mxu0 0.0
    %851 = vmatpush1.xpose.msra.mxu0 0.0
    %852 = vmatprep.subr.mxu0 0.0
    %853 = vmatpush1.xpose.msra.mxu0 0.0
    %854 = vmatprep.subr.mxu0 0.0
    %855 = vmatpush1.xpose.msra.mxu0 0.0
    %856 = vmatprep.subr.mxu0 0.0
    %857 = vmatpush1.xpose.msra.mxu0 0.0
    %858 = vmatprep.subr.mxu0 0.0
    %859 = vmatpush1.xpose.msra.mxu0 0.0
    %860 = vmatprep.subr.mxu0 0.0
    %861 = vmatpush1.xpose.msra.mxu0 0.0
    %862 = vmatprep.subr.mxu0 0.0
    %863 = vmatpush1.xpose.msra.mxu0 0.0
    %864 = vmatprep.subr.mxu0 0.0
    %865 = vmatpush1.xpose.msra.mxu0 0.0
    %866 = vmatprep.subr.mxu0 0.0
    %867 = vmatpush1.xpose.msra.mxu0 0.0
    %868 = vmatprep.subr.mxu0 0.0
    %869 = vmatpush1.xpose.msra.mxu0 0.0
    %870 = vmatprep.subr.mxu0 0.0
    %871 = vmatpush1.xpose.msra.mxu0 0.0
    %872 = vmatprep.subr.mxu0 0.0
    %873 = vmatpush1.xpose.msra.mxu0 0.0
    %874 = vmatprep.subr.mxu0 0.0
    %875 = vmatpush1.xpose.msra.mxu0 0.0
    %876 = vmatprep.subr.mxu0 0.0
    %877 = vmatpush1.xpose.msra.mxu0 0.0
    %878 = vmatprep.subr.mxu0 0.0
    %879 = vmatpush1.xpose.msra.mxu0 0.0
    %880 = vmatprep.subr.mxu0 0.0
    %881 = vmatpush1.xpose.msra.mxu0 0.0
    %882 = vmatprep.subr.mxu0 0.0
    %883 = vmatpush1.xpose.msra.mxu0 0.0
    %884 = vmatprep.subr.mxu0 0.0
    %885 = vmatpush1.xpose.msra.mxu0 0.0
    %886 = vmatprep.subr.mxu0 0.0
    %887 = vmatpush1.xpose.msra.mxu0 0.0
    %888 = vmatprep.subr.mxu0 0.0
    %889 = vmatpush1.xpose.msra.mxu0 0.0
    %890 = vmatprep.subr.mxu0 0.0
    %891 = vmatpush1.xpose.msra.mxu0 0.0
    %892 = vmatprep.subr.mxu0 0.0
    %893 = vmatpush1.xpose.msra.mxu0 0.0
    %894 = vmatprep.subr.mxu0 0.0
    %895 = vmatpush1.xpose.msra.mxu0 0.0
    %896 = vmatprep.mubr.f32.mxu0 0.0
    %897 = vmatmul.mubr.f32.gmra.mrb[0].mxu0 %v828
    %v898 = vpop.f32.mrb[0].mxu0
    %v899 = vadd.f32 0.0, %v898
    %v900 = vpop.f32.mrb[0].mxu0
    %901 = vdwg.mxu0
    %903 = vrot.lane.b32.xlu0 %v330, 96
    %v904 = vpop.permute.xlu0 %903
    %v905 = vsel %vm365, %v330, 0
    %v907 = vsel %vm365, %v904, 0
    %909 = vmatprep.subr.mxu0 0.0
    %910 = vmatpush1.xpose.msra.mxu0 %v907
    %911 = vmatprep.subr.mxu0 0.0
    %912 = vmatpush1.xpose.msra.mxu0 0.0
    %913 = vmatprep.subr.mxu0 0.0
    %914 = vmatpush1.xpose.msra.mxu0 0.0
    %915 = vmatprep.subr.mxu0 0.0
    %916 = vmatpush1.xpose.msra.mxu0 0.0
    %917 = vmatprep.subr.mxu0 0.0
    %918 = vmatpush1.xpose.msra.mxu0 0.0
    %919 = vmatprep.subr.mxu0 0.0
    %920 = vmatpush1.xpose.msra.mxu0 0.0
    %921 = vmatprep.subr.mxu0 0.0
    %922 = vmatpush1.xpose.msra.mxu0 0.0
    %923 = vmatprep.subr.mxu0 0.0
    %924 = vmatpush1.xpose.msra.mxu0 0.0
    %925 = vmatprep.subr.mxu0 0.0
    %926 = vmatpush1.xpose.msra.mxu0 0.0
    %927 = vmatprep.subr.mxu0 0.0
    %928 = vmatpush1.xpose.msra.mxu0 0.0
    %929 = vmatprep.subr.mxu0 0.0
    %930 = vmatpush1.xpose.msra.mxu0 0.0
    %931 = vmatprep.subr.mxu0 0.0
    %932 = vmatpush1.xpose.msra.mxu0 0.0
    %933 = vmatprep.subr.mxu0 0.0
    %934 = vmatpush1.xpose.msra.mxu0 0.0
    %935 = vmatprep.subr.mxu0 0.0
    %936 = vmatpush1.xpose.msra.mxu0 0.0
    %937 = vmatprep.subr.mxu0 0.0
    %938 = vmatpush1.xpose.msra.mxu0 0.0
    %939 = vmatprep.subr.mxu0 0.0
    %940 = vmatpush1.xpose.msra.mxu0 0.0
    %941 = vmatprep.subr.mxu0 0.0
    %942 = vmatpush1.xpose.msra.mxu0 0.0
    %943 = vmatprep.subr.mxu0 0.0
    %944 = vmatpush1.xpose.msra.mxu0 0.0
    %945 = vmatprep.subr.mxu0 0.0
    %946 = vmatpush1.xpose.msra.mxu0 0.0
    %947 = vmatprep.subr.mxu0 0.0
    %948 = vmatpush1.xpose.msra.mxu0 0.0
    %949 = vmatprep.subr.mxu0 0.0
    %950 = vmatpush1.xpose.msra.mxu0 0.0
    %951 = vmatprep.subr.mxu0 0.0
    %952 = vmatpush1.xpose.msra.mxu0 0.0
    %953 = vmatprep.subr.mxu0 0.0
    %954 = vmatpush1.xpose.msra.mxu0 0.0
    %955 = vmatprep.subr.mxu0 0.0
    %956 = vmatpush1.xpose.msra.mxu0 0.0
    %957 = vmatprep.subr.mxu0 0.0
    %958 = vmatpush1.xpose.msra.mxu0 0.0
    %959 = vmatprep.subr.mxu0 0.0
    %960 = vmatpush1.xpose.msra.mxu0 0.0
    %961 = vmatprep.subr.mxu0 0.0
    %962 = vmatpush1.xpose.msra.mxu0 0.0
    %963 = vmatprep.subr.mxu0 0.0
    %964 = vmatpush1.xpose.msra.mxu0 0.0
    %965 = vmatprep.subr.mxu0 0.0
    %966 = vmatpush1.xpose.msra.mxu0 0.0
    %967 = vmatprep.subr.mxu0 0.0
    %968 = vmatpush1.xpose.msra.mxu0 0.0
    %969 = vmatprep.subr.mxu0 0.0
    %970 = vmatpush1.xpose.msra.mxu0 0.0
    %971 = vmatprep.subr.mxu0 0.0
    %972 = vmatpush1.xpose.msra.mxu0 0.0
    %973 = vmatprep.mubr.f32.mxu0 0.0
    %974 = vmatmul.mubr.f32.gmra.mrb[0].mxu0 %v905
    %v975 = vpop.f32.mrb[0].mxu0
    %v976 = vadd.f32 0.0, %v975
    %v977 = vpop.f32.mrb[0].mxu0
    %978 = vdwg.mxu0
    %v979 = vmul.f32 %v437, 0.25
    %v980 = vmul.f32 %v514, 0.25
    %v981 = vmul.f32 %v591, 0.25
    %v982 = vmul.f32 %v668, 0.25
    %v983 = vmul.f32 %v745, 0.25
    %v984 = vmul.f32 %v822, 0.25
    %v985 = vmul.f32 %v899, 0.25
    %v986 = vmul.f32 %v976, 0.25
    %v987 = vadd.f32 %v979, %v349
    %v988 = vadd.f32 %v980, %v350
    %v989 = vadd.f32 %v981, %v351
    %v990 = vadd.f32 %v982, %v352
    %v991 = vadd.f32 %v983, %v353
    %v992 = vadd.f32 %v984, %v354
    %v993 = vadd.f32 %v985, %v355
    %v994 = vadd.f32 %v986, %v356
    %vm995 = vcmask 57344
    %v996 = vsel %vm995, %v987, -inf
    %997 = vmax.xlane.f32.xlu0 %v996
    %v998 = vpop.xlane.xlu0 %997
    %v999 = vsel %vm995, %v988, -inf
    %1000 = vmax.xlane.f32.xlu0 %v999
    %v1001 = vpop.xlane.xlu0 %1000
    %v1002 = vsel %vm995, %v989, -inf
    %1003 = vmax.xlane.f32.xlu0 %v1002
    %v1004 = vpop.xlane.xlu0 %1003
    %v1005 = vsel %vm995, %v990, -inf
    %1006 = vmax.xlane.f32.xlu0 %v1005
    %v1007 = vpop.xlane.xlu0 %1006
    %v1008 = vsel %vm995, %v991, -inf
    %1009 = vmax.xlane.f32.xlu0 %v1008
    %v1010 = vpop.xlane.xlu0 %1009
    %v1011 = vsel %vm995, %v992, -inf
    %1012 = vmax.xlane.f32.xlu0 %v1011
    %v1013 = vpop.xlane.xlu0 %1012
    %v1014 = vsel %vm995, %v993, -inf
    %1015 = vmax.xlane.f32.xlu0 %v1014
    %v1016 = vpop.xlane.xlu0 %1015
    %v1017 = vsel %vm995, %v994, -inf
    %1018 = vmax.xlane.f32.xlu0 %v1017
    %v1019 = vpop.xlane.xlu0 %1018
    %v1020 = vsub.f32 %v987, %v998
    %v1021 = vsub.f32 %v988, %v1001
    %v1022 = vsub.f32 %v989, %v1004
    %v1023 = vsub.f32 %v990, %v1007
    %v1024 = vsub.f32 %v991, %v1010
    %v1025 = vsub.f32 %v992, %v1013
    %v1026 = vsub.f32 %v993, %v1016
    %v1027 = vsub.f32 %v994, %v1019
    %v1028 = vmul.f32 %v1020, 1.442695
    %v1029 = vpow.pop %v1028
    %v1030 = vmul.f32 %v1021, 1.442695
    %v1031 = vpow.pop %v1030
    %v1032 = vmul.f32 %v1022, 1.442695
    %v1033 = vpow.pop %v1032
    %v1034 = vmul.f32 %v1023, 1.442695
    %v1035 = vpow.pop %v1034
    %v1036 = vmul.f32 %v1024, 1.442695
    %v1037 = vpow.pop %v1036
    %v1038 = vmul.f32 %v1025, 1.442695
    %v1039 = vpow.pop %v1038
    %v1040 = vmul.f32 %v1026, 1.442695
    %v1041 = vpow.pop %v1040
    %v1042 = vmul.f32 %v1027, 1.442695
    %v1043 = vpow.pop %v1042
    %v1044 = vsel %vm995, %v1029, 0.0
    %1045 = vadd.xlane.f32.xlu0 %v1044
    %v1046 = vpop.xlane.xlu0 %1045
    %v1047 = vsel %vm995, %v1031, 0.0
    %1048 = vadd.xlane.f32.xlu0 %v1047
    %v1049 = vpop.xlane.xlu0 %1048
    %v1050 = vsel %vm995, %v1033, 0.0
    %1051 = vadd.xlane.f32.xlu0 %v1050
    %v1052 = vpop.xlane.xlu0 %1051
    %v1053 = vsel %vm995, %v1035, 0.0
    %1054 = vadd.xlane.f32.xlu0 %v1053
    %v1055 = vpop.xlane.xlu0 %1054
    %v1056 = vsel %vm995, %v1037, 0.0
    %1057 = vadd.xlane.f32.xlu0 %v1056
    %v1058 = vpop.xlane.xlu0 %1057
    %v1059 = vsel %vm995, %v1039, 0.0
    %1060 = vadd.xlane.f32.xlu0 %v1059
    %v1061 = vpop.xlane.xlu0 %1060
    %v1062 = vsel %vm995, %v1041, 0.0
    %1063 = vadd.xlane.f32.xlu0 %v1062
    %v1064 = vpop.xlane.xlu0 %1063
    %v1065 = vsel %vm995, %v1043, 0.0
    %1066 = vadd.xlane.f32.xlu0 %v1065
    %v1067 = vpop.xlane.xlu0 %1066
    %v1068 = vrcp.pop %v1046
    %v1069 = vrcp.pop %v1049
    %v1070 = vrcp.pop %v1052
    %v1071 = vrcp.pop %v1055
    %v1072 = vrcp.pop %v1058
    %v1073 = vrcp.pop %v1061
    %v1074 = vrcp.pop %v1064
    %v1075 = vrcp.pop %v1067
    %v1076 = vmul.f32 %v1029, %v1068
    %v1077 = vmul.f32 %v1031, %v1069
    %v1078 = vmul.f32 %v1033, %v1070
    %v1079 = vmul.f32 %v1035, %v1071
    %v1080 = vmul.f32 %v1037, %v1072
    %v1081 = vmul.f32 %v1039, %v1073
    %v1082 = vmul.f32 %v1041, %v1074
    %v1083 = vmul.f32 %v1043, %v1075
    %1084 = vrot.lane.b32.xlu0 %v295, 64
    %v1085 = vpop.permute.xlu0 %1084
    %vm1087 = vcmask 64512
    %v1089 = vsel %vm1087, %v1076, 0
    %1091 = vmatprep.subr.mxu0 0.0
    %1092 = vmatpush1.msra.mxu0 %v1085
    %1093 = vmatprep.subr.mxu0 0.0
    %1094 = vmatpush1.msra.mxu0 0.0
    %1095 = vmatprep.subr.mxu0 0.0
    %1096 = vmatpush1.msra.mxu0 0.0
    %1097 = vmatprep.subr.mxu0 0.0
    %1098 = vmatpush1.msra.mxu0 0.0
    %1099 = vmatprep.subr.mxu0 0.0
    %1100 = vmatpush1.msra.mxu0 0.0
    %1101 = vmatprep.subr.mxu0 0.0
    %1102 = vmatpush1.msra.mxu0 0.0
    %1103 = vmatprep.subr.mxu0 0.0
    %1104 = vmatpush1.msra.mxu0 0.0
    %1105 = vmatprep.subr.mxu0 0.0
    %1106 = vmatpush1.msra.mxu0 0.0
    %1107 = vmatprep.subr.mxu0 0.0
    %1108 = vmatpush1.msra.mxu0 0.0
    %1109 = vmatprep.subr.mxu0 0.0
    %1110 = vmatpush1.msra.mxu0 0.0
    %1111 = vmatprep.subr.mxu0 0.0
    %1112 = vmatpush1.msra.mxu0 0.0
    %1113 = vmatprep.subr.mxu0 0.0
    %1114 = vmatpush1.msra.mxu0 0.0
    %1115 = vmatprep.subr.mxu0 0.0
    %1116 = vmatpush1.msra.mxu0 0.0
    %1117 = vmatprep.subr.mxu0 0.0
    %1118 = vmatpush1.msra.mxu0 0.0
    %1119 = vmatprep.subr.mxu0 0.0
    %1120 = vmatpush1.msra.mxu0 0.0
    %1121 = vmatprep.subr.mxu0 0.0
    %1122 = vmatpush1.msra.mxu0 0.0
    %1123 = vmatprep.subr.mxu0 0.0
    %1124 = vmatpush1.msra.mxu0 0.0
    %1125 = vmatprep.subr.mxu0 0.0
    %1126 = vmatpush1.msra.mxu0 0.0
    %1127 = vmatprep.subr.mxu0 0.0
    %1128 = vmatpush1.msra.mxu0 0.0
    %1129 = vmatprep.subr.mxu0 0.0
    %1130 = vmatpush1.msra.mxu0 0.0
    %1131 = vmatprep.subr.mxu0 0.0
    %1132 = vmatpush1.msra.mxu0 0.0
    %1133 = vmatprep.subr.mxu0 0.0
    %1134 = vmatpush1.msra.mxu0 0.0
    %1135 = vmatprep.subr.mxu0 0.0
    %1136 = vmatpush1.msra.mxu0 0.0
    %1137 = vmatprep.subr.mxu0 0.0
    %1138 = vmatpush1.msra.mxu0 0.0
    %1139 = vmatprep.subr.mxu0 0.0
    %1140 = vmatpush1.msra.mxu0 0.0
    %1141 = vmatprep.subr.mxu0 0.0
    %1142 = vmatpush1.msra.mxu0 0.0
    %1143 = vmatprep.subr.mxu0 0.0
    %1144 = vmatpush1.msra.mxu0 0.0
    %1145 = vmatprep.subr.mxu0 0.0
    %1146 = vmatpush1.msra.mxu0 0.0
    %1147 = vmatprep.subr.mxu0 0.0
    %1148 = vmatpush1.msra.mxu0 0.0
    %1149 = vmatprep.subr.mxu0 0.0
    %1150 = vmatpush1.msra.mxu0 0.0
    %1151 = vmatprep.subr.mxu0 0.0
    %1152 = vmatpush1.msra.mxu0 0.0
    %1153 = vmatprep.subr.mxu0 0.0
    %1154 = vmatpush1.msra.mxu0 0.0
    %1155 = vmatprep.mubr.f32.mxu0 0.0
    %1156 = vmatmul.mubr.f32.gmra.mrb[0].mxu0 %v1089
    %v1157 = vpop.f32.mrb[0].mxu0
    %v1158 = vadd.f32 0.0, %v1157
    %v1159 = vpop.f32.mrb[0].mxu0
    %1160 = vdwg.mxu0
    %1161 = vrot.lane.b32.xlu0 %v300, 64
    %v1162 = vpop.permute.xlu0 %1161
    %v1165 = vsel %vm1087, %v1077, 0
    %1167 = vmatprep.subr.mxu0 0.0
    %1168 = vmatpush1.msra.mxu0 %v1162
    %1169 = vmatprep.subr.mxu0 0.0
    %1170 = vmatpush1.msra.mxu0 0.0
    %1171 = vmatprep.subr.mxu0 0.0
    %1172 = vmatpush1.msra.mxu0 0.0
    %1173 = vmatprep.subr.mxu0 0.0
    %1174 = vmatpush1.msra.mxu0 0.0
    %1175 = vmatprep.subr.mxu0 0.0
    %1176 = vmatpush1.msra.mxu0 0.0
    %1177 = vmatprep.subr.mxu0 0.0
    %1178 = vmatpush1.msra.mxu0 0.0
    %1179 = vmatprep.subr.mxu0 0.0
    %1180 = vmatpush1.msra.mxu0 0.0
    %1181 = vmatprep.subr.mxu0 0.0
    %1182 = vmatpush1.msra.mxu0 0.0
    %1183 = vmatprep.subr.mxu0 0.0
    %1184 = vmatpush1.msra.mxu0 0.0
    %1185 = vmatprep.subr.mxu0 0.0
    %1186 = vmatpush1.msra.mxu0 0.0
    %1187 = vmatprep.subr.mxu0 0.0
    %1188 = vmatpush1.msra.mxu0 0.0
    %1189 = vmatprep.subr.mxu0 0.0
    %1190 = vmatpush1.msra.mxu0 0.0
    %1191 = vmatprep.subr.mxu0 0.0
    %1192 = vmatpush1.msra.mxu0 0.0
    %1193 = vmatprep.subr.mxu0 0.0
    %1194 = vmatpush1.msra.mxu0 0.0
    %1195 = vmatprep.subr.mxu0 0.0
    %1196 = vmatpush1.msra.mxu0 0.0
    %1197 = vmatprep.subr.mxu0 0.0
    %1198 = vmatpush1.msra.mxu0 0.0
    %1199 = vmatprep.subr.mxu0 0.0
    %1200 = vmatpush1.msra.mxu0 0.0
    %1201 = vmatprep.subr.mxu0 0.0
    %1202 = vmatpush1.msra.mxu0 0.0
    %1203 = vmatprep.subr.mxu0 0.0
    %1204 = vmatpush1.msra.mxu0 0.0
    %1205 = vmatprep.subr.mxu0 0.0
    %1206 = vmatpush1.msra.mxu0 0.0
    %1207 = vmatprep.subr.mxu0 0.0
    %1208 = vmatpush1.msra.mxu0 0.0
    %1209 = vmatprep.subr.mxu0 0.0
    %1210 = vmatpush1.msra.mxu0 0.0
    %1211 = vmatprep.subr.mxu0 0.0
    %1212 = vmatpush1.msra.mxu0 0.0
    %1213 = vmatprep.subr.mxu0 0.0
    %1214 = vmatpush1.msra.mxu0 0.0
    %1215 = vmatprep.subr.mxu0 0.0
    %1216 = vmatpush1.msra.mxu0 0.0
    %1217 = vmatprep.subr.mxu0 0.0
    %1218 = vmatpush1.msra.mxu0 0.0
    %1219 = vmatprep.subr.mxu0 0.0
    %1220 = vmatpush1.msra.mxu0 0.0
    %1221 = vmatprep.subr.mxu0 0.0
    %1222 = vmatpush1.msra.mxu0 0.0
    %1223 = vmatprep.subr.mxu0 0.0
    %1224 = vmatpush1.msra.mxu0 0.0
    %1225 = vmatprep.subr.mxu0 0.0
    %1226 = vmatpush1.msra.mxu0 0.0
    %1227 = vmatprep.subr.mxu0 0.0
    %1228 = vmatpush1.msra.mxu0 0.0
    %1229 = vmatprep.subr.mxu0 0.0
    %1230 = vmatpush1.msra.mxu0 0.0
    %1231 = vmatprep.mubr.f32.mxu0 0.0
    %1232 = vmatmul.mubr.f32.gmra.mrb[0].mxu0 %v1165
    %v1233 = vpop.f32.mrb[0].mxu0
    %v1234 = vadd.f32 0.0, %v1233
    %v1235 = vpop.f32.mrb[0].mxu0
    %1236 = vdwg.mxu0
    %1237 = vrot.lane.b32.xlu0 %v305, 64
    %v1238 = vpop.permute.xlu0 %1237
    %v1241 = vsel %vm1087, %v1078, 0
    %1243 = vmatprep.subr.mxu0 0.0
    %1244 = vmatpush1.msra.mxu0 %v1238
    %1245 = vmatprep.subr.mxu0 0.0
    %1246 = vmatpush1.msra.mxu0 0.0
    %1247 = vmatprep.subr.mxu0 0.0
    %1248 = vmatpush1.msra.mxu0 0.0
    %1249 = vmatprep.subr.mxu0 0.0
    %1250 = vmatpush1.msra.mxu0 0.0
    %1251 = vmatprep.subr.mxu0 0.0
    %1252 = vmatpush1.msra.mxu0 0.0
    %1253 = vmatprep.subr.mxu0 0.0
    %1254 = vmatpush1.msra.mxu0 0.0
    %1255 = vmatprep.subr.mxu0 0.0
    %1256 = vmatpush1.msra.mxu0 0.0
    %1257 = vmatprep.subr.mxu0 0.0
    %1258 = vmatpush1.msra.mxu0 0.0
    %1259 = vmatprep.subr.mxu0 0.0
    %1260 = vmatpush1.msra.mxu0 0.0
    %1261 = vmatprep.subr.mxu0 0.0
    %1262 = vmatpush1.msra.mxu0 0.0
    %1263 = vmatprep.subr.mxu0 0.0
    %1264 = vmatpush1.msra.mxu0 0.0
    %1265 = vmatprep.subr.mxu0 0.0
    %1266 = vmatpush1.msra.mxu0 0.0
    %1267 = vmatprep.subr.mxu0 0.0
    %1268 = vmatpush1.msra.mxu0 0.0
    %1269 = vmatprep.subr.mxu0 0.0
    %1270 = vmatpush1.msra.mxu0 0.0
    %1271 = vmatprep.subr.mxu0 0.0
    %1272 = vmatpush1.msra.mxu0 0.0
    %1273 = vmatprep.subr.mxu0 0.0
    %1274 = vmatpush1.msra.mxu0 0.0
    %1275 = vmatprep.subr.mxu0 0.0
    %1276 = vmatpush1.msra.mxu0 0.0
    %1277 = vmatprep.subr.mxu0 0.0
    %1278 = vmatpush1.msra.mxu0 0.0
    %1279 = vmatprep.subr.mxu0 0.0
    %1280 = vmatpush1.msra.mxu0 0.0
    %1281 = vmatprep.subr.mxu0 0.0
    %1282 = vmatpush1.msra.mxu0 0.0
    %1283 = vmatprep.subr.mxu0 0.0
    %1284 = vmatpush1.msra.mxu0 0.0
    %1285 = vmatprep.subr.mxu0 0.0
    %1286 = vmatpush1.msra.mxu0 0.0
    %1287 = vmatprep.subr.mxu0 0.0
    %1288 = vmatpush1.msra.mxu0 0.0
    %1289 = vmatprep.subr.mxu0 0.0
    %1290 = vmatpush1.msra.mxu0 0.0
    %1291 = vmatprep.subr.mxu0 0.0
    %1292 = vmatpush1.msra.mxu0 0.0
    %1293 = vmatprep.subr.mxu0 0.0
    %1294 = vmatpush1.msra.mxu0 0.0
    %1295 = vmatprep.subr.mxu0 0.0
    %1296 = vmatpush1.msra.mxu0 0.0
    %1297 = vmatprep.subr.mxu0 0.0
    %1298 = vmatpush1.msra.mxu0 0.0
    %1299 = vmatprep.subr.mxu0 0.0
    %1300 = vmatpush1.msra.mxu0 0.0
    %1301 = vmatprep.subr.mxu0 0.0
    %1302 = vmatpush1.msra.mxu0 0.0
    %1303 = vmatprep.subr.mxu0 0.0
    %1304 = vmatpush1.msra.mxu0 0.0
    %1305 = vmatprep.subr.mxu0 0.0
    %1306 = vmatpush1.msra.mxu0 0.0
    %1307 = vmatprep.mubr.f32.mxu0 0.0
    %1308 = vmatmul.mubr.f32.gmra.mrb[0].mxu0 %v1241
    %v1309 = vpop.f32.mrb[0].mxu0
    %v1310 = vadd.f32 0.0, %v1309
    %v1311 = vpop.f32.mrb[0].mxu0
    %1312 = vdwg.mxu0
    %1313 = vrot.lane.b32.xlu0 %v310, 64
    %v1314 = vpop.permute.xlu0 %1313
    %v1317 = vsel %vm1087, %v1079, 0
    %1319 = vmatprep.subr.mxu0 0.0
    %1320 = vmatpush1.msra.mxu0 %v1314
    %1321 = vmatprep.subr.mxu0 0.0
    %1322 = vmatpush1.msra.mxu0 0.0
    %1323 = vmatprep.subr.mxu0 0.0
    %1324 = vmatpush1.msra.mxu0 0.0
    %1325 = vmatprep.subr.mxu0 0.0
    %1326 = vmatpush1.msra.mxu0 0.0
    %1327 = vmatprep.subr.mxu0 0.0
    %1328 = vmatpush1.msra.mxu0 0.0
    %1329 = vmatprep.subr.mxu0 0.0
    %1330 = vmatpush1.msra.mxu0 0.0
    %1331 = vmatprep.subr.mxu0 0.0
    %1332 = vmatpush1.msra.mxu0 0.0
    %1333 = vmatprep.subr.mxu0 0.0
    %1334 = vmatpush1.msra.mxu0 0.0
    %1335 = vmatprep.subr.mxu0 0.0
    %1336 = vmatpush1.msra.mxu0 0.0
    %1337 = vmatprep.subr.mxu0 0.0
    %1338 = vmatpush1.msra.mxu0 0.0
    %1339 = vmatprep.subr.mxu0 0.0
    %1340 = vmatpush1.msra.mxu0 0.0
    %1341 = vmatprep.subr.mxu0 0.0
    %1342 = vmatpush1.msra.mxu0 0.0
    %1343 = vmatprep.subr.mxu0 0.0
    %1344 = vmatpush1.msra.mxu0 0.0
    %1345 = vmatprep.subr.mxu0 0.0
    %1346 = vmatpush1.msra.mxu0 0.0
    %1347 = vmatprep.subr.mxu0 0.0
    %1348 = vmatpush1.msra.mxu0 0.0
    %1349 = vmatprep.subr.mxu0 0.0
    %1350 = vmatpush1.msra.mxu0 0.0
    %1351 = vmatprep.subr.mxu0 0.0
    %1352 = vmatpush1.msra.mxu0 0.0
    %1353 = vmatprep.subr.mxu0 0.0
    %1354 = vmatpush1.msra.mxu0 0.0
    %1355 = vmatprep.subr.mxu0 0.0
    %1356 = vmatpush1.msra.mxu0 0.0
    %1357 = vmatprep.subr.mxu0 0.0
    %1358 = vmatpush1.msra.mxu0 0.0
    %1359 = vmatprep.subr.mxu0 0.0
    %1360 = vmatpush1.msra.mxu0 0.0
    %1361 = vmatprep.subr.mxu0 0.0
    %1362 = vmatpush1.msra.mxu0 0.0
    %1363 = vmatprep.subr.mxu0 0.0
    %1364 = vmatpush1.msra.mxu0 0.0
    %1365 = vmatprep.subr.mxu0 0.0
    %1366 = vmatpush1.msra.mxu0 0.0
    %1367 = vmatprep.subr.mxu0 0.0
    %1368 = vmatpush1.msra.mxu0 0.0
    %1369 = vmatprep.subr.mxu0 0.0
    %1370 = vmatpush1.msra.mxu0 0.0
    %1371 = vmatprep.subr.mxu0 0.0
    %1372 = vmatpush1.msra.mxu0 0.0
    %1373 = vmatprep.subr.mxu0 0.0
    %1374 = vmatpush1.msra.mxu0 0.0
    %1375 = vmatprep.subr.mxu0 0.0
    %1376 = vmatpush1.msra.mxu0 0.0
    %1377 = vmatprep.subr.mxu0 0.0
    %1378 = vmatpush1.msra.mxu0 0.0
    %1379 = vmatprep.subr.mxu0 0.0
    %1380 = vmatpush1.msra.mxu0 0.0
    %1381 = vmatprep.subr.mxu0 0.0
    %1382 = vmatpush1.msra.mxu0 0.0
    %1383 = vmatprep.mubr.f32.mxu0 0.0
    %1384 = vmatmul.mubr.f32.gmra.mrb[0].mxu0 %v1317
    %v1385 = vpop.f32.mrb[0].mxu0
    %v1386 = vadd.f32 0.0, %v1385
    %v1387 = vpop.f32.mrb[0].mxu0
    %1388 = vdwg.mxu0
    %1389 = vrot.lane.b32.xlu0 %v315, 64
    %v1390 = vpop.permute.xlu0 %1389
    %v1393 = vsel %vm1087, %v1080, 0
    %1395 = vmatprep.subr.mxu0 0.0
    %1396 = vmatpush1.msra.mxu0 %v1390
    %1397 = vmatprep.subr.mxu0 0.0
    %1398 = vmatpush1.msra.mxu0 0.0
    %1399 = vmatprep.subr.mxu0 0.0
    %1400 = vmatpush1.msra.mxu0 0.0
    %1401 = vmatprep.subr.mxu0 0.0
    %1402 = vmatpush1.msra.mxu0 0.0
    %1403 = vmatprep.subr.mxu0 0.0
    %1404 = vmatpush1.msra.mxu0 0.0
    %1405 = vmatprep.subr.mxu0 0.0
    %1406 = vmatpush1.msra.mxu0 0.0
    %1407 = vmatprep.subr.mxu0 0.0
    %1408 = vmatpush1.msra.mxu0 0.0
    %1409 = vmatprep.subr.mxu0 0.0
    %1410 = vmatpush1.msra.mxu0 0.0
    %1411 = vmatprep.subr.mxu0 0.0
    %1412 = vmatpush1.msra.mxu0 0.0
    %1413 = vmatprep.subr.mxu0 0.0
    %1414 = vmatpush1.msra.mxu0 0.0
    %1415 = vmatprep.subr.mxu0 0.0
    %1416 = vmatpush1.msra.mxu0 0.0
    %1417 = vmatprep.subr.mxu0 0.0
    %1418 = vmatpush1.msra.mxu0 0.0
    %1419 = vmatprep.subr.mxu0 0.0
    %1420 = vmatpush1.msra.mxu0 0.0
    %1421 = vmatprep.subr.mxu0 0.0
    %1422 = vmatpush1.msra.mxu0 0.0
    %1423 = vmatprep.subr.mxu0 0.0
    %1424 = vmatpush1.msra.mxu0 0.0
    %1425 = vmatprep.subr.mxu0 0.0
    %1426 = vmatpush1.msra.mxu0 0.0
    %1427 = vmatprep.subr.mxu0 0.0
    %1428 = vmatpush1.msra.mxu0 0.0
    %1429 = vmatprep.subr.mxu0 0.0
    %1430 = vmatpush1.msra.mxu0 0.0
    %1431 = vmatprep.subr.mxu0 0.0
    %1432 = vmatpush1.msra.mxu0 0.0
    %1433 = vmatprep.subr.mxu0 0.0
    %1434 = vmatpush1.msra.mxu0 0.0
    %1435 = vmatprep.subr.mxu0 0.0
    %1436 = vmatpush1.msra.mxu0 0.0
    %1437 = vmatprep.subr.mxu0 0.0
    %1438 = vmatpush1.msra.mxu0 0.0
    %1439 = vmatprep.subr.mxu0 0.0
    %1440 = vmatpush1.msra.mxu0 0.0
    %1441 = vmatprep.subr.mxu0 0.0
    %1442 = vmatpush1.msra.mxu0 0.0
    %1443 = vmatprep.subr.mxu0 0.0
    %1444 = vmatpush1.msra.mxu0 0.0
    %1445 = vmatprep.subr.mxu0 0.0
    %1446 = vmatpush1.msra.mxu0 0.0
    %1447 = vmatprep.subr.mxu0 0.0
    %1448 = vmatpush1.msra.mxu0 0.0
    %1449 = vmatprep.subr.mxu0 0.0
    %1450 = vmatpush1.msra.mxu0 0.0
    %1451 = vmatprep.subr.mxu0 0.0
    %1452 = vmatpush1.msra.mxu0 0.0
    %1453 = vmatprep.subr.mxu0 0.0
    %1454 = vmatpush1.msra.mxu0 0.0
    %1455 = vmatprep.subr.mxu0 0.0
    %1456 = vmatpush1.msra.mxu0 0.0
    %1457 = vmatprep.subr.mxu0 0.0
    %1458 = vmatpush1.msra.mxu0 0.0
    %1459 = vmatprep.mubr.f32.mxu0 0.0
    %1460 = vmatmul.mubr.f32.gmra.mrb[0].mxu0 %v1393
    %v1461 = vpop.f32.mrb[0].mxu0
    %v1462 = vadd.f32 0.0, %v1461
    %v1463 = vpop.f32.mrb[0].mxu0
    %1464 = vdwg.mxu0
    %1465 = vrot.lane.b32.xlu0 %v320, 64
    %v1466 = vpop.permute.xlu0 %1465
    %v1469 = vsel %vm1087, %v1081, 0
    %1471 = vmatprep.subr.mxu0 0.0
    %1472 = vmatpush1.msra.mxu0 %v1466
    %1473 = vmatprep.subr.mxu0 0.0
    %1474 = vmatpush1.msra.mxu0 0.0
    %1475 = vmatprep.subr.mxu0 0.0
    %1476 = vmatpush1.msra.mxu0 0.0
    %1477 = vmatprep.subr.mxu0 0.0
    %1478 = vmatpush1.msra.mxu0 0.0
    %1479 = vmatprep.subr.mxu0 0.0
    %1480 = vmatpush1.msra.mxu0 0.0
    %1481 = vmatprep.subr.mxu0 0.0
    %1482 = vmatpush1.msra.mxu0 0.0
    %1483 = vmatprep.subr.mxu0 0.0
    %1484 = vmatpush1.msra.mxu0 0.0
    %1485 = vmatprep.subr.mxu0 0.0
    %1486 = vmatpush1.msra.mxu0 0.0
    %1487 = vmatprep.subr.mxu0 0.0
    %1488 = vmatpush1.msra.mxu0 0.0
    %1489 = vmatprep.subr.mxu0 0.0
    %1490 = vmatpush1.msra.mxu0 0.0
    %1491 = vmatprep.subr.mxu0 0.0
    %1492 = vmatpush1.msra.mxu0 0.0
    %1493 = vmatprep.subr.mxu0 0.0
    %1494 = vmatpush1.msra.mxu0 0.0
    %1495 = vmatprep.subr.mxu0 0.0
    %1496 = vmatpush1.msra.mxu0 0.0
    %1497 = vmatprep.subr.mxu0 0.0
    %1498 = vmatpush1.msra.mxu0 0.0
    %1499 = vmatprep.subr.mxu0 0.0
    %1500 = vmatpush1.msra.mxu0 0.0
    %1501 = vmatprep.subr.mxu0 0.0
    %1502 = vmatpush1.msra.mxu0 0.0
    %1503 = vmatprep.subr.mxu0 0.0
    %1504 = vmatpush1.msra.mxu0 0.0
    %1505 = vmatprep.subr.mxu0 0.0
    %1506 = vmatpush1.msra.mxu0 0.0
    %1507 = vmatprep.subr.mxu0 0.0
    %1508 = vmatpush1.msra.mxu0 0.0
    %1509 = vmatprep.subr.mxu0 0.0
    %1510 = vmatpush1.msra.mxu0 0.0
    %1511 = vmatprep.subr.mxu0 0.0
    %1512 = vmatpush1.msra.mxu0 0.0
    %1513 = vmatprep.subr.mxu0 0.0
    %1514 = vmatpush1.msra.mxu0 0.0
    %1515 = vmatprep.subr.mxu0 0.0
    %1516 = vmatpush1.msra.mxu0 0.0
    %1517 = vmatprep.subr.mxu0 0.0
    %1518 = vmatpush1.msra.mxu0 0.0
    %1519 = vmatprep.subr.mxu0 0.0
    %1520 = vmatpush1.msra.mxu0 0.0
    %1521 = vmatprep.subr.mxu0 0.0
    %1522 = vmatpush1.msra.mxu0 0.0
    %1523 = vmatprep.subr.mxu0 0.0
    %1524 = vmatpush1.msra.mxu0 0.0
    %1525 = vmatprep.subr.mxu0 0.0
    %1526 = vmatpush1.msra.mxu0 0.0
    %1527 = vmatprep.subr.mxu0 0.0
    %1528 = vmatpush1.msra.mxu0 0.0
    %1529 = vmatprep.subr.mxu0 0.0
    %1530 = vmatpush1.msra.mxu0 0.0
    %1531 = vmatprep.subr.mxu0 0.0
    %1532 = vmatpush1.msra.mxu0 0.0
    %1533 = vmatprep.subr.mxu0 0.0
    %1534 = vmatpush1.msra.mxu0 0.0
    %1535 = vmatprep.mubr.f32.mxu0 0.0
    %1536 = vmatmul.mubr.f32.gmra.mrb[0].mxu0 %v1469
    %v1537 = vpop.f32.mrb[0].mxu0
    %v1538 = vadd.f32 0.0, %v1537
    %v1539 = vpop.f32.mrb[0].mxu0
    %1540 = vdwg.mxu0
    %1541 = vrot.lane.b32.xlu0 %v325, 64
    %v1542 = vpop.permute.xlu0 %1541
    %v1545 = vsel %vm1087, %v1082, 0
    %1547 = vmatprep.subr.mxu0 0.0
    %1548 = vmatpush1.msra.mxu0 %v1542
    %1549 = vmatprep.subr.mxu0 0.0
    %1550 = vmatpush1.msra.mxu0 0.0
    %1551 = vmatprep.subr.mxu0 0.0
    %1552 = vmatpush1.msra.mxu0 0.0
    %1553 = vmatprep.subr.mxu0 0.0
    %1554 = vmatpush1.msra.mxu0 0.0
    %1555 = vmatprep.subr.mxu0 0.0
    %1556 = vmatpush1.msra.mxu0 0.0
    %1557 = vmatprep.subr.mxu0 0.0
    %1558 = vmatpush1.msra.mxu0 0.0
    %1559 = vmatprep.subr.mxu0 0.0
    %1560 = vmatpush1.msra.mxu0 0.0
    %1561 = vmatprep.subr.mxu0 0.0
    %1562 = vmatpush1.msra.mxu0 0.0
    %1563 = vmatprep.subr.mxu0 0.0
    %1564 = vmatpush1.msra.mxu0 0.0
    %1565 = vmatprep.subr.mxu0 0.0
    %1566 = vmatpush1.msra.mxu0 0.0
    %1567 = vmatprep.subr.mxu0 0.0
    %1568 = vmatpush1.msra.mxu0 0.0
    %1569 = vmatprep.subr.mxu0 0.0
    %1570 = vmatpush1.msra.mxu0 0.0
    %1571 = vmatprep.subr.mxu0 0.0
    %1572 = vmatpush1.msra.mxu0 0.0
    %1573 = vmatprep.subr.mxu0 0.0
    %1574 = vmatpush1.msra.mxu0 0.0
    %1575 = vmatprep.subr.mxu0 0.0
    %1576 = vmatpush1.msra.mxu0 0.0
    %1577 = vmatprep.subr.mxu0 0.0
    %1578 = vmatpush1.msra.mxu0 0.0
    %1579 = vmatprep.subr.mxu0 0.0
    %1580 = vmatpush1.msra.mxu0 0.0
    %1581 = vmatprep.subr.mxu0 0.0
    %1582 = vmatpush1.msra.mxu0 0.0
    %1583 = vmatprep.subr.mxu0 0.0
    %1584 = vmatpush1.msra.mxu0 0.0
    %1585 = vmatprep.subr.mxu0 0.0
    %1586 = vmatpush1.msra.mxu0 0.0
    %1587 = vmatprep.subr.mxu0 0.0
    %1588 = vmatpush1.msra.mxu0 0.0
    %1589 = vmatprep.subr.mxu0 0.0
    %1590 = vmatpush1.msra.mxu0 0.0
    %1591 = vmatprep.subr.mxu0 0.0
    %1592 = vmatpush1.msra.mxu0 0.0
    %1593 = vmatprep.subr.mxu0 0.0
    %1594 = vmatpush1.msra.mxu0 0.0
    %1595 = vmatprep.subr.mxu0 0.0
    %1596 = vmatpush1.msra.mxu0 0.0
    %1597 = vmatprep.subr.mxu0 0.0
    %1598 = vmatpush1.msra.mxu0 0.0
    %1599 = vmatprep.subr.mxu0 0.0
    %1600 = vmatpush1.msra.mxu0 0.0
    %1601 = vmatprep.subr.mxu0 0.0
    %1602 = vmatpush1.msra.mxu0 0.0
    %1603 = vmatprep.subr.mxu0 0.0
    %1604 = vmatpush1.msra.mxu0 0.0
    %1605 = vmatprep.subr.mxu0 0.0
    %1606 = vmatpush1.msra.mxu0 0.0
    %1607 = vmatprep.subr.mxu0 0.0
    %1608 = vmatpush1.msra.mxu0 0.0
    %1609 = vmatprep.subr.mxu0 0.0
    %1610 = vmatpush1.msra.mxu0 0.0
    %1611 = vmatprep.mubr.f32.mxu0 0.0
    %1612 = vmatmul.mubr.f32.gmra.mrb[0].mxu0 %v1545
    %v1613 = vpop.f32.mrb[0].mxu0
    %v1614 = vadd.f32 0.0, %v1613
    %v1615 = vpop.f32.mrb[0].mxu0
    %1616 = vdwg.mxu0
    %1617 = vrot.lane.b32.xlu0 %v330, 64
    %v1618 = vpop.permute.xlu0 %1617
    %v1621 = vsel %vm1087, %v1083, 0
    %1623 = vmatprep.subr.mxu0 0.0
    %1624 = vmatpush1.msra.mxu0 %v1618
    %1625 = vmatprep.subr.mxu0 0.0
    %1626 = vmatpush1.msra.mxu0 0.0
    %1627 = vmatprep.subr.mxu0 0.0
    %1628 = vmatpush1.msra.mxu0 0.0
    %1629 = vmatprep.subr.mxu0 0.0
    %1630 = vmatpush1.msra.mxu0 0.0
    %1631 = vmatprep.subr.mxu0 0.0
    %1632 = vmatpush1.msra.mxu0 0.0
    %1633 = vmatprep.subr.mxu0 0.0
    %1634 = vmatpush1.msra.mxu0 0.0
    %1635 = vmatprep.subr.mxu0 0.0
    %1636 = vmatpush1.msra.mxu0 0.0
    %1637 = vmatprep.subr.mxu0 0.0
    %1638 = vmatpush1.msra.mxu0 0.0
    %1639 = vmatprep.subr.mxu0 0.0
    %1640 = vmatpush1.msra.mxu0 0.0
    %1641 = vmatprep.subr.mxu0 0.0
    %1642 = vmatpush1.msra.mxu0 0.0
    %1643 = vmatprep.subr.mxu0 0.0
    %1644 = vmatpush1.msra.mxu0 0.0
    %1645 = vmatprep.subr.mxu0 0.0
    %1646 = vmatpush1.msra.mxu0 0.0
    %1647 = vmatprep.subr.mxu0 0.0
    %1648 = vmatpush1.msra.mxu0 0.0
    %1649 = vmatprep.subr.mxu0 0.0
    %1650 = vmatpush1.msra.mxu0 0.0
    %1651 = vmatprep.subr.mxu0 0.0
    %1652 = vmatpush1.msra.mxu0 0.0
    %1653 = vmatprep.subr.mxu0 0.0
    %1654 = vmatpush1.msra.mxu0 0.0
    %1655 = vmatprep.subr.mxu0 0.0
    %1656 = vmatpush1.msra.mxu0 0.0
    %1657 = vmatprep.subr.mxu0 0.0
    %1658 = vmatpush1.msra.mxu0 0.0
    %1659 = vmatprep.subr.mxu0 0.0
    %1660 = vmatpush1.msra.mxu0 0.0
    %1661 = vmatprep.subr.mxu0 0.0
    %1662 = vmatpush1.msra.mxu0 0.0
    %1663 = vmatprep.subr.mxu0 0.0
    %1664 = vmatpush1.msra.mxu0 0.0
    %1665 = vmatprep.subr.mxu0 0.0
    %1666 = vmatpush1.msra.mxu0 0.0
    %1667 = vmatprep.subr.mxu0 0.0
    %1668 = vmatpush1.msra.mxu0 0.0
    %1669 = vmatprep.subr.mxu0 0.0
    %1670 = vmatpush1.msra.mxu0 0.0
    %1671 = vmatprep.subr.mxu0 0.0
    %1672 = vmatpush1.msra.mxu0 0.0
    %1673 = vmatprep.subr.mxu0 0.0
    %1674 = vmatpush1.msra.mxu0 0.0
    %1675 = vmatprep.subr.mxu0 0.0
    %1676 = vmatpush1.msra.mxu0 0.0
    %1677 = vmatprep.subr.mxu0 0.0
    %1678 = vmatpush1.msra.mxu0 0.0
    %1679 = vmatprep.subr.mxu0 0.0
    %1680 = vmatpush1.msra.mxu0 0.0
    %1681 = vmatprep.subr.mxu0 0.0
    %1682 = vmatpush1.msra.mxu0 0.0
    %1683 = vmatprep.subr.mxu0 0.0
    %1684 = vmatpush1.msra.mxu0 0.0
    %1685 = vmatprep.subr.mxu0 0.0
    %1686 = vmatpush1.msra.mxu0 0.0
    %1687 = vmatprep.mubr.f32.mxu0 0.0
    %1688 = vmatmul.mubr.f32.gmra.mrb[0].mxu0 %v1621
    %v1689 = vpop.f32.mrb[0].mxu0
    %v1690 = vadd.f32 0.0, %v1689
    %v1691 = vpop.f32.mrb[0].mxu0
    %1692 = vdwg.mxu0
    %v1693 = vld [vmem:[%s5] sm:$0xff]
    %v1694 = vld [vmem:[%s5 + $0x8] sm:$0xff]
    %v1703 = vrot.slane %v1234, 7
    %vm1704 = vcmask 1041409
    %v1705 = vsel %vm1704, %v1703, %v1158
    %v1706 = vrot.slane %v1310, 6
    %vm1707 = vcmask 1042434
    %v1708 = vsel %vm1707, %v1706, %v1705
    %v1709 = vrot.slane %v1386, 5
    %vm1710 = vcmask 1043459
    %v1711 = vsel %vm1710, %v1709, %v1708
    %v1712 = vrot.slane %v1462, 4
    %vm1713 = vcmask 1044484
    %v1714 = vsel %vm1713, %v1712, %v1711
    %v1715 = vrot.slane %v1538, 3
    %vm1716 = vcmask 1045509
    %v1717 = vsel %vm1716, %v1715, %v1714
    %v1718 = vrot.slane %v1614, 2
    %vm1719 = vcmask 1046534
    %v1720 = vsel %vm1719, %v1718, %v1717
    %v1721 = vrot.slane %v1690, 1
    %vm1722 = vcmask 1047559
    %v1723 = vsel %vm1722, %v1721, %v1720
    %v1724 = vsel %vm365, %v1723, 0
    %1726 = vmatprep.subr.mxu0 0.0
    %1727 = vmatpush1.msra.mxu0 %v1693
    %1728 = vmatprep.subr.mxu0 0.0
    %1729 = vmatpush1.msra.mxu0 %v1694
    %1730 = vmatprep.subr.mxu0 0.0
    %1731 = vmatpush1.msra.mxu0 0.0
    %1732 = vmatprep.subr.mxu0 0.0
    %1733 = vmatpush1.msra.mxu0 0.0
    %1734 = vmatprep.subr.mxu0 0.0
    %1735 = vmatpush1.msra.mxu0 0.0
    %1736 = vmatprep.subr.mxu0 0.0
    %1737 = vmatpush1.msra.mxu0 0.0
    %1738 = vmatprep.subr.mxu0 0.0
    %1739 = vmatpush1.msra.mxu0 0.0
    %1740 = vmatprep.subr.mxu0 0.0
    %1741 = vmatpush1.msra.mxu0 0.0
    %1742 = vmatprep.subr.mxu0 0.0
    %1743 = vmatpush1.msra.mxu0 0.0
    %1744 = vmatprep.subr.mxu0 0.0
    %1745 = vmatpush1.msra.mxu0 0.0
    %1746 = vmatprep.subr.mxu0 0.0
    %1747 = vmatpush1.msra.mxu0 0.0
    %1748 = vmatprep.subr.mxu0 0.0
    %1749 = vmatpush1.msra.mxu0 0.0
    %1750 = vmatprep.subr.mxu0 0.0
    %1751 = vmatpush1.msra.mxu0 0.0
    %1752 = vmatprep.subr.mxu0 0.0
    %1753 = vmatpush1.msra.mxu0 0.0
    %1754 = vmatprep.subr.mxu0 0.0
    %1755 = vmatpush1.msra.mxu0 0.0
    %1756 = vmatprep.subr.mxu0 0.0
    %1757 = vmatpush1.msra.mxu0 0.0
    %1758 = vmatprep.subr.mxu0 0.0
    %1759 = vmatpush1.msra.mxu0 0.0
    %1760 = vmatprep.subr.mxu0 0.0
    %1761 = vmatpush1.msra.mxu0 0.0
    %1762 = vmatprep.subr.mxu0 0.0
    %1763 = vmatpush1.msra.mxu0 0.0
    %1764 = vmatprep.subr.mxu0 0.0
    %1765 = vmatpush1.msra.mxu0 0.0
    %1766 = vmatprep.subr.mxu0 0.0
    %1767 = vmatpush1.msra.mxu0 0.0
    %1768 = vmatprep.subr.mxu0 0.0
    %1769 = vmatpush1.msra.mxu0 0.0
    %1770 = vmatprep.subr.mxu0 0.0
    %1771 = vmatpush1.msra.mxu0 0.0
    %1772 = vmatprep.subr.mxu0 0.0
    %1773 = vmatpush1.msra.mxu0 0.0
    %1774 = vmatprep.subr.mxu0 0.0
    %1775 = vmatpush1.msra.mxu0 0.0
    %1776 = vmatprep.subr.mxu0 0.0
    %1777 = vmatpush1.msra.mxu0 0.0
    %1778 = vmatprep.subr.mxu0 0.0
    %1779 = vmatpush1.msra.mxu0 0.0
    %1780 = vmatprep.subr.mxu0 0.0
    %1781 = vmatpush1.msra.mxu0 0.0
    %1782 = vmatprep.subr.mxu0 0.0
    %1783 = vmatpush1.msra.mxu0 0.0
    %1784 = vmatprep.subr.mxu0 0.0
    %1785 = vmatpush1.msra.mxu0 0.0
    %1786 = vmatprep.subr.mxu0 0.0
    %1787 = vmatpush1.msra.mxu0 0.0
    %1788 = vmatprep.subr.mxu0 0.0
    %1789 = vmatpush1.msra.mxu0 0.0
    %1790 = vmatprep.mubr.f32.mxu0 0.0
    %1791 = vmatmul.mubr.f32.gmra.mrb[0].mxu0 %v1724
    %v1792 = vpop.f32.mrb[0].mxu0
    %v1793 = vadd.f32 0.0, %v1792
    %v1794 = vpop.f32.mrb[0].mxu0
    %1795 = vdwg.mxu0
    %v1796 = vadd.f32 %v361, %v1793
    %1797 = vrot.lane.b32.xlu0 %v295, 112
    %v1798 = vpop.permute.xlu0 %1797
    %1799 = vrot.lane.b32.xlu0 %v295, 80
    %v1800 = vpop.permute.xlu0 %1799
    %v1801 = vsel %vm365, %v1798, 0
    %v1803 = vsel %vm365, %v1800, 0
    %1805 = vmatprep.subr.mxu0 0.0
    %1806 = vmatpush1.xpose.msra.mxu0 %v1803
    %1807 = vmatprep.subr.mxu0 0.0
    %1808 = vmatpush1.xpose.msra.mxu0 0.0
    %1809 = vmatprep.subr.mxu0 0.0
    %1810 = vmatpush1.xpose.msra.mxu0 0.0
    %1811 = vmatprep.subr.mxu0 0.0
    %1812 = vmatpush1.xpose.msra.mxu0 0.0
    %1813 = vmatprep.subr.mxu0 0.0
    %1814 = vmatpush1.xpose.msra.mxu0 0.0
    %1815 = vmatprep.subr.mxu0 0.0
    %1816 = vmatpush1.xpose.msra.mxu0 0.0
    %1817 = vmatprep.subr.mxu0 0.0
    %1818 = vmatpush1.xpose.msra.mxu0 0.0
    %1819 = vmatprep.subr.mxu0 0.0
    %1820 = vmatpush1.xpose.msra.mxu0 0.0
    %1821 = vmatprep.subr.mxu0 0.0
    %1822 = vmatpush1.xpose.msra.mxu0 0.0
    %1823 = vmatprep.subr.mxu0 0.0
    %1824 = vmatpush1.xpose.msra.mxu0 0.0
    %1825 = vmatprep.subr.mxu0 0.0
    %1826 = vmatpush1.xpose.msra.mxu0 0.0
    %1827 = vmatprep.subr.mxu0 0.0
    %1828 = vmatpush1.xpose.msra.mxu0 0.0
    %1829 = vmatprep.subr.mxu0 0.0
    %1830 = vmatpush1.xpose.msra.mxu0 0.0
    %1831 = vmatprep.subr.mxu0 0.0
    %1832 = vmatpush1.xpose.msra.mxu0 0.0
    %1833 = vmatprep.subr.mxu0 0.0
    %1834 = vmatpush1.xpose.msra.mxu0 0.0
    %1835 = vmatprep.subr.mxu0 0.0
    %1836 = vmatpush1.xpose.msra.mxu0 0.0
    %1837 = vmatprep.subr.mxu0 0.0
    %1838 = vmatpush1.xpose.msra.mxu0 0.0
    %1839 = vmatprep.subr.mxu0 0.0
    %1840 = vmatpush1.xpose.msra.mxu0 0.0
    %1841 = vmatprep.subr.mxu0 0.0
    %1842 = vmatpush1.xpose.msra.mxu0 0.0
    %1843 = vmatprep.subr.mxu0 0.0
    %1844 = vmatpush1.xpose.msra.mxu0 0.0
    %1845 = vmatprep.subr.mxu0 0.0
    %1846 = vmatpush1.xpose.msra.mxu0 0.0
    %1847 = vmatprep.subr.mxu0 0.0
    %1848 = vmatpush1.xpose.msra.mxu0 0.0
    %1849 = vmatprep.subr.mxu0 0.0
    %1850 = vmatpush1.xpose.msra.mxu0 0.0
    %1851 = vmatprep.subr.mxu0 0.0
    %1852 = vmatpush1.xpose.msra.mxu0 0.0
    %1853 = vmatprep.subr.mxu0 0.0
    %1854 = vmatpush1.xpose.msra.mxu0 0.0
    %1855 = vmatprep.subr.mxu0 0.0
    %1856 = vmatpush1.xpose.msra.mxu0 0.0
    %1857 = vmatprep.subr.mxu0 0.0
    %1858 = vmatpush1.xpose.msra.mxu0 0.0
    %1859 = vmatprep.subr.mxu0 0.0
    %1860 = vmatpush1.xpose.msra.mxu0 0.0
    %1861 = vmatprep.subr.mxu0 0.0
    %1862 = vmatpush1.xpose.msra.mxu0 0.0
    %1863 = vmatprep.subr.mxu0 0.0
    %1864 = vmatpush1.xpose.msra.mxu0 0.0
    %1865 = vmatprep.subr.mxu0 0.0
    %1866 = vmatpush1.xpose.msra.mxu0 0.0
    %1867 = vmatprep.subr.mxu0 0.0
    %1868 = vmatpush1.xpose.msra.mxu0 0.0
    %1869 = vmatprep.mubr.f32.mxu0 0.0
    %1870 = vmatmul.mubr.f32.gmra.mrb[0].mxu0 %v1801
    %v1871 = vpop.f32.mrb[0].mxu0
    %v1872 = vadd.f32 0.0, %v1871
    %v1873 = vpop.f32.mrb[0].mxu0
    %1874 = vdwg.mxu0
    %1875 = vrot.lane.b32.xlu0 %v300, 112
    %v1876 = vpop.permute.xlu0 %1875
    %1877 = vrot.lane.b32.xlu0 %v300, 80
    %v1878 = vpop.permute.xlu0 %1877
    %v1879 = vsel %vm365, %v1876, 0
    %v1881 = vsel %vm365, %v1878, 0
    %1883 = vmatprep.subr.mxu0 0.0
    %1884 = vmatpush1.xpose.msra.mxu0 %v1881
    %1885 = vmatprep.subr.mxu0 0.0
    %1886 = vmatpush1.xpose.msra.mxu0 0.0
    %1887 = vmatprep.subr.mxu0 0.0
    %1888 = vmatpush1.xpose.msra.mxu0 0.0
    %1889 = vmatprep.subr.mxu0 0.0
    %1890 = vmatpush1.xpose.msra.mxu0 0.0
    %1891 = vmatprep.subr.mxu0 0.0
    %1892 = vmatpush1.xpose.msra.mxu0 0.0
    %1893 = vmatprep.subr.mxu0 0.0
    %1894 = vmatpush1.xpose.msra.mxu0 0.0
    %1895 = vmatprep.subr.mxu0 0.0
    %1896 = vmatpush1.xpose.msra.mxu0 0.0
    %1897 = vmatprep.subr.mxu0 0.0
    %1898 = vmatpush1.xpose.msra.mxu0 0.0
    %1899 = vmatprep.subr.mxu0 0.0
    %1900 = vmatpush1.xpose.msra.mxu0 0.0
    %1901 = vmatprep.subr.mxu0 0.0
    %1902 = vmatpush1.xpose.msra.mxu0 0.0
    %1903 = vmatprep.subr.mxu0 0.0
    %1904 = vmatpush1.xpose.msra.mxu0 0.0
    %1905 = vmatprep.subr.mxu0 0.0
    %1906 = vmatpush1.xpose.msra.mxu0 0.0
    %1907 = vmatprep.subr.mxu0 0.0
    %1908 = vmatpush1.xpose.msra.mxu0 0.0
    %1909 = vmatprep.subr.mxu0 0.0
    %1910 = vmatpush1.xpose.msra.mxu0 0.0
    %1911 = vmatprep.subr.mxu0 0.0
    %1912 = vmatpush1.xpose.msra.mxu0 0.0
    %1913 = vmatprep.subr.mxu0 0.0
    %1914 = vmatpush1.xpose.msra.mxu0 0.0
    %1915 = vmatprep.subr.mxu0 0.0
    %1916 = vmatpush1.xpose.msra.mxu0 0.0
    %1917 = vmatprep.subr.mxu0 0.0
    %1918 = vmatpush1.xpose.msra.mxu0 0.0
    %1919 = vmatprep.subr.mxu0 0.0
    %1920 = vmatpush1.xpose.msra.mxu0 0.0
    %1921 = vmatprep.subr.mxu0 0.0
    %1922 = vmatpush1.xpose.msra.mxu0 0.0
    %1923 = vmatprep.subr.mxu0 0.0
    %1924 = vmatpush1.xpose.msra.mxu0 0.0
    %1925 = vmatprep.subr.mxu0 0.0
    %1926 = vmatpush1.xpose.msra.mxu0 0.0
    %1927 = vmatprep.subr.mxu0 0.0
    %1928 = vmatpush1.xpose.msra.mxu0 0.0
    %1929 = vmatprep.subr.mxu0 0.0
    %1930 = vmatpush1.xpose.msra.mxu0 0.0
    %1931 = vmatprep.subr.mxu0 0.0
    %1932 = vmatpush1.xpose.msra.mxu0 0.0
    %1933 = vmatprep.subr.mxu0 0.0
    %1934 = vmatpush1.xpose.msra.mxu0 0.0
    %1935 = vmatprep.subr.mxu0 0.0
    %1936 = vmatpush1.xpose.msra.mxu0 0.0
    %1937 = vmatprep.subr.mxu0 0.0
    %1938 = vmatpush1.xpose.msra.mxu0 0.0
    %1939 = vmatprep.subr.mxu0 0.0
    %1940 = vmatpush1.xpose.msra.mxu0 0.0
    %1941 = vmatprep.subr.mxu0 0.0
    %1942 = vmatpush1.xpose.msra.mxu0 0.0
    %1943 = vmatprep.subr.mxu0 0.0
    %1944 = vmatpush1.xpose.msra.mxu0 0.0
    %1945 = vmatprep.subr.mxu0 0.0
    %1946 = vmatpush1.xpose.msra.mxu0 0.0
    %1947 = vmatprep.mubr.f32.mxu0 0.0
    %1948 = vmatmul.mubr.f32.gmra.mrb[0].mxu0 %v1879
    %v1949 = vpop.f32.mrb[0].mxu0
    %v1950 = vadd.f32 0.0, %v1949
    %v1951 = vpop.f32.mrb[0].mxu0
    %1952 = vdwg.mxu0
    %1953 = vrot.lane.b32.xlu0 %v305, 112
    %v1954 = vpop.permute.xlu0 %1953
    %1955 = vrot.lane.b32.xlu0 %v305, 80
    %v1956 = vpop.permute.xlu0 %1955
    %v1957 = vsel %vm365, %v1954, 0
    %v1959 = vsel %vm365, %v1956, 0
    %1961 = vmatprep.subr.mxu0 0.0
    %1962 = vmatpush1.xpose.msra.mxu0 %v1959
    %1963 = vmatprep.subr.mxu0 0.0
    %1964 = vmatpush1.xpose.msra.mxu0 0.0
    %1965 = vmatprep.subr.mxu0 0.0
    %1966 = vmatpush1.xpose.msra.mxu0 0.0
    %1967 = vmatprep.subr.mxu0 0.0
    %1968 = vmatpush1.xpose.msra.mxu0 0.0
    %1969 = vmatprep.subr.mxu0 0.0
    %1970 = vmatpush1.xpose.msra.mxu0 0.0
    %1971 = vmatprep.subr.mxu0 0.0
    %1972 = vmatpush1.xpose.msra.mxu0 0.0
    %1973 = vmatprep.subr.mxu0 0.0
    %1974 = vmatpush1.xpose.msra.mxu0 0.0
    %1975 = vmatprep.subr.mxu0 0.0
    %1976 = vmatpush1.xpose.msra.mxu0 0.0
    %1977 = vmatprep.subr.mxu0 0.0
    %1978 = vmatpush1.xpose.msra.mxu0 0.0
    %1979 = vmatprep.subr.mxu0 0.0
    %1980 = vmatpush1.xpose.msra.mxu0 0.0
    %1981 = vmatprep.subr.mxu0 0.0
    %1982 = vmatpush1.xpose.msra.mxu0 0.0
    %1983 = vmatprep.subr.mxu0 0.0
    %1984 = vmatpush1.xpose.msra.mxu0 0.0
    %1985 = vmatprep.subr.mxu0 0.0
    %1986 = vmatpush1.xpose.msra.mxu0 0.0
    %1987 = vmatprep.subr.mxu0 0.0
    %1988 = vmatpush1.xpose.msra.mxu0 0.0
    %1989 = vmatprep.subr.mxu0 0.0
    %1990 = vmatpush1.xpose.msra.mxu0 0.0
    %1991 = vmatprep.subr.mxu0 0.0
    %1992 = vmatpush1.xpose.msra.mxu0 0.0
    %1993 = vmatprep.subr.mxu0 0.0
    %1994 = vmatpush1.xpose.msra.mxu0 0.0
    %1995 = vmatprep.subr.mxu0 0.0
    %1996 = vmatpush1.xpose.msra.mxu0 0.0
    %1997 = vmatprep.subr.mxu0 0.0
    %1998 = vmatpush1.xpose.msra.mxu0 0.0
    %1999 = vmatprep.subr.mxu0 0.0
    %2000 = vmatpush1.xpose.msra.mxu0 0.0
    %2001 = vmatprep.subr.mxu0 0.0
    %2002 = vmatpush1.xpose.msra.mxu0 0.0
    %2003 = vmatprep.subr.mxu0 0.0
    %2004 = vmatpush1.xpose.msra.mxu0 0.0
    %2005 = vmatprep.subr.mxu0 0.0
    %2006 = vmatpush1.xpose.msra.mxu0 0.0
    %2007 = vmatprep.subr.mxu0 0.0
    %2008 = vmatpush1.xpose.msra.mxu0 0.0
    %2009 = vmatprep.subr.mxu0 0.0
    %2010 = vmatpush1.xpose.msra.mxu0 0.0
    %2011 = vmatprep.subr.mxu0 0.0
    %2012 = vmatpush1.xpose.msra.mxu0 0.0
    %2013 = vmatprep.subr.mxu0 0.0
    %2014 = vmatpush1.xpose.msra.mxu0 0.0
    %2015 = vmatprep.subr.mxu0 0.0
    %2016 = vmatpush1.xpose.msra.mxu0 0.0
    %2017 = vmatprep.subr.mxu0 0.0
    %2018 = vmatpush1.xpose.msra.mxu0 0.0
    %2019 = vmatprep.subr.mxu0 0.0
    %2020 = vmatpush1.xpose.msra.mxu0 0.0
    %2021 = vmatprep.subr.mxu0 0.0
    %2022 = vmatpush1.xpose.msra.mxu0 0.0
    %2023 = vmatprep.subr.mxu0 0.0
    %2024 = vmatpush1.xpose.msra.mxu0 0.0
    %2025 = vmatprep.mubr.f32.mxu0 0.0
    %2026 = vmatmul.mubr.f32.gmra.mrb[0].mxu0 %v1957
    %v2027 = vpop.f32.mrb[0].mxu0
    %v2028 = vadd.f32 0.0, %v2027
    %v2029 = vpop.f32.mrb[0].mxu0
    %2030 = vdwg.mxu0
    %2031 = vrot.lane.b32.xlu0 %v310, 112
    %v2032 = vpop.permute.xlu0 %2031
    %2033 = vrot.lane.b32.xlu0 %v310, 80
    %v2034 = vpop.permute.xlu0 %2033
    %v2035 = vsel %vm365, %v2032, 0
    %v2037 = vsel %vm365, %v2034, 0
    %2039 = vmatprep.subr.mxu0 0.0
    %2040 = vmatpush1.xpose.msra.mxu0 %v2037
    %2041 = vmatprep.subr.mxu0 0.0
    %2042 = vmatpush1.xpose.msra.mxu0 0.0
    %2043 = vmatprep.subr.mxu0 0.0
    %2044 = vmatpush1.xpose.msra.mxu0 0.0
    %2045 = vmatprep.subr.mxu0 0.0
    %2046 = vmatpush1.xpose.msra.mxu0 0.0
    %2047 = vmatprep.subr.mxu0 0.0
    %2048 = vmatpush1.xpose.msra.mxu0 0.0
    %2049 = vmatprep.subr.mxu0 0.0
    %2050 = vmatpush1.xpose.msra.mxu0 0.0
    %2051 = vmatprep.subr.mxu0 0.0
    %2052 = vmatpush1.xpose.msra.mxu0 0.0
    %2053 = vmatprep.subr.mxu0 0.0
    %2054 = vmatpush1.xpose.msra.mxu0 0.0
    %2055 = vmatprep.subr.mxu0 0.0
    %2056 = vmatpush1.xpose.msra.mxu0 0.0
    %2057 = vmatprep.subr.mxu0 0.0
    %2058 = vmatpush1.xpose.msra.mxu0 0.0
    %2059 = vmatprep.subr.mxu0 0.0
    %2060 = vmatpush1.xpose.msra.mxu0 0.0
    %2061 = vmatprep.subr.mxu0 0.0
    %2062 = vmatpush1.xpose.msra.mxu0 0.0
    %2063 = vmatprep.subr.mxu0 0.0
    %2064 = vmatpush1.xpose.msra.mxu0 0.0
    %2065 = vmatprep.subr.mxu0 0.0
    %2066 = vmatpush1.xpose.msra.mxu0 0.0
    %2067 = vmatprep.subr.mxu0 0.0
    %2068 = vmatpush1.xpose.msra.mxu0 0.0
    %2069 = vmatprep.subr.mxu0 0.0
    %2070 = vmatpush1.xpose.msra.mxu0 0.0
    %2071 = vmatprep.subr.mxu0 0.0
    %2072 = vmatpush1.xpose.msra.mxu0 0.0
    %2073 = vmatprep.subr.mxu0 0.0
    %2074 = vmatpush1.xpose.msra.mxu0 0.0
    %2075 = vmatprep.subr.mxu0 0.0
    %2076 = vmatpush1.xpose.msra.mxu0 0.0
    %2077 = vmatprep.subr.mxu0 0.0
    %2078 = vmatpush1.xpose.msra.mxu0 0.0
    %2079 = vmatprep.subr.mxu0 0.0
    %2080 = vmatpush1.xpose.msra.mxu0 0.0
    %2081 = vmatprep.subr.mxu0 0.0
    %2082 = vmatpush1.xpose.msra.mxu0 0.0
    %2083 = vmatprep.subr.mxu0 0.0
    %2084 = vmatpush1.xpose.msra.mxu0 0.0
    %2085 = vmatprep.subr.mxu0 0.0
    %2086 = vmatpush1.xpose.msra.mxu0 0.0
    %2087 = vmatprep.subr.mxu0 0.0
    %2088 = vmatpush1.xpose.msra.mxu0 0.0
    %2089 = vmatprep.subr.mxu0 0.0
    %2090 = vmatpush1.xpose.msra.mxu0 0.0
    %2091 = vmatprep.subr.mxu0 0.0
    %2092 = vmatpush1.xpose.msra.mxu0 0.0
    %2093 = vmatprep.subr.mxu0 0.0
    %2094 = vmatpush1.xpose.msra.mxu0 0.0
    %2095 = vmatprep.subr.mxu0 0.0
    %2096 = vmatpush1.xpose.msra.mxu0 0.0
    %2097 = vmatprep.subr.mxu0 0.0
    %2098 = vmatpush1.xpose.msra.mxu0 0.0
    %2099 = vmatprep.subr.mxu0 0.0
    %2100 = vmatpush1.xpose.msra.mxu0 0.0
    %2101 = vmatprep.subr.mxu0 0.0
    %2102 = vmatpush1.xpose.msra.mxu0 0.0
    %2103 = vmatprep.mubr.f32.mxu0 0.0
    %2104 = vmatmul.mubr.f32.gmra.mrb[0].mxu0 %v2035
    %v2105 = vpop.f32.mrb[0].mxu0
    %v2106 = vadd.f32 0.0, %v2105
    %v2107 = vpop.f32.mrb[0].mxu0
    %2108 = vdwg.mxu0
    %2109 = vrot.lane.b32.xlu0 %v315, 112
    %v2110 = vpop.permute.xlu0 %2109
    %2111 = vrot.lane.b32.xlu0 %v315, 80
    %v2112 = vpop.permute.xlu0 %2111
    %v2113 = vsel %vm365, %v2110, 0
    %v2115 = vsel %vm365, %v2112, 0
    %2117 = vmatprep.subr.mxu0 0.0
    %2118 = vmatpush1.xpose.msra.mxu0 %v2115
    %2119 = vmatprep.subr.mxu0 0.0
    %2120 = vmatpush1.xpose.msra.mxu0 0.0
    %2121 = vmatprep.subr.mxu0 0.0
    %2122 = vmatpush1.xpose.msra.mxu0 0.0
    %2123 = vmatprep.subr.mxu0 0.0
    %2124 = vmatpush1.xpose.msra.mxu0 0.0
    %2125 = vmatprep.subr.mxu0 0.0
    %2126 = vmatpush1.xpose.msra.mxu0 0.0
    %2127 = vmatprep.subr.mxu0 0.0
    %2128 = vmatpush1.xpose.msra.mxu0 0.0
    %2129 = vmatprep.subr.mxu0 0.0
    %2130 = vmatpush1.xpose.msra.mxu0 0.0
    %2131 = vmatprep.subr.mxu0 0.0
    %2132 = vmatpush1.xpose.msra.mxu0 0.0
    %2133 = vmatprep.subr.mxu0 0.0
    %2134 = vmatpush1.xpose.msra.mxu0 0.0
    %2135 = vmatprep.subr.mxu0 0.0
    %2136 = vmatpush1.xpose.msra.mxu0 0.0
    %2137 = vmatprep.subr.mxu0 0.0
    %2138 = vmatpush1.xpose.msra.mxu0 0.0
    %2139 = vmatprep.subr.mxu0 0.0
    %2140 = vmatpush1.xpose.msra.mxu0 0.0
    %2141 = vmatprep.subr.mxu0 0.0
    %2142 = vmatpush1.xpose.msra.mxu0 0.0
    %2143 = vmatprep.subr.mxu0 0.0
    %2144 = vmatpush1.xpose.msra.mxu0 0.0
    %2145 = vmatprep.subr.mxu0 0.0
    %2146 = vmatpush1.xpose.msra.mxu0 0.0
    %2147 = vmatprep.subr.mxu0 0.0
    %2148 = vmatpush1.xpose.msra.mxu0 0.0
    %2149 = vmatprep.subr.mxu0 0.0
    %2150 = vmatpush1.xpose.msra.mxu0 0.0
    %2151 = vmatprep.subr.mxu0 0.0
    %2152 = vmatpush1.xpose.msra.mxu0 0.0
    %2153 = vmatprep.subr.mxu0 0.0
    %2154 = vmatpush1.xpose.msra.mxu0 0.0
    %2155 = vmatprep.subr.mxu0 0.0
    %2156 = vmatpush1.xpose.msra.mxu0 0.0
    %2157 = vmatprep.subr.mxu0 0.0
    %2158 = vmatpush1.xpose.msra.mxu0 0.0
    %2159 = vmatprep.subr.mxu0 0.0
    %2160 = vmatpush1.xpose.msra.mxu0 0.0
    %2161 = vmatprep.subr.mxu0 0.0
    %2162 = vmatpush1.xpose.msra.mxu0 0.0
    %2163 = vmatprep.subr.mxu0 0.0
    %2164 = vmatpush1.xpose.msra.mxu0 0.0
    %2165 = vmatprep.subr.mxu0 0.0
    %2166 = vmatpush1.xpose.msra.mxu0 0.0
    %2167 = vmatprep.subr.mxu0 0.0
    %2168 = vmatpush1.xpose.msra.mxu0 0.0
    %2169 = vmatprep.subr.mxu0 0.0
    %2170 = vmatpush1.xpose.msra.mxu0 0.0
    %2171 = vmatprep.subr.mxu0 0.0
    %2172 = vmatpush1.xpose.msra.mxu0 0.0
    %2173 = vmatprep.subr.mxu0 0.0
    %2174 = vmatpush1.xpose.msra.mxu0 0.0
    %2175 = vmatprep.subr.mxu0 0.0
    %2176 = vmatpush1.xpose.msra.mxu0 0.0
    %2177 = vmatprep.subr.mxu0 0.0
    %2178 = vmatpush1.xpose.msra.mxu0 0.0
    %2179 = vmatprep.subr.mxu0 0.0
    %2180 = vmatpush1.xpose.msra.mxu0 0.0
    %2181 = vmatprep.mubr.f32.mxu0 0.0
    %2182 = vmatmul.mubr.f32.gmra.mrb[0].mxu0 %v2113
    %v2183 = vpop.f32.mrb[0].mxu0
    %v2184 = vadd.f32 0.0, %v2183
    %v2185 = vpop.f32.mrb[0].mxu0
    %2186 = vdwg.mxu0
    %2187 = vrot.lane.b32.xlu0 %v320, 112
    %v2188 = vpop.permute.xlu0 %2187
    %2189 = vrot.lane.b32.xlu0 %v320, 80
    %v2190 = vpop.permute.xlu0 %2189
    %v2191 = vsel %vm365, %v2188, 0
    %v2193 = vsel %vm365, %v2190, 0
    %2195 = vmatprep.subr.mxu0 0.0
    %2196 = vmatpush1.xpose.msra.mxu0 %v2193
    %2197 = vmatprep.subr.mxu0 0.0
    %2198 = vmatpush1.xpose.msra.mxu0 0.0
    %2199 = vmatprep.subr.mxu0 0.0
    %2200 = vmatpush1.xpose.msra.mxu0 0.0
    %2201 = vmatprep.subr.mxu0 0.0
    %2202 = vmatpush1.xpose.msra.mxu0 0.0
    %2203 = vmatprep.subr.mxu0 0.0
    %2204 = vmatpush1.xpose.msra.mxu0 0.0
    %2205 = vmatprep.subr.mxu0 0.0
    %2206 = vmatpush1.xpose.msra.mxu0 0.0
    %2207 = vmatprep.subr.mxu0 0.0
    %2208 = vmatpush1.xpose.msra.mxu0 0.0
    %2209 = vmatprep.subr.mxu0 0.0
    %2210 = vmatpush1.xpose.msra.mxu0 0.0
    %2211 = vmatprep.subr.mxu0 0.0
    %2212 = vmatpush1.xpose.msra.mxu0 0.0
    %2213 = vmatprep.subr.mxu0 0.0
    %2214 = vmatpush1.xpose.msra.mxu0 0.0
    %2215 = vmatprep.subr.mxu0 0.0
    %2216 = vmatpush1.xpose.msra.mxu0 0.0
    %2217 = vmatprep.subr.mxu0 0.0
    %2218 = vmatpush1.xpose.msra.mxu0 0.0
    %2219 = vmatprep.subr.mxu0 0.0
    %2220 = vmatpush1.xpose.msra.mxu0 0.0
    %2221 = vmatprep.subr.mxu0 0.0
    %2222 = vmatpush1.xpose.msra.mxu0 0.0
    %2223 = vmatprep.subr.mxu0 0.0
    %2224 = vmatpush1.xpose.msra.mxu0 0.0
    %2225 = vmatprep.subr.mxu0 0.0
    %2226 = vmatpush1.xpose.msra.mxu0 0.0
    %2227 = vmatprep.subr.mxu0 0.0
    %2228 = vmatpush1.xpose.msra.mxu0 0.0
    %2229 = vmatprep.subr.mxu0 0.0
    %2230 = vmatpush1.xpose.msra.mxu0 0.0
    %2231 = vmatprep.subr.mxu0 0.0
    %2232 = vmatpush1.xpose.msra.mxu0 0.0
    %2233 = vmatprep.subr.mxu0 0.0
    %2234 = vmatpush1.xpose.msra.mxu0 0.0
    %2235 = vmatprep.subr.mxu0 0.0
    %2236 = vmatpush1.xpose.msra.mxu0 0.0
    %2237 = vmatprep.subr.mxu0 0.0
    %2238 = vmatpush1.xpose.msra.mxu0 0.0
    %2239 = vmatprep.subr.mxu0 0.0
    %2240 = vmatpush1.xpose.msra.mxu0 0.0
    %2241 = vmatprep.subr.mxu0 0.0
    %2242 = vmatpush1.xpose.msra.mxu0 0.0
    %2243 = vmatprep.subr.mxu0 0.0
    %2244 = vmatpush1.xpose.msra.mxu0 0.0
    %2245 = vmatprep.subr.mxu0 0.0
    %2246 = vmatpush1.xpose.msra.mxu0 0.0
    %2247 = vmatprep.subr.mxu0 0.0
    %2248 = vmatpush1.xpose.msra.mxu0 0.0
    %2249 = vmatprep.subr.mxu0 0.0
    %2250 = vmatpush1.xpose.msra.mxu0 0.0
    %2251 = vmatprep.subr.mxu0 0.0
    %2252 = vmatpush1.xpose.msra.mxu0 0.0
    %2253 = vmatprep.subr.mxu0 0.0
    %2254 = vmatpush1.xpose.msra.mxu0 0.0
    %2255 = vmatprep.subr.mxu0 0.0
    %2256 = vmatpush1.xpose.msra.mxu0 0.0
    %2257 = vmatprep.subr.mxu0 0.0
    %2258 = vmatpush1.xpose.msra.mxu0 0.0
    %2259 = vmatprep.mubr.f32.mxu0 0.0
    %2260 = vmatmul.mubr.f32.gmra.mrb[0].mxu0 %v2191
    %v2261 = vpop.f32.mrb[0].mxu0
    %v2262 = vadd.f32 0.0, %v2261
    %v2263 = vpop.f32.mrb[0].mxu0
    %2264 = vdwg.mxu0
    %2265 = vrot.lane.b32.xlu0 %v325, 112
    %v2266 = vpop.permute.xlu0 %2265
    %2267 = vrot.lane.b32.xlu0 %v325, 80
    %v2268 = vpop.permute.xlu0 %2267
    %v2269 = vsel %vm365, %v2266, 0
    %v2271 = vsel %vm365, %v2268, 0
    %2273 = vmatprep.subr.mxu0 0.0
    %2274 = vmatpush1.xpose.msra.mxu0 %v2271
    %2275 = vmatprep.subr.mxu0 0.0
    %2276 = vmatpush1.xpose.msra.mxu0 0.0
    %2277 = vmatprep.subr.mxu0 0.0
    %2278 = vmatpush1.xpose.msra.mxu0 0.0
    %2279 = vmatprep.subr.mxu0 0.0
    %2280 = vmatpush1.xpose.msra.mxu0 0.0
    %2281 = vmatprep.subr.mxu0 0.0
    %2282 = vmatpush1.xpose.msra.mxu0 0.0
    %2283 = vmatprep.subr.mxu0 0.0
    %2284 = vmatpush1.xpose.msra.mxu0 0.0
    %2285 = vmatprep.subr.mxu0 0.0
    %2286 = vmatpush1.xpose.msra.mxu0 0.0
    %2287 = vmatprep.subr.mxu0 0.0
    %2288 = vmatpush1.xpose.msra.mxu0 0.0
    %2289 = vmatprep.subr.mxu0 0.0
    %2290 = vmatpush1.xpose.msra.mxu0 0.0
    %2291 = vmatprep.subr.mxu0 0.0
    %2292 = vmatpush1.xpose.msra.mxu0 0.0
    %2293 = vmatprep.subr.mxu0 0.0
    %2294 = vmatpush1.xpose.msra.mxu0 0.0
    %2295 = vmatprep.subr.mxu0 0.0
    %2296 = vmatpush1.xpose.msra.mxu0 0.0
    %2297 = vmatprep.subr.mxu0 0.0
    %2298 = vmatpush1.xpose.msra.mxu0 0.0
    %2299 = vmatprep.subr.mxu0 0.0
    %2300 = vmatpush1.xpose.msra.mxu0 0.0
    %2301 = vmatprep.subr.mxu0 0.0
    %2302 = vmatpush1.xpose.msra.mxu0 0.0
    %2303 = vmatprep.subr.mxu0 0.0
    %2304 = vmatpush1.xpose.msra.mxu0 0.0
    %2305 = vmatprep.subr.mxu0 0.0
    %2306 = vmatpush1.xpose.msra.mxu0 0.0
    %2307 = vmatprep.subr.mxu0 0.0
    %2308 = vmatpush1.xpose.msra.mxu0 0.0
    %2309 = vmatprep.subr.mxu0 0.0
    %2310 = vmatpush1.xpose.msra.mxu0 0.0
    %2311 = vmatprep.subr.mxu0 0.0
    %2312 = vmatpush1.xpose.msra.mxu0 0.0
    %2313 = vmatprep.subr.mxu0 0.0
    %2314 = vmatpush1.xpose.msra.mxu0 0.0
    %2315 = vmatprep.subr.mxu0 0.0
    %2316 = vmatpush1.xpose.msra.mxu0 0.0
    %2317 = vmatprep.subr.mxu0 0.0
    %2318 = vmatpush1.xpose.msra.mxu0 0.0
    %2319 = vmatprep.subr.mxu0 0.0
    %2320 = vmatpush1.xpose.msra.mxu0 0.0
    %2321 = vmatprep.subr.mxu0 0.0
    %2322 = vmatpush1.xpose.msra.mxu0 0.0
    %2323 = vmatprep.subr.mxu0 0.0
    %2324 = vmatpush1.xpose.msra.mxu0 0.0
    %2325 = vmatprep.subr.mxu0 0.0
    %2326 = vmatpush1.xpose.msra.mxu0 0.0
    %2327 = vmatprep.subr.mxu0 0.0
    %2328 = vmatpush1.xpose.msra.mxu0 0.0
    %2329 = vmatprep.subr.mxu0 0.0
    %2330 = vmatpush1.xpose.msra.mxu0 0.0
    %2331 = vmatprep.subr.mxu0 0.0
    %2332 = vmatpush1.xpose.msra.mxu0 0.0
    %2333 = vmatprep.subr.mxu0 0.0
    %2334 = vmatpush1.xpose.msra.mxu0 0.0
    %2335 = vmatprep.subr.mxu0 0.0
    %2336 = vmatpush1.xpose.msra.mxu0 0.0
    %2337 = vmatprep.mubr.f32.mxu0 0.0
    %2338 = vmatmul.mubr.f32.gmra.mrb[0].mxu0 %v2269
    %v2339 = vpop.f32.mrb[0].mxu0
    %v2340 = vadd.f32 0.0, %v2339
    %v2341 = vpop.f32.mrb[0].mxu0
    %2342 = vdwg.mxu0
    %2343 = vrot.lane.b32.xlu0 %v330, 112
    %v2344 = vpop.permute.xlu0 %2343
    %2345 = vrot.lane.b32.xlu0 %v330, 80
    %v2346 = vpop.permute.xlu0 %2345
    %v2347 = vsel %vm365, %v2344, 0
    %v2349 = vsel %vm365, %v2346, 0
    %2351 = vmatprep.subr.mxu0 0.0
    %2352 = vmatpush1.xpose.msra.mxu0 %v2349
    %2353 = vmatprep.subr.mxu0 0.0
    %2354 = vmatpush1.xpose.msra.mxu0 0.0
    %2355 = vmatprep.subr.mxu0 0.0
    %2356 = vmatpush1.xpose.msra.mxu0 0.0
    %2357 = vmatprep.subr.mxu0 0.0
    %2358 = vmatpush1.xpose.msra.mxu0 0.0
    %2359 = vmatprep.subr.mxu0 0.0
    %2360 = vmatpush1.xpose.msra.mxu0 0.0
    %2361 = vmatprep.subr.mxu0 0.0
    %2362 = vmatpush1.xpose.msra.mxu0 0.0
    %2363 = vmatprep.subr.mxu0 0.0
    %2364 = vmatpush1.xpose.msra.mxu0 0.0
    %2365 = vmatprep.subr.mxu0 0.0
    %2366 = vmatpush1.xpose.msra.mxu0 0.0
    %2367 = vmatprep.subr.mxu0 0.0
    %2368 = vmatpush1.xpose.msra.mxu0 0.0
    %2369 = vmatprep.subr.mxu0 0.0
    %2370 = vmatpush1.xpose.msra.mxu0 0.0
    %2371 = vmatprep.subr.mxu0 0.0
    %2372 = vmatpush1.xpose.msra.mxu0 0.0
    %2373 = vmatprep.subr.mxu0 0.0
    %2374 = vmatpush1.xpose.msra.mxu0 0.0
    %2375 = vmatprep.subr.mxu0 0.0
    %2376 = vmatpush1.xpose.msra.mxu0 0.0
    %2377 = vmatprep.subr.mxu0 0.0
    %2378 = vmatpush1.xpose.msra.mxu0 0.0
    %2379 = vmatprep.subr.mxu0 0.0
    %2380 = vmatpush1.xpose.msra.mxu0 0.0
    %2381 = vmatprep.subr.mxu0 0.0
    %2382 = vmatpush1.xpose.msra.mxu0 0.0
    %2383 = vmatprep.subr.mxu0 0.0
    %2384 = vmatpush1.xpose.msra.mxu0 0.0
    %2385 = vmatprep.subr.mxu0 0.0
    %2386 = vmatpush1.xpose.msra.mxu0 0.0
    %2387 = vmatprep.subr.mxu0 0.0
    %2388 = vmatpush1.xpose.msra.mxu0 0.0
    %2389 = vmatprep.subr.mxu0 0.0
    %2390 = vmatpush1.xpose.msra.mxu0 0.0
    %2391 = vmatprep.subr.mxu0 0.0
    %2392 = vmatpush1.xpose.msra.mxu0 0.0
    %2393 = vmatprep.subr.mxu0 0.0
    %2394 = vmatpush1.xpose.msra.mxu0 0.0
    %2395 = vmatprep.subr.mxu0 0.0
    %2396 = vmatpush1.xpose.msra.mxu0 0.0
    %2397 = vmatprep.subr.mxu0 0.0
    %2398 = vmatpush1.xpose.msra.mxu0 0.0
    %2399 = vmatprep.subr.mxu0 0.0
    %2400 = vmatpush1.xpose.msra.mxu0 0.0
    %2401 = vmatprep.subr.mxu0 0.0
    %2402 = vmatpush1.xpose.msra.mxu0 0.0
    %2403 = vmatprep.subr.mxu0 0.0
    %2404 = vmatpush1.xpose.msra.mxu0 0.0
    %2405 = vmatprep.subr.mxu0 0.0
    %2406 = vmatpush1.xpose.msra.mxu0 0.0
    %2407 = vmatprep.subr.mxu0 0.0
    %2408 = vmatpush1.xpose.msra.mxu0 0.0
    %2409 = vmatprep.subr.mxu0 0.0
    %2410 = vmatpush1.xpose.msra.mxu0 0.0
    %2411 = vmatprep.subr.mxu0 0.0
    %2412 = vmatpush1.xpose.msra.mxu0 0.0
    %2413 = vmatprep.subr.mxu0 0.0
    %2414 = vmatpush1.xpose.msra.mxu0 0.0
    %2415 = vmatprep.mubr.f32.mxu0 0.0
    %2416 = vmatmul.mubr.f32.gmra.mrb[0].mxu0 %v2347
    %v2417 = vpop.f32.mrb[0].mxu0
    %v2418 = vadd.f32 0.0, %v2417
    %v2419 = vpop.f32.mrb[0].mxu0
    %2420 = vdwg.mxu0
    %v2421 = vmul.f32 %v1872, 0.25
    %v2422 = vmul.f32 %v1950, 0.25
    %v2423 = vmul.f32 %v2028, 0.25
    %v2424 = vmul.f32 %v2106, 0.25
    %v2425 = vmul.f32 %v2184, 0.25
    %v2426 = vmul.f32 %v2262, 0.25
    %v2427 = vmul.f32 %v2340, 0.25
    %v2428 = vmul.f32 %v2418, 0.25
    %v2429 = vadd.f32 %v2421, %v349
    %v2430 = vadd.f32 %v2422, %v350
    %v2431 = vadd.f32 %v2423, %v351
    %v2432 = vadd.f32 %v2424, %v352
    %v2433 = vadd.f32 %v2425, %v353
    %v2434 = vadd.f32 %v2426, %v354
    %v2435 = vadd.f32 %v2427, %v355
    %v2436 = vadd.f32 %v2428, %v356
    %v2437 = vsel %vm995, %v2429, -inf
    %2438 = vmax.xlane.f32.xlu0 %v2437
    %v2439 = vpop.xlane.xlu0 %2438
    %v2440 = vsel %vm995, %v2430, -inf
    %2441 = vmax.xlane.f32.xlu0 %v2440
    %v2442 = vpop.xlane.xlu0 %2441
    %v2443 = vsel %vm995, %v2431, -inf
    %2444 = vmax.xlane.f32.xlu0 %v2443
    %v2445 = vpop.xlane.xlu0 %2444
    %v2446 = vsel %vm995, %v2432, -inf
    %2447 = vmax.xlane.f32.xlu0 %v2446
    %v2448 = vpop.xlane.xlu0 %2447
    %v2449 = vsel %vm995, %v2433, -inf
    %2450 = vmax.xlane.f32.xlu0 %v2449
    %v2451 = vpop.xlane.xlu0 %2450
    %v2452 = vsel %vm995, %v2434, -inf
    %2453 = vmax.xlane.f32.xlu0 %v2452
    %v2454 = vpop.xlane.xlu0 %2453
    %v2455 = vsel %vm995, %v2435, -inf
    %2456 = vmax.xlane.f32.xlu0 %v2455
    %v2457 = vpop.xlane.xlu0 %2456
    %v2458 = vsel %vm995, %v2436, -inf
    %2459 = vmax.xlane.f32.xlu0 %v2458
    %v2460 = vpop.xlane.xlu0 %2459
    %v2461 = vsub.f32 %v2429, %v2439
    %v2462 = vsub.f32 %v2430, %v2442
    %v2463 = vsub.f32 %v2431, %v2445
    %v2464 = vsub.f32 %v2432, %v2448
    %v2465 = vsub.f32 %v2433, %v2451
    %v2466 = vsub.f32 %v2434, %v2454
    %v2467 = vsub.f32 %v2435, %v2457
    %v2468 = vsub.f32 %v2436, %v2460
    %v2469 = vmul.f32 %v2461, 1.442695
    %v2470 = vpow.pop %v2469
    %v2471 = vmul.f32 %v2462, 1.442695
    %v2472 = vpow.pop %v2471
    %v2473 = vmul.f32 %v2463, 1.442695
    %v2474 = vpow.pop %v2473
    %v2475 = vmul.f32 %v2464, 1.442695
    %v2476 = vpow.pop %v2475
    %v2477 = vmul.f32 %v2465, 1.442695
    %v2478 = vpow.pop %v2477
    %v2479 = vmul.f32 %v2466, 1.442695
    %v2480 = vpow.pop %v2479
    %v2481 = vmul.f32 %v2467, 1.442695
    %v2482 = vpow.pop %v2481
    %v2483 = vmul.f32 %v2468, 1.442695
    %v2484 = vpow.pop %v2483
    %v2485 = vsel %vm995, %v2470, 0.0
    %2486 = vadd.xlane.f32.xlu0 %v2485
    %v2487 = vpop.xlane.xlu0 %2486
    %v2488 = vsel %vm995, %v2472, 0.0
    %2489 = vadd.xlane.f32.xlu0 %v2488
    %v2490 = vpop.xlane.xlu0 %2489
    %v2491 = vsel %vm995, %v2474, 0.0
    %2492 = vadd.xlane.f32.xlu0 %v2491
    %v2493 = vpop.xlane.xlu0 %2492
    %v2494 = vsel %vm995, %v2476, 0.0
    %2495 = vadd.xlane.f32.xlu0 %v2494
    %v2496 = vpop.xlane.xlu0 %2495
    %v2497 = vsel %vm995, %v2478, 0.0
    %2498 = vadd.xlane.f32.xlu0 %v2497
    %v2499 = vpop.xlane.xlu0 %2498
    %v2500 = vsel %vm995, %v2480, 0.0
    %2501 = vadd.xlane.f32.xlu0 %v2500
    %v2502 = vpop.xlane.xlu0 %2501
    %v2503 = vsel %vm995, %v2482, 0.0
    %2504 = vadd.xlane.f32.xlu0 %v2503
    %v2505 = vpop.xlane.xlu0 %2504
    %v2506 = vsel %vm995, %v2484, 0.0
    %2507 = vadd.xlane.f32.xlu0 %v2506
    %v2508 = vpop.xlane.xlu0 %2507
    %v2509 = vrcp.pop %v2487
    %v2510 = vrcp.pop %v2490
    %v2511 = vrcp.pop %v2493
    %v2512 = vrcp.pop %v2496
    %v2513 = vrcp.pop %v2499
    %v2514 = vrcp.pop %v2502
    %v2515 = vrcp.pop %v2505
    %v2516 = vrcp.pop %v2508
    %v2517 = vmul.f32 %v2470, %v2509
    %v2518 = vmul.f32 %v2472, %v2510
    %v2519 = vmul.f32 %v2474, %v2511
    %v2520 = vmul.f32 %v2476, %v2512
    %v2521 = vmul.f32 %v2478, %v2513
    %v2522 = vmul.f32 %v2480, %v2514
    %v2523 = vmul.f32 %v2482, %v2515
    %v2524 = vmul.f32 %v2484, %v2516
    %2525 = vrot.lane.b32.xlu0 %v295, 48
    %v2526 = vpop.permute.xlu0 %2525
    %v2529 = vsel %vm1087, %v2517, 0
    %2531 = vmatprep.subr.mxu0 0.0
    %2532 = vmatpush1.msra.mxu0 %v2526
    %2533 = vmatprep.subr.mxu0 0.0
    %2534 = vmatpush1.msra.mxu0 0.0
    %2535 = vmatprep.subr.mxu0 0.0
    %2536 = vmatpush1.msra.mxu0 0.0
    %2537 = vmatprep.subr.mxu0 0.0
    %2538 = vmatpush1.msra.mxu0 0.0
    %2539 = vmatprep.subr.mxu0 0.0
    %2540 = vmatpush1.msra.mxu0 0.0
    %2541 = vmatprep.subr.mxu0 0.0
    %2542 = vmatpush1.msra.mxu0 0.0
    %2543 = vmatprep.subr.mxu0 0.0
    %2544 = vmatpush1.msra.mxu0 0.0
    %2545 = vmatprep.subr.mxu0 0.0
    %2546 = vmatpush1.msra.mxu0 0.0
    %2547 = vmatprep.subr.mxu0 0.0
    %2548 = vmatpush1.msra.mxu0 0.0
    %2549 = vmatprep.subr.mxu0 0.0
    %2550 = vmatpush1.msra.mxu0 0.0
    %2551 = vmatprep.subr.mxu0 0.0
    %2552 = vmatpush1.msra.mxu0 0.0
    %2553 = vmatprep.subr.mxu0 0.0
    %2554 = vmatpush1.msra.mxu0 0.0
    %2555 = vmatprep.subr.mxu0 0.0
    %2556 = vmatpush1.msra.mxu0 0.0
    %2557 = vmatprep.subr.mxu0 0.0
    %2558 = vmatpush1.msra.mxu0 0.0
    %2559 = vmatprep.subr.mxu0 0.0
    %2560 = vmatpush1.msra.mxu0 0.0
    %2561 = vmatprep.subr.mxu0 0.0
    %2562 = vmatpush1.msra.mxu0 0.0
    %2563 = vmatprep.subr.mxu0 0.0
    %2564 = vmatpush1.msra.mxu0 0.0
    %2565 = vmatprep.subr.mxu0 0.0
    %2566 = vmatpush1.msra.mxu0 0.0
    %2567 = vmatprep.subr.mxu0 0.0
    %2568 = vmatpush1.msra.mxu0 0.0
    %2569 = vmatprep.subr.mxu0 0.0
    %2570 = vmatpush1.msra.mxu0 0.0
    %2571 = vmatprep.subr.mxu0 0.0
    %2572 = vmatpush1.msra.mxu0 0.0
    %2573 = vmatprep.subr.mxu0 0.0
    %2574 = vmatpush1.msra.mxu0 0.0
    %2575 = vmatprep.subr.mxu0 0.0
    %2576 = vmatpush1.msra.mxu0 0.0
    %2577 = vmatprep.subr.mxu0 0.0
    %2578 = vmatpush1.msra.mxu0 0.0
    %2579 = vmatprep.subr.mxu0 0.0
    %2580 = vmatpush1.msra.mxu0 0.0
    %2581 = vmatprep.subr.mxu0 0.0
    %2582 = vmatpush1.msra.mxu0 0.0
    %2583 = vmatprep.subr.mxu0 0.0
    %2584 = vmatpush1.msra.mxu0 0.0
    %2585 = vmatprep.subr.mxu0 0.0
    %2586 = vmatpush1.msra.mxu0 0.0
    %2587 = vmatprep.subr.mxu0 0.0
    %2588 = vmatpush1.msra.mxu0 0.0
    %2589 = vmatprep.subr.mxu0 0.0
    %2590 = vmatpush1.msra.mxu0 0.0
    %2591 = vmatprep.subr.mxu0 0.0
    %2592 = vmatpush1.msra.mxu0 0.0
    %2593 = vmatprep.subr.mxu0 0.0
    %2594 = vmatpush1.msra.mxu0 0.0
    %2595 = vmatprep.mubr.f32.mxu0 0.0
    %2596 = vmatmul.mubr.f32.gmra.mrb[0].mxu0 %v2529
    %v2597 = vpop.f32.mrb[0].mxu0
    %v2598 = vadd.f32 0.0, %v2597
    %v2599 = vpop.f32.mrb[0].mxu0
    %2600 = vdwg.mxu0
    %2601 = vrot.lane.b32.xlu0 %v300, 48
    %v2602 = vpop.permute.xlu0 %2601
    %v2605 = vsel %vm1087, %v2518, 0
    %2607 = vmatprep.subr.mxu0 0.0
    %2608 = vmatpush1.msra.mxu0 %v2602
    %2609 = vmatprep.subr.mxu0 0.0
    %2610 = vmatpush1.msra.mxu0 0.0
    %2611 = vmatprep.subr.mxu0 0.0
    %2612 = vmatpush1.msra.mxu0 0.0
    %2613 = vmatprep.subr.mxu0 0.0
    %2614 = vmatpush1.msra.mxu0 0.0
    %2615 = vmatprep.subr.mxu0 0.0
    %2616 = vmatpush1.msra.mxu0 0.0
    %2617 = vmatprep.subr.mxu0 0.0
    %2618 = vmatpush1.msra.mxu0 0.0
    %2619 = vmatprep.subr.mxu0 0.0
    %2620 = vmatpush1.msra.mxu0 0.0
    %2621 = vmatprep.subr.mxu0 0.0
    %2622 = vmatpush1.msra.mxu0 0.0
    %2623 = vmatprep.subr.mxu0 0.0
    %2624 = vmatpush1.msra.mxu0 0.0
    %2625 = vmatprep.subr.mxu0 0.0
    %2626 = vmatpush1.msra.mxu0 0.0
    %2627 = vmatprep.subr.mxu0 0.0
    %2628 = vmatpush1.msra.mxu0 0.0
    %2629 = vmatprep.subr.mxu0 0.0
    %2630 = vmatpush1.msra.mxu0 0.0
    %2631 = vmatprep.subr.mxu0 0.0
    %2632 = vmatpush1.msra.mxu0 0.0
    %2633 = vmatprep.subr.mxu0 0.0
    %2634 = vmatpush1.msra.mxu0 0.0
    %2635 = vmatprep.subr.mxu0 0.0
    %2636 = vmatpush1.msra.mxu0 0.0
    %2637 = vmatprep.subr.mxu0 0.0
    %2638 = vmatpush1.msra.mxu0 0.0
    %2639 = vmatprep.subr.mxu0 0.0
    %2640 = vmatpush1.msra.mxu0 0.0
    %2641 = vmatprep.subr.mxu0 0.0
    %2642 = vmatpush1.msra.mxu0 0.0
    %2643 = vmatprep.subr.mxu0 0.0
    %2644 = vmatpush1.msra.mxu0 0.0
    %2645 = vmatprep.subr.mxu0 0.0
    %2646 = vmatpush1.msra.mxu0 0.0
    %2647 = vmatprep.subr.mxu0 0.0
    %2648 = vmatpush1.msra.mxu0 0.0
    %2649 = vmatprep.subr.mxu0 0.0
    %2650 = vmatpush1.msra.mxu0 0.0
    %2651 = vmatprep.subr.mxu0 0.0
    %2652 = vmatpush1.msra.mxu0 0.0
    %2653 = vmatprep.subr.mxu0 0.0
    %2654 = vmatpush1.msra.mxu0 0.0
    %2655 = vmatprep.subr.mxu0 0.0
    %2656 = vmatpush1.msra.mxu0 0.0
    %2657 = vmatprep.subr.mxu0 0.0
    %2658 = vmatpush1.msra.mxu0 0.0
    %2659 = vmatprep.subr.mxu0 0.0
    %2660 = vmatpush1.msra.mxu0 0.0
    %2661 = vmatprep.subr.mxu0 0.0
    %2662 = vmatpush1.msra.mxu0 0.0
    %2663 = vmatprep.subr.mxu0 0.0
    %2664 = vmatpush1.msra.mxu0 0.0
    %2665 = vmatprep.subr.mxu0 0.0
    %2666 = vmatpush1.msra.mxu0 0.0
    %2667 = vmatprep.subr.mxu0 0.0
    %2668 = vmatpush1.msra.mxu0 0.0
    %2669 = vmatprep.subr.mxu0 0.0
    %2670 = vmatpush1.msra.mxu0 0.0
    %2671 = vmatprep.mubr.f32.mxu0 0.0
    %2672 = vmatmul.mubr.f32.gmra.mrb[0].mxu0 %v2605
    %v2673 = vpop.f32.mrb[0].mxu0
    %v2674 = vadd.f32 0.0, %v2673
    %v2675 = vpop.f32.mrb[0].mxu0
    %2676 = vdwg.mxu0
    %2677 = vrot.lane.b32.xlu0 %v305, 48
    %v2678 = vpop.permute.xlu0 %2677
    %v2681 = vsel %vm1087, %v2519, 0
    %2683 = vmatprep.subr.mxu0 0.0
    %2684 = vmatpush1.msra.mxu0 %v2678
    %2685 = vmatprep.subr.mxu0 0.0
    %2686 = vmatpush1.msra.mxu0 0.0
    %2687 = vmatprep.subr.mxu0 0.0
    %2688 = vmatpush1.msra.mxu0 0.0
    %2689 = vmatprep.subr.mxu0 0.0
    %2690 = vmatpush1.msra.mxu0 0.0
    %2691 = vmatprep.subr.mxu0 0.0
    %2692 = vmatpush1.msra.mxu0 0.0
    %2693 = vmatprep.subr.mxu0 0.0
    %2694 = vmatpush1.msra.mxu0 0.0
    %2695 = vmatprep.subr.mxu0 0.0
    %2696 = vmatpush1.msra.mxu0 0.0
    %2697 = vmatprep.subr.mxu0 0.0
    %2698 = vmatpush1.msra.mxu0 0.0
    %2699 = vmatprep.subr.mxu0 0.0
    %2700 = vmatpush1.msra.mxu0 0.0
    %2701 = vmatprep.subr.mxu0 0.0
    %2702 = vmatpush1.msra.mxu0 0.0
    %2703 = vmatprep.subr.mxu0 0.0
    %2704 = vmatpush1.msra.mxu0 0.0
    %2705 = vmatprep.subr.mxu0 0.0
    %2706 = vmatpush1.msra.mxu0 0.0
    %2707 = vmatprep.subr.mxu0 0.0
    %2708 = vmatpush1.msra.mxu0 0.0
    %2709 = vmatprep.subr.mxu0 0.0
    %2710 = vmatpush1.msra.mxu0 0.0
    %2711 = vmatprep.subr.mxu0 0.0
    %2712 = vmatpush1.msra.mxu0 0.0
    %2713 = vmatprep.subr.mxu0 0.0
    %2714 = vmatpush1.msra.mxu0 0.0
    %2715 = vmatprep.subr.mxu0 0.0
    %2716 = vmatpush1.msra.mxu0 0.0
    %2717 = vmatprep.subr.mxu0 0.0
    %2718 = vmatpush1.msra.mxu0 0.0
    %2719 = vmatprep.subr.mxu0 0.0
    %2720 = vmatpush1.msra.mxu0 0.0
    %2721 = vmatprep.subr.mxu0 0.0
    %2722 = vmatpush1.msra.mxu0 0.0
    %2723 = vmatprep.subr.mxu0 0.0
    %2724 = vmatpush1.msra.mxu0 0.0
    %2725 = vmatprep.subr.mxu0 0.0
    %2726 = vmatpush1.msra.mxu0 0.0
    %2727 = vmatprep.subr.mxu0 0.0
    %2728 = vmatpush1.msra.mxu0 0.0
    %2729 = vmatprep.subr.mxu0 0.0
    %2730 = vmatpush1.msra.mxu0 0.0
    %2731 = vmatprep.subr.mxu0 0.0
    %2732 = vmatpush1.msra.mxu0 0.0
    %2733 = vmatprep.subr.mxu0 0.0
    %2734 = vmatpush1.msra.mxu0 0.0
    %2735 = vmatprep.subr.mxu0 0.0
    %2736 = vmatpush1.msra.mxu0 0.0
    %2737 = vmatprep.subr.mxu0 0.0
    %2738 = vmatpush1.msra.mxu0 0.0
    %2739 = vmatprep.subr.mxu0 0.0
    %2740 = vmatpush1.msra.mxu0 0.0
    %2741 = vmatprep.subr.mxu0 0.0
    %2742 = vmatpush1.msra.mxu0 0.0
    %2743 = vmatprep.subr.mxu0 0.0
    %2744 = vmatpush1.msra.mxu0 0.0
    %2745 = vmatprep.subr.mxu0 0.0
    %2746 = vmatpush1.msra.mxu0 0.0
    %2747 = vmatprep.mubr.f32.mxu0 0.0
    %2748 = vmatmul.mubr.f32.gmra.mrb[0].mxu0 %v2681
    %v2749 = vpop.f32.mrb[0].mxu0
    %v2750 = vadd.f32 0.0, %v2749
    %v2751 = vpop.f32.mrb[0].mxu0
    %2752 = vdwg.mxu0
    %2753 = vrot.lane.b32.xlu0 %v310, 48
    %v2754 = vpop.permute.xlu0 %2753
    %v2757 = vsel %vm1087, %v2520, 0
    %2759 = vmatprep.subr.mxu0 0.0
    %2760 = vmatpush1.msra.mxu0 %v2754
    %2761 = vmatprep.subr.mxu0 0.0
    %2762 = vmatpush1.msra.mxu0 0.0
    %2763 = vmatprep.subr.mxu0 0.0
    %2764 = vmatpush1.msra.mxu0 0.0
    %2765 = vmatprep.subr.mxu0 0.0
    %2766 = vmatpush1.msra.mxu0 0.0
    %2767 = vmatprep.subr.mxu0 0.0
    %2768 = vmatpush1.msra.mxu0 0.0
    %2769 = vmatprep.subr.mxu0 0.0
    %2770 = vmatpush1.msra.mxu0 0.0
    %2771 = vmatprep.subr.mxu0 0.0
    %2772 = vmatpush1.msra.mxu0 0.0
    %2773 = vmatprep.subr.mxu0 0.0
    %2774 = vmatpush1.msra.mxu0 0.0
    %2775 = vmatprep.subr.mxu0 0.0
    %2776 = vmatpush1.msra.mxu0 0.0
    %2777 = vmatprep.subr.mxu0 0.0
    %2778 = vmatpush1.msra.mxu0 0.0
    %2779 = vmatprep.subr.mxu0 0.0
    %2780 = vmatpush1.msra.mxu0 0.0
    %2781 = vmatprep.subr.mxu0 0.0
    %2782 = vmatpush1.msra.mxu0 0.0
    %2783 = vmatprep.subr.mxu0 0.0
    %2784 = vmatpush1.msra.mxu0 0.0
    %2785 = vmatprep.subr.mxu0 0.0
    %2786 = vmatpush1.msra.mxu0 0.0
    %2787 = vmatprep.subr.mxu0 0.0
    %2788 = vmatpush1.msra.mxu0 0.0
    %2789 = vmatprep.subr.mxu0 0.0
    %2790 = vmatpush1.msra.mxu0 0.0
    %2791 = vmatprep.subr.mxu0 0.0
    %2792 = vmatpush1.msra.mxu0 0.0
    %2793 = vmatprep.subr.mxu0 0.0
    %2794 = vmatpush1.msra.mxu0 0.0
    %2795 = vmatprep.subr.mxu0 0.0
    %2796 = vmatpush1.msra.mxu0 0.0
    %2797 = vmatprep.subr.mxu0 0.0
    %2798 = vmatpush1.msra.mxu0 0.0
    %2799 = vmatprep.subr.mxu0 0.0
    %2800 = vmatpush1.msra.mxu0 0.0
    %2801 = vmatprep.subr.mxu0 0.0
    %2802 = vmatpush1.msra.mxu0 0.0
    %2803 = vmatprep.subr.mxu0 0.0
    %2804 = vmatpush1.msra.mxu0 0.0
    %2805 = vmatprep.subr.mxu0 0.0
    %2806 = vmatpush1.msra.mxu0 0.0
    %2807 = vmatprep.subr.mxu0 0.0
    %2808 = vmatpush1.msra.mxu0 0.0
    %2809 = vmatprep.subr.mxu0 0.0
    %2810 = vmatpush1.msra.mxu0 0.0
    %2811 = vmatprep.subr.mxu0 0.0
    %2812 = vmatpush1.msra.mxu0 0.0
    %2813 = vmatprep.subr.mxu0 0.0
    %2814 = vmatpush1.msra.mxu0 0.0
    %2815 = vmatprep.subr.mxu0 0.0
    %2816 = vmatpush1.msra.mxu0 0.0
    %2817 = vmatprep.subr.mxu0 0.0
    %2818 = vmatpush1.msra.mxu0 0.0
    %2819 = vmatprep.subr.mxu0 0.0
    %2820 = vmatpush1.msra.mxu0 0.0
    %2821 = vmatprep.subr.mxu0 0.0
    %2822 = vmatpush1.msra.mxu0 0.0
    %2823 = vmatprep.mubr.f32.mxu0 0.0
    %2824 = vmatmul.mubr.f32.gmra.mrb[0].mxu0 %v2757
    %v2825 = vpop.f32.mrb[0].mxu0
    %v2826 = vadd.f32 0.0, %v2825
    %v2827 = vpop.f32.mrb[0].mxu0
    %2828 = vdwg.mxu0
    %2829 = vrot.lane.b32.xlu0 %v315, 48
    %v2830 = vpop.permute.xlu0 %2829
    %v2833 = vsel %vm1087, %v2521, 0
    %2835 = vmatprep.subr.mxu0 0.0
    %2836 = vmatpush1.msra.mxu0 %v2830
    %2837 = vmatprep.subr.mxu0 0.0
    %2838 = vmatpush1.msra.mxu0 0.0
    %2839 = vmatprep.subr.mxu0 0.0
    %2840 = vmatpush1.msra.mxu0 0.0
    %2841 = vmatprep.subr.mxu0 0.0
    %2842 = vmatpush1.msra.mxu0 0.0
    %2843 = vmatprep.subr.mxu0 0.0
    %2844 = vmatpush1.msra.mxu0 0.0
    %2845 = vmatprep.subr.mxu0 0.0
    %2846 = vmatpush1.msra.mxu0 0.0
    %2847 = vmatprep.subr.mxu0 0.0
    %2848 = vmatpush1.msra.mxu0 0.0
    %2849 = vmatprep.subr.mxu0 0.0
    %2850 = vmatpush1.msra.mxu0 0.0
    %2851 = vmatprep.subr.mxu0 0.0
    %2852 = vmatpush1.msra.mxu0 0.0
    %2853 = vmatprep.subr.mxu0 0.0
    %2854 = vmatpush1.msra.mxu0 0.0
    %2855 = vmatprep.subr.mxu0 0.0
    %2856 = vmatpush1.msra.mxu0 0.0
    %2857 = vmatprep.subr.mxu0 0.0
    %2858 = vmatpush1.msra.mxu0 0.0
    %2859 = vmatprep.subr.mxu0 0.0
    %2860 = vmatpush1.msra.mxu0 0.0
    %2861 = vmatprep.subr.mxu0 0.0
    %2862 = vmatpush1.msra.mxu0 0.0
    %2863 = vmatprep.subr.mxu0 0.0
    %2864 = vmatpush1.msra.mxu0 0.0
    %2865 = vmatprep.subr.mxu0 0.0
    %2866 = vmatpush1.msra.mxu0 0.0
    %2867 = vmatprep.subr.mxu0 0.0
    %2868 = vmatpush1.msra.mxu0 0.0
    %2869 = vmatprep.subr.mxu0 0.0
    %2870 = vmatpush1.msra.mxu0 0.0
    %2871 = vmatprep.subr.mxu0 0.0
    %2872 = vmatpush1.msra.mxu0 0.0
    %2873 = vmatprep.subr.mxu0 0.0
    %2874 = vmatpush1.msra.mxu0 0.0
    %2875 = vmatprep.subr.mxu0 0.0
    %2876 = vmatpush1.msra.mxu0 0.0
    %2877 = vmatprep.subr.mxu0 0.0
    %2878 = vmatpush1.msra.mxu0 0.0
    %2879 = vmatprep.subr.mxu0 0.0
    %2880 = vmatpush1.msra.mxu0 0.0
    %2881 = vmatprep.subr.mxu0 0.0
    %2882 = vmatpush1.msra.mxu0 0.0
    %2883 = vmatprep.subr.mxu0 0.0
    %2884 = vmatpush1.msra.mxu0 0.0
    %2885 = vmatprep.subr.mxu0 0.0
    %2886 = vmatpush1.msra.mxu0 0.0
    %2887 = vmatprep.subr.mxu0 0.0
    %2888 = vmatpush1.msra.mxu0 0.0
    %2889 = vmatprep.subr.mxu0 0.0
    %2890 = vmatpush1.msra.mxu0 0.0
    %2891 = vmatprep.subr.mxu0 0.0
    %2892 = vmatpush1.msra.mxu0 0.0
    %2893 = vmatprep.subr.mxu0 0.0
    %2894 = vmatpush1.msra.mxu0 0.0
    %2895 = vmatprep.subr.mxu0 0.0
    %2896 = vmatpush1.msra.mxu0 0.0
    %2897 = vmatprep.subr.mxu0 0.0
    %2898 = vmatpush1.msra.mxu0 0.0
    %2899 = vmatprep.mubr.f32.mxu0 0.0
    %2900 = vmatmul.mubr.f32.gmra.mrb[0].mxu0 %v2833
    %v2901 = vpop.f32.mrb[0].mxu0
    %v2902 = vadd.f32 0.0, %v2901
    %v2903 = vpop.f32.mrb[0].mxu0
    %2904 = vdwg.mxu0
    %2905 = vrot.lane.b32.xlu0 %v320, 48
    %v2906 = vpop.permute.xlu0 %2905
    %v2909 = vsel %vm1087, %v2522, 0
    %2911 = vmatprep.subr.mxu0 0.0
    %2912 = vmatpush1.msra.mxu0 %v2906
    %2913 = vmatprep.subr.mxu0 0.0
    %2914 = vmatpush1.msra.mxu0 0.0
    %2915 = vmatprep.subr.mxu0 0.0
    %2916 = vmatpush1.msra.mxu0 0.0
    %2917 = vmatprep.subr.mxu0 0.0
    %2918 = vmatpush1.msra.mxu0 0.0
    %2919 = vmatprep.subr.mxu0 0.0
    %2920 = vmatpush1.msra.mxu0 0.0
    %2921 = vmatprep.subr.mxu0 0.0
    %2922 = vmatpush1.msra.mxu0 0.0
    %2923 = vmatprep.subr.mxu0 0.0
    %2924 = vmatpush1.msra.mxu0 0.0
    %2925 = vmatprep.subr.mxu0 0.0
    %2926 = vmatpush1.msra.mxu0 0.0
    %2927 = vmatprep.subr.mxu0 0.0
    %2928 = vmatpush1.msra.mxu0 0.0
    %2929 = vmatprep.subr.mxu0 0.0
    %2930 = vmatpush1.msra.mxu0 0.0
    %2931 = vmatprep.subr.mxu0 0.0
    %2932 = vmatpush1.msra.mxu0 0.0
    %2933 = vmatprep.subr.mxu0 0.0
    %2934 = vmatpush1.msra.mxu0 0.0
    %2935 = vmatprep.subr.mxu0 0.0
    %2936 = vmatpush1.msra.mxu0 0.0
    %2937 = vmatprep.subr.mxu0 0.0
    %2938 = vmatpush1.msra.mxu0 0.0
    %2939 = vmatprep.subr.mxu0 0.0
    %2940 = vmatpush1.msra.mxu0 0.0
    %2941 = vmatprep.subr.mxu0 0.0
    %2942 = vmatpush1.msra.mxu0 0.0
    %2943 = vmatprep.subr.mxu0 0.0
    %2944 = vmatpush1.msra.mxu0 0.0
    %2945 = vmatprep.subr.mxu0 0.0
    %2946 = vmatpush1.msra.mxu0 0.0
    %2947 = vmatprep.subr.mxu0 0.0
    %2948 = vmatpush1.msra.mxu0 0.0
    %2949 = vmatprep.subr.mxu0 0.0
    %2950 = vmatpush1.msra.mxu0 0.0
    %2951 = vmatprep.subr.mxu0 0.0
    %2952 = vmatpush1.msra.mxu0 0.0
    %2953 = vmatprep.subr.mxu0 0.0
    %2954 = vmatpush1.msra.mxu0 0.0
    %2955 = vmatprep.subr.mxu0 0.0
    %2956 = vmatpush1.msra.mxu0 0.0
    %2957 = vmatprep.subr.mxu0 0.0
    %2958 = vmatpush1.msra.mxu0 0.0
    %2959 = vmatprep.subr.mxu0 0.0
    %2960 = vmatpush1.msra.mxu0 0.0
    %2961 = vmatprep.subr.mxu0 0.0
    %2962 = vmatpush1.msra.mxu0 0.0
    %2963 = vmatprep.subr.mxu0 0.0
    %2964 = vmatpush1.msra.mxu0 0.0
    %2965 = vmatprep.subr.mxu0 0.0
    %2966 = vmatpush1.msra.mxu0 0.0
    %2967 = vmatprep.subr.mxu0 0.0
    %2968 = vmatpush1.msra.mxu0 0.0
    %2969 = vmatprep.subr.mxu0 0.0
    %2970 = vmatpush1.msra.mxu0 0.0
    %2971 = vmatprep.subr.mxu0 0.0
    %2972 = vmatpush1.msra.mxu0 0.0
    %2973 = vmatprep.subr.mxu0 0.0
    %2974 = vmatpush1.msra.mxu0 0.0
    %2975 = vmatprep.mubr.f32.mxu0 0.0
    %2976 = vmatmul.mubr.f32.gmra.mrb[0].mxu0 %v2909
    %v2977 = vpop.f32.mrb[0].mxu0
    %v2978 = vadd.f32 0.0, %v2977
    %v2979 = vpop.f32.mrb[0].mxu0
    %2980 = vdwg.mxu0
    %2981 = vrot.lane.b32.xlu0 %v325, 48
    %v2982 = vpop.permute.xlu0 %2981
    %v2985 = vsel %vm1087, %v2523, 0
    %2987 = vmatprep.subr.mxu0 0.0
    %2988 = vmatpush1.msra.mxu0 %v2982
    %2989 = vmatprep.subr.mxu0 0.0
    %2990 = vmatpush1.msra.mxu0 0.0
    %2991 = vmatprep.subr.mxu0 0.0
    %2992 = vmatpush1.msra.mxu0 0.0
    %2993 = vmatprep.subr.mxu0 0.0
    %2994 = vmatpush1.msra.mxu0 0.0
    %2995 = vmatprep.subr.mxu0 0.0
    %2996 = vmatpush1.msra.mxu0 0.0
    %2997 = vmatprep.subr.mxu0 0.0
    %2998 = vmatpush1.msra.mxu0 0.0
    %2999 = vmatprep.subr.mxu0 0.0
    %3000 = vmatpush1.msra.mxu0 0.0
    %3001 = vmatprep.subr.mxu0 0.0
    %3002 = vmatpush1.msra.mxu0 0.0
    %3003 = vmatprep.subr.mxu0 0.0
    %3004 = vmatpush1.msra.mxu0 0.0
    %3005 = vmatprep.subr.mxu0 0.0
    %3006 = vmatpush1.msra.mxu0 0.0
    %3007 = vmatprep.subr.mxu0 0.0
    %3008 = vmatpush1.msra.mxu0 0.0
    %3009 = vmatprep.subr.mxu0 0.0
    %3010 = vmatpush1.msra.mxu0 0.0
    %3011 = vmatprep.subr.mxu0 0.0
    %3012 = vmatpush1.msra.mxu0 0.0
    %3013 = vmatprep.subr.mxu0 0.0
    %3014 = vmatpush1.msra.mxu0 0.0
    %3015 = vmatprep.subr.mxu0 0.0
    %3016 = vmatpush1.msra.mxu0 0.0
    %3017 = vmatprep.subr.mxu0 0.0
    %3018 = vmatpush1.msra.mxu0 0.0
    %3019 = vmatprep.subr.mxu0 0.0
    %3020 = vmatpush1.msra.mxu0 0.0
    %3021 = vmatprep.subr.mxu0 0.0
    %3022 = vmatpush1.msra.mxu0 0.0
    %3023 = vmatprep.subr.mxu0 0.0
    %3024 = vmatpush1.msra.mxu0 0.0
    %3025 = vmatprep.subr.mxu0 0.0
    %3026 = vmatpush1.msra.mxu0 0.0
    %3027 = vmatprep.subr.mxu0 0.0
    %3028 = vmatpush1.msra.mxu0 0.0
    %3029 = vmatprep.subr.mxu0 0.0
    %3030 = vmatpush1.msra.mxu0 0.0
    %3031 = vmatprep.subr.mxu0 0.0
    %3032 = vmatpush1.msra.mxu0 0.0
    %3033 = vmatprep.subr.mxu0 0.0
    %3034 = vmatpush1.msra.mxu0 0.0
    %3035 = vmatprep.subr.mxu0 0.0
    %3036 = vmatpush1.msra.mxu0 0.0
    %3037 = vmatprep.subr.mxu0 0.0
    %3038 = vmatpush1.msra.mxu0 0.0
    %3039 = vmatprep.subr.mxu0 0.0
    %3040 = vmatpush1.msra.mxu0 0.0
    %3041 = vmatprep.subr.mxu0 0.0
    %3042 = vmatpush1.msra.mxu0 0.0
    %3043 = vmatprep.subr.mxu0 0.0
    %3044 = vmatpush1.msra.mxu0 0.0
    %3045 = vmatprep.subr.mxu0 0.0
    %3046 = vmatpush1.msra.mxu0 0.0
    %3047 = vmatprep.subr.mxu0 0.0
    %3048 = vmatpush1.msra.mxu0 0.0
    %3049 = vmatprep.subr.mxu0 0.0
    %3050 = vmatpush1.msra.mxu0 0.0
    %3051 = vmatprep.mubr.f32.mxu0 0.0
    %3052 = vmatmul.mubr.f32.gmra.mrb[0].mxu0 %v2985
    %v3053 = vpop.f32.mrb[0].mxu0
    %v3054 = vadd.f32 0.0, %v3053
    %v3055 = vpop.f32.mrb[0].mxu0
    %3056 = vdwg.mxu0
    %3057 = vrot.lane.b32.xlu0 %v330, 48
    %v3058 = vpop.permute.xlu0 %3057
    %v3061 = vsel %vm1087, %v2524, 0
    %3063 = vmatprep.subr.mxu0 0.0
    %3064 = vmatpush1.msra.mxu0 %v3058
    %3065 = vmatprep.subr.mxu0 0.0
    %3066 = vmatpush1.msra.mxu0 0.0
    %3067 = vmatprep.subr.mxu0 0.0
    %3068 = vmatpush1.msra.mxu0 0.0
    %3069 = vmatprep.subr.mxu0 0.0
    %3070 = vmatpush1.msra.mxu0 0.0
    %3071 = vmatprep.subr.mxu0 0.0
    %3072 = vmatpush1.msra.mxu0 0.0
    %3073 = vmatprep.subr.mxu0 0.0
    %3074 = vmatpush1.msra.mxu0 0.0
    %3075 = vmatprep.subr.mxu0 0.0
    %3076 = vmatpush1.msra.mxu0 0.0
    %3077 = vmatprep.subr.mxu0 0.0
    %3078 = vmatpush1.msra.mxu0 0.0
    %3079 = vmatprep.subr.mxu0 0.0
    %3080 = vmatpush1.msra.mxu0 0.0
    %3081 = vmatprep.subr.mxu0 0.0
    %3082 = vmatpush1.msra.mxu0 0.0
    %3083 = vmatprep.subr.mxu0 0.0
    %3084 = vmatpush1.msra.mxu0 0.0
    %3085 = vmatprep.subr.mxu0 0.0
    %3086 = vmatpush1.msra.mxu0 0.0
    %3087 = vmatprep.subr.mxu0 0.0
    %3088 = vmatpush1.msra.mxu0 0.0
    %3089 = vmatprep.subr.mxu0 0.0
    %3090 = vmatpush1.msra.mxu0 0.0
    %3091 = vmatprep.subr.mxu0 0.0
    %3092 = vmatpush1.msra.mxu0 0.0
    %3093 = vmatprep.subr.mxu0 0.0
    %3094 = vmatpush1.msra.mxu0 0.0
    %3095 = vmatprep.subr.mxu0 0.0
    %3096 = vmatpush1.msra.mxu0 0.0
    %3097 = vmatprep.subr.mxu0 0.0
    %3098 = vmatpush1.msra.mxu0 0.0
    %3099 = vmatprep.subr.mxu0 0.0
    %3100 = vmatpush1.msra.mxu0 0.0
    %3101 = vmatprep.subr.mxu0 0.0
    %3102 = vmatpush1.msra.mxu0 0.0
    %3103 = vmatprep.subr.mxu0 0.0
    %3104 = vmatpush1.msra.mxu0 0.0
    %3105 = vmatprep.subr.mxu0 0.0
    %3106 = vmatpush1.msra.mxu0 0.0
    %3107 = vmatprep.subr.mxu0 0.0
    %3108 = vmatpush1.msra.mxu0 0.0
    %3109 = vmatprep.subr.mxu0 0.0
    %3110 = vmatpush1.msra.mxu0 0.0
    %3111 = vmatprep.subr.mxu0 0.0
    %3112 = vmatpush1.msra.mxu0 0.0
    %3113 = vmatprep.subr.mxu0 0.0
    %3114 = vmatpush1.msra.mxu0 0.0
    %3115 = vmatprep.subr.mxu0 0.0
    %3116 = vmatpush1.msra.mxu0 0.0
    %3117 = vmatprep.subr.mxu0 0.0
    %3118 = vmatpush1.msra.mxu0 0.0
    %3119 = vmatprep.subr.mxu0 0.0
    %3120 = vmatpush1.msra.mxu0 0.0
    %3121 = vmatprep.subr.mxu0 0.0
    %3122 = vmatpush1.msra.mxu0 0.0
    %3123 = vmatprep.subr.mxu0 0.0
    %3124 = vmatpush1.msra.mxu0 0.0
    %3125 = vmatprep.subr.mxu0 0.0
    %3126 = vmatpush1.msra.mxu0 0.0
    %3127 = vmatprep.mubr.f32.mxu0 0.0
    %3128 = vmatmul.mubr.f32.gmra.mrb[0].mxu0 %v3061
    %v3129 = vpop.f32.mrb[0].mxu0
    %v3130 = vadd.f32 0.0, %v3129
    %v3131 = vpop.f32.mrb[0].mxu0
    %3132 = vdwg.mxu0
    %v3133 = vld [vmem:[%s5 + $0x10] sm:$0xff]
    %v3134 = vld [vmem:[%s5 + $0x18] sm:$0xff]
    %v3143 = vrot.slane %v2674, 7
    %v3144 = vsel %vm1704, %v3143, %v2598
    %v3145 = vrot.slane %v2750, 6
    %v3146 = vsel %vm1707, %v3145, %v3144
    %v3147 = vrot.slane %v2826, 5
    %v3148 = vsel %vm1710, %v3147, %v3146
    %v3149 = vrot.slane %v2902, 4
    %v3150 = vsel %vm1713, %v3149, %v3148
    %v3151 = vrot.slane %v2978, 3
    %v3152 = vsel %vm1716, %v3151, %v3150
    %v3153 = vrot.slane %v3054, 2
    %v3154 = vsel %vm1719, %v3153, %v3152
    %v3155 = vrot.slane %v3130, 1
    %v3156 = vsel %vm1722, %v3155, %v3154
    %v3157 = vsel %vm365, %v3156, 0
    %3159 = vmatprep.subr.mxu0 0.0
    %3160 = vmatpush1.msra.mxu0 %v3133
    %3161 = vmatprep.subr.mxu0 0.0
    %3162 = vmatpush1.msra.mxu0 %v3134
    %3163 = vmatprep.subr.mxu0 0.0
    %3164 = vmatpush1.msra.mxu0 0.0
    %3165 = vmatprep.subr.mxu0 0.0
    %3166 = vmatpush1.msra.mxu0 0.0
    %3167 = vmatprep.subr.mxu0 0.0
    %3168 = vmatpush1.msra.mxu0 0.0
    %3169 = vmatprep.subr.mxu0 0.0
    %3170 = vmatpush1.msra.mxu0 0.0
    %3171 = vmatprep.subr.mxu0 0.0
    %3172 = vmatpush1.msra.mxu0 0.0
    %3173 = vmatprep.subr.mxu0 0.0
    %3174 = vmatpush1.msra.mxu0 0.0
    %3175 = vmatprep.subr.mxu0 0.0
    %3176 = vmatpush1.msra.mxu0 0.0
    %3177 = vmatprep.subr.mxu0 0.0
    %3178 = vmatpush1.msra.mxu0 0.0
    %3179 = vmatprep.subr.mxu0 0.0
    %3180 = vmatpush1.msra.mxu0 0.0
    %3181 = vmatprep.subr.mxu0 0.0
    %3182 = vmatpush1.msra.mxu0 0.0
    %3183 = vmatprep.subr.mxu0 0.0
    %3184 = vmatpush1.msra.mxu0 0.0
    %3185 = vmatprep.subr.mxu0 0.0
    %3186 = vmatpush1.msra.mxu0 0.0
    %3187 = vmatprep.subr.mxu0 0.0
    %3188 = vmatpush1.msra.mxu0 0.0
    %3189 = vmatprep.subr.mxu0 0.0
    %3190 = vmatpush1.msra.mxu0 0.0
    %3191 = vmatprep.subr.mxu0 0.0
    %3192 = vmatpush1.msra.mxu0 0.0
    %3193 = vmatprep.subr.mxu0 0.0
    %3194 = vmatpush1.msra.mxu0 0.0
    %3195 = vmatprep.subr.mxu0 0.0
    %3196 = vmatpush1.msra.mxu0 0.0
    %3197 = vmatprep.subr.mxu0 0.0
    %3198 = vmatpush1.msra.mxu0 0.0
    %3199 = vmatprep.subr.mxu0 0.0
    %3200 = vmatpush1.msra.mxu0 0.0
    %3201 = vmatprep.subr.mxu0 0.0
    %3202 = vmatpush1.msra.mxu0 0.0
    %3203 = vmatprep.subr.mxu0 0.0
    %3204 = vmatpush1.msra.mxu0 0.0
    %3205 = vmatprep.subr.mxu0 0.0
    %3206 = vmatpush1.msra.mxu0 0.0
    %3207 = vmatprep.subr.mxu0 0.0
    %3208 = vmatpush1.msra.mxu0 0.0
    %3209 = vmatprep.subr.mxu0 0.0
    %3210 = vmatpush1.msra.mxu0 0.0
    %3211 = vmatprep.subr.mxu0 0.0
    %3212 = vmatpush1.msra.mxu0 0.0
    %3213 = vmatprep.subr.mxu0 0.0
    %3214 = vmatpush1.msra.mxu0 0.0
    %3215 = vmatprep.subr.mxu0 0.0
    %3216 = vmatpush1.msra.mxu0 0.0
    %3217 = vmatprep.subr.mxu0 0.0
    %3218 = vmatpush1.msra.mxu0 0.0
    %3219 = vmatprep.subr.mxu0 0.0
    %3220 = vmatpush1.msra.mxu0 0.0
    %3221 = vmatprep.subr.mxu0 0.0
    %3222 = vmatpush1.msra.mxu0 0.0
    %3223 = vmatprep.mubr.f32.mxu0 0.0
    %3224 = vmatmul.mubr.f32.gmra.mrb[0].mxu0 %v3157
    %v3225 = vpop.f32.mrb[0].mxu0
    %v3226 = vadd.f32 0.0, %v3225
    %v3227 = vpop.f32.mrb[0].mxu0
    %3228 = vdwg.mxu0
    %v3229 = vadd.f32 %v1796, %v3226
    %v3230 = vrot.slane %v186, 7
    %v3231 = vsel %vm1704, %v3230, %v185
    %v3232 = vrot.slane %v187, 6
    %v3233 = vsel %vm1707, %v3232, %v3231
    %v3234 = vrot.slane %v188, 5
    %v3235 = vsel %vm1710, %v3234, %v3233
    %v3236 = vrot.slane %v189, 4
    %v3237 = vsel %vm1713, %v3236, %v3235
    %v3238 = vrot.slane %v190, 3
    %v3239 = vsel %vm1716, %v3238, %v3237
    %v3240 = vrot.slane %v191, 2
    %v3241 = vsel %vm1719, %v3240, %v3239
    %v3242 = vrot.slane %v192, 1
    %v3243 = vsel %vm1722, %v3242, %v3241
    %v3245 = vadd.f32 %v3229, %v3243
    %v3246 = vsel %vm63, %v3245, 0.0
    %3247 = vadd.xlane.f32.xlu0 %v3246
    %v3248 = vpop.xlane.xlu0 %3247
    %v3249 = vmul.f32 %v3248, %v88
    %v3250 = vsub.f32 %v3245, %v3249
    %v3251 = vmul.f32 %v3250, %v3250
    %v3252 = vsel %vm63, %v3251, 0.0
    %3253 = vadd.xlane.f32.xlu0 %v3252
    %v3254 = vpop.xlane.xlu0 %3253
    %v3255 = vmul.f32 %v3254, %v88
    %v3256 = vadd.f32 %v3255, 1e-12
    %v3257 = vrsqrt.pop %v3256
    %v3258 = vmul.f32 %v3250, %v3257
    %v3259 = vlaneseq
    %v3260 = vshrl.u32 %v3259, 7
    %v3261 = vsub.s32 3, %v3260
    %v3262 = vrot.slane %v54, %v3261
    %v3263 = vmul.f32 %v3258, %v3262
    %v3264 = vlaneseq
    %v3265 = vshrl.u32 %v3264, 7
    %v3266 = vsub.s32 4, %v3265
    %v3267 = vrot.slane %v54, %v3266
    %v3268 = vadd.f32 %v3263, %v3267
    %v3269 = vld [vmem:[%s6] sm:$0xff]
    %v3270 = vld [vmem:[%s6 + $0x8] sm:$0xff]
    %v3271 = vld [vmem:[%s6 + $0x10] sm:$0xff]
    %v3272 = vld [vmem:[%s6 + $0x18] sm:$0xff]
    %v3273 = vld [vmem:[%s7] sm:$0x1]
    %v3275 = vlaneseq
    %v3276 = vshrl.u32 %v3275, 7
    %v3277 = vsub.s32 0, %v3276
    %v3278 = vrot.slane %v3273, %v3277
    %v3281 = vsel %vm63, %v3268, 0
    %3283 = vmatprep.subr.mxu0 0.0
    %3284 = vmatpush1.msra.mxu0 %v3269
    %3285 = vmatprep.subr.mxu0 0.0
    %3286 = vmatpush1.msra.mxu0 %v3270
    %3287 = vmatprep.subr.mxu0 0.0
    %3288 = vmatpush1.msra.mxu0 %v3271
    %3289 = vmatprep.subr.mxu0 0.0
    %3290 = vmatpush1.msra.mxu0 %v3272
    %3291 = vmatprep.subr.mxu0 0.0
    %3292 = vmatpush1.msra.mxu0 0.0
    %3293 = vmatprep.subr.mxu0 0.0
    %3294 = vmatpush1.msra.mxu0 0.0
    %3295 = vmatprep.subr.mxu0 0.0
    %3296 = vmatpush1.msra.mxu0 0.0
    %3297 = vmatprep.subr.mxu0 0.0
    %3298 = vmatpush1.msra.mxu0 0.0
    %3299 = vmatprep.subr.mxu0 0.0
    %3300 = vmatpush1.msra.mxu0 0.0
    %3301 = vmatprep.subr.mxu0 0.0
    %3302 = vmatpush1.msra.mxu0 0.0
    %3303 = vmatprep.subr.mxu0 0.0
    %3304 = vmatpush1.msra.mxu0 0.0
    %3305 = vmatprep.subr.mxu0 0.0
    %3306 = vmatpush1.msra.mxu0 0.0
    %3307 = vmatprep.subr.mxu0 0.0
    %3308 = vmatpush1.msra.mxu0 0.0
    %3309 = vmatprep.subr.mxu0 0.0
    %3310 = vmatpush1.msra.mxu0 0.0
    %3311 = vmatprep.subr.mxu0 0.0
    %3312 = vmatpush1.msra.mxu0 0.0
    %3313 = vmatprep.subr.mxu0 0.0
    %3314 = vmatpush1.msra.mxu0 0.0
    %3315 = vmatprep.subr.mxu0 0.0
    %3316 = vmatpush1.msra.mxu0 0.0
    %3317 = vmatprep.subr.mxu0 0.0
    %3318 = vmatpush1.msra.mxu0 0.0
    %3319 = vmatprep.subr.mxu0 0.0
    %3320 = vmatpush1.msra.mxu0 0.0
    %3321 = vmatprep.subr.mxu0 0.0
    %3322 = vmatpush1.msra.mxu0 0.0
    %3323 = vmatprep.subr.mxu0 0.0
    %3324 = vmatpush1.msra.mxu0 0.0
    %3325 = vmatprep.subr.mxu0 0.0
    %3326 = vmatpush1.msra.mxu0 0.0
    %3327 = vmatprep.subr.mxu0 0.0
    %3328 = vmatpush1.msra.mxu0 0.0
    %3329 = vmatprep.subr.mxu0 0.0
    %3330 = vmatpush1.msra.mxu0 0.0
    %3331 = vmatprep.subr.mxu0 0.0
    %3332 = vmatpush1.msra.mxu0 0.0
    %3333 = vmatprep.subr.mxu0 0.0
    %3334 = vmatpush1.msra.mxu0 0.0
    %3335 = vmatprep.subr.mxu0 0.0
    %3336 = vmatpush1.msra.mxu0 0.0
    %3337 = vmatprep.subr.mxu0 0.0
    %3338 = vmatpush1.msra.mxu0 0.0
    %3339 = vmatprep.subr.mxu0 0.0
    %3340 = vmatpush1.msra.mxu0 0.0
    %3341 = vmatprep.subr.mxu0 0.0
    %3342 = vmatpush1.msra.mxu0 0.0
    %3343 = vmatprep.subr.mxu0 0.0
    %3344 = vmatpush1.msra.mxu0 0.0
    %3345 = vmatprep.subr.mxu0 0.0
    %3346 = vmatpush1.msra.mxu0 0.0
    %3347 = vmatprep.mubr.f32.mxu0 0.0
    %3348 = vmatmul.mubr.f32.gmra.mrb[0].mxu0 %v3281
    %v3349 = vpop.f32.mrb[0].mxu0
    %v3350 = vadd.f32 %v3278, %v3349
    %v3351 = vpop.f32.mrb[0].mxu0
    %3352 = vdwg.mxu0
    %v3353 = vmul.f32 %v3350, %v3350
    %v3354 = vmul.f32 %v3350, %v3353
    %v3355 = vmul.f32 %v3354, 0.044715
    %v3356 = vadd.f32 %v3350, %v3355
    %v3357 = vmul.f32 %v3356, 0.7978846
    %v3358 = vtanh.pop %v3357
    %v3359 = vadd.f32 %v3358, 1.0
    %v3360 = vmul.f32 %v3359, 0.5
    %v3361 = vmul.f32 %v3350, %v3360
    %v3362 = vld [vmem:[%s8] sm:$0xff]
    %v3363 = vld [vmem:[%s8 + $0x8] sm:$0xff]
    %v3364 = vld [vmem:[%s8 + $0x10] sm:$0xff]
    %v3365 = vld [vmem:[%s8 + $0x18] sm:$0xff]
    %v3366 = vld [vmem:[%s8 + $0x20] sm:$0xff]
    %v3367 = vld [vmem:[%s8 + $0x28] sm:$0xff]
    %v3368 = vld [vmem:[%s8 + $0x30] sm:$0xff]
    %v3369 = vld [vmem:[%s8 + $0x38] sm:$0xff]
    %v3370 = vlaneseq
    %v3371 = vshrl.u32 %v3370, 7
    %v3372 = vsub.s32 5, %v3371
    %v3373 = vrot.slane %v54, %v3372
    %vm3374 = vcmask 523264
    %v3376 = vsel %vm3374, %v3361, 0
    %3378 = vmatprep.subr.mxu0 0.0
    %3379 = vmatpush1.msra.mxu0 %v3362
    %3380 = vmatprep.subr.mxu0 0.0
    %3381 = vmatpush1.msra.mxu0 %v3363
    %3382 = vmatprep.subr.mxu0 0.0
    %3383 = vmatpush1.msra.mxu0 %v3364
    %3384 = vmatprep.subr.mxu0 0.0
    %3385 = vmatpush1.msra.mxu0 %v3365
    %3386 = vmatprep.subr.mxu0 0.0
    %3387 = vmatpush1.msra.mxu0 %v3366
    %3388 = vmatprep.subr.mxu0 0.0
    %3389 = vmatpush1.msra.mxu0 %v3367
    %3390 = vmatprep.subr.mxu0 0.0
    %3391 = vmatpush1.msra.mxu0 %v3368
    %3392 = vmatprep.subr.mxu0 0.0
    %3393 = vmatpush1.msra.mxu0 %v3369
    %3394 = vmatprep.subr.mxu0 0.0
    %3395 = vmatpush1.msra.mxu0 0.0
    %3396 = vmatprep.subr.mxu0 0.0
    %3397 = vmatpush1.msra.mxu0 0.0
    %3398 = vmatprep.subr.mxu0 0.0
    %3399 = vmatpush1.msra.mxu0 0.0
    %3400 = vmatprep.subr.mxu0 0.0
    %3401 = vmatpush1.msra.mxu0 0.0
    %3402 = vmatprep.subr.mxu0 0.0
    %3403 = vmatpush1.msra.mxu0 0.0
    %3404 = vmatprep.subr.mxu0 0.0
    %3405 = vmatpush1.msra.mxu0 0.0
    %3406 = vmatprep.subr.mxu0 0.0
    %3407 = vmatpush1.msra.mxu0 0.0
    %3408 = vmatprep.subr.mxu0 0.0
    %3409 = vmatpush1.msra.mxu0 0.0
    %3410 = vmatprep.subr.mxu0 0.0
    %3411 = vmatpush1.msra.mxu0 0.0
    %3412 = vmatprep.subr.mxu0 0.0
    %3413 = vmatpush1.msra.mxu0 0.0
    %3414 = vmatprep.subr.mxu0 0.0
    %3415 = vmatpush1.msra.mxu0 0.0
    %3416 = vmatprep.subr.mxu0 0.0
    %3417 = vmatpush1.msra.mxu0 0.0
    %3418 = vmatprep.subr.mxu0 0.0
    %3419 = vmatpush1.msra.mxu0 0.0
    %3420 = vmatprep.subr.mxu0 0.0
    %3421 = vmatpush1.msra.mxu0 0.0
    %3422 = vmatprep.subr.mxu0 0.0
    %3423 = vmatpush1.msra.mxu0 0.0
    %3424 = vmatprep.subr.mxu0 0.0
    %3425 = vmatpush1.msra.mxu0 0.0
    %3426 = vmatprep.subr.mxu0 0.0
    %3427 = vmatpush1.msra.mxu0 0.0
    %3428 = vmatprep.subr.mxu0 0.0
    %3429 = vmatpush1.msra.mxu0 0.0
    %3430 = vmatprep.subr.mxu0 0.0
    %3431 = vmatpush1.msra.mxu0 0.0
    %3432 = vmatprep.subr.mxu0 0.0
    %3433 = vmatpush1.msra.mxu0 0.0
    %3434 = vmatprep.subr.mxu0 0.0
    %3435 = vmatpush1.msra.mxu0 0.0
    %3436 = vmatprep.subr.mxu0 0.0
    %3437 = vmatpush1.msra.mxu0 0.0
    %3438 = vmatprep.subr.mxu0 0.0
    %3439 = vmatpush1.msra.mxu0 0.0
    %3440 = vmatprep.subr.mxu0 0.0
    %3441 = vmatpush1.msra.mxu0 0.0
    %3442 = vmatprep.mubr.f32.mxu0 0.0
    %3443 = vmatmul.mubr.f32.gmra.mrb[0].mxu0 %v3376
    %v3444 = vpop.f32.mrb[0].mxu0
    %v3445 = vadd.f32 %v3373, %v3444
    %v3446 = vpop.f32.mrb[0].mxu0
    %3447 = vdwg.mxu0
    %v3448 = vadd.f32 %v3445, %v3268
    %v3449 = vsel %vm63, %v3448, 0.0
    %3450 = vadd.xlane.f32.xlu0 %v3449
    %v3451 = vpop.xlane.xlu0 %3450
    %v3452 = vmul.f32 %v3451, %v88
    %v3453 = vsub.f32 %v3448, %v3452
    %v3454 = vmul.f32 %v3453, %v3453
    %v3455 = vsel %vm63, %v3454, 0.0
    %3456 = vadd.xlane.f32.xlu0 %v3455
    %v3457 = vpop.xlane.xlu0 %3456
    %v3458 = vmul.f32 %v3457, %v88
    %v3459 = vadd.f32 %v3458, 1e-12
    %v3460 = vrsqrt.pop %v3459
    %v3461 = vmul.f32 %v3453, %v3460
    %v3462 = vlaneseq
    %v3463 = vshrl.u32 %v3462, 7
    %v3464 = vsub.s32 6, %v3463
    %v3465 = vrot.slane %v54, %v3464
    %v3466 = vmul.f32 %v3461, %v3465
    %v3467 = vlaneseq
    %v3468 = vshrl.u32 %v3467, 7
    %v3469 = vsub.s32 7, %v3468
    %v3470 = vrot.slane %v54, %v3469
    %v3471 = vadd.f32 %v3466, %v3470
    %v3472 = vld [vmem:[%s2] sm:$0x3]
    %vm3473 = vcmask 25600
    %v3474 = vsel %vm3473, %v3472, 0.0
    %3475 = vadd.xlane.f32.xlu0 %v3474
    %v3476 = vpop.xlane.xlu0 %3475
    %v3477 = vmax.f32 %v3476, 1.0
    %v3478 = vld [vmem:[%s10] sm:$0xff]
    %v3479 = vld [vmem:[%s10 + $0x8] sm:$0xff]
    %v3480 = vld [vmem:[%s10 + $0x10] sm:$0xff]
    %v3481 = vld [vmem:[%s10 + $0x18] sm:$0xff]
    %v3482 = vld [vmem:[%s11] sm:$0x1]
    %v3484 = vlaneseq
    %v3485 = vshrl.u32 %v3484, 7
    %v3486 = vsub.s32 0, %v3485
    %v3487 = vrot.slane %v3482, %v3486
    %v3490 = vsel %vm63, %v3471, 0
    %3492 = vmatprep.subr.mxu0 0.0
    %3493 = vmatpush1.msra.mxu0 %v3478
    %3494 = vmatprep.subr.mxu0 0.0
    %3495 = vmatpush1.msra.mxu0 %v3479
    %3496 = vmatprep.subr.mxu0 0.0
    %3497 = vmatpush1.msra.mxu0 %v3480
    %3498 = vmatprep.subr.mxu0 0.0
    %3499 = vmatpush1.msra.mxu0 %v3481
    %3500 = vmatprep.subr.mxu0 0.0
    %3501 = vmatpush1.msra.mxu0 0.0
    %3502 = vmatprep.subr.mxu0 0.0
    %3503 = vmatpush1.msra.mxu0 0.0
    %3504 = vmatprep.subr.mxu0 0.0
    %3505 = vmatpush1.msra.mxu0 0.0
    %3506 = vmatprep.subr.mxu0 0.0
    %3507 = vmatpush1.msra.mxu0 0.0
    %3508 = vmatprep.subr.mxu0 0.0
    %3509 = vmatpush1.msra.mxu0 0.0
    %3510 = vmatprep.subr.mxu0 0.0
    %3511 = vmatpush1.msra.mxu0 0.0
    %3512 = vmatprep.subr.mxu0 0.0
    %3513 = vmatpush1.msra.mxu0 0.0
    %3514 = vmatprep.subr.mxu0 0.0
    %3515 = vmatpush1.msra.mxu0 0.0
    %3516 = vmatprep.subr.mxu0 0.0
    %3517 = vmatpush1.msra.mxu0 0.0
    %3518 = vmatprep.subr.mxu0 0.0
    %3519 = vmatpush1.msra.mxu0 0.0
    %3520 = vmatprep.subr.mxu0 0.0
    %3521 = vmatpush1.msra.mxu0 0.0
    %3522 = vmatprep.subr.mxu0 0.0
    %3523 = vmatpush1.msra.mxu0 0.0
    %3524 = vmatprep.subr.mxu0 0.0
    %3525 = vmatpush1.msra.mxu0 0.0
    %3526 = vmatprep.subr.mxu0 0.0
    %3527 = vmatpush1.msra.mxu0 0.0
    %3528 = vmatprep.subr.mxu0 0.0
    %3529 = vmatpush1.msra.mxu0 0.0
    %3530 = vmatprep.subr.mxu0 0.0
    %3531 = vmatpush1.msra.mxu0 0.0
    %3532 = vmatprep.subr.mxu0 0.0
    %3533 = vmatpush1.msra.mxu0 0.0
    %3534 = vmatprep.subr.mxu0 0.0
    %3535 = vmatpush1.msra.mxu0 0.0
    %3536 = vmatprep.subr.mxu0 0.0
    %3537 = vmatpush1.msra.mxu0 0.0
    %3538 = vmatprep.subr.mxu0 0.0
    %3539 = vmatpush1.msra.mxu0 0.0
    %3540 = vmatprep.subr.mxu0 0.0
    %3541 = vmatpush1.msra.mxu0 0.0
    %3542 = vmatprep.subr.mxu0 0.0
    %3543 = vmatpush1.msra.mxu0 0.0
    %3544 = vmatprep.subr.mxu0 0.0
    %3545 = vmatpush1.msra.mxu0 0.0
    %3546 = vmatprep.subr.mxu0 0.0
    %3547 = vmatpush1.msra.mxu0 0.0
    %3548 = vmatprep.subr.mxu0 0.0
    %3549 = vmatpush1.msra.mxu0 0.0
    %3550 = vmatprep.subr.mxu0 0.0
    %3551 = vmatpush1.msra.mxu0 0.0
    %3552 = vmatprep.subr.mxu0 0.0
    %3553 = vmatpush1.msra.mxu0 0.0
    %3554 = vmatprep.subr.mxu0 0.0
    %3555 = vmatpush1.msra.mxu0 0.0
    %3556 = vmatprep.mubr.f32.mxu0 0.0
    %3557 = vmatmul.mubr.f32.gmra.mrb[0].mxu0 %v3490
    %v3558 = vpop.f32.mrb[0].mxu0
    %v3559 = vadd.f32 %v3487, %v3558
    %v3560 = vpop.f32.mrb[0].mxu0
    %3561 = vdwg.mxu0
    %v3563 = vcombine.high %v3559, %v3559
    %v3565 = vld [vmem:[%s12] sm:$0xff]
    %v3566 = vld [vmem:[%s12 + $0x8] sm:$0xff]
    %vm3567 = vcmp.gt.f32.partialorder %v3477, 0.0
    %v3568 = vsel %vm3567, 1, 0
    %v3569 = vcvt.s32.f32 %v3568
    %v3571 = vsel %vm365, 0.0, 0
    %3573 = vmatprep.subr.mxu0 0.0
    %3574 = vmatpush1.msra.mxu0 %v3565
    %3575 = vmatprep.subr.mxu0 0.0
    %3576 = vmatpush1.msra.mxu0 %v3566
    %3577 = vmatprep.subr.mxu0 0.0
    %3578 = vmatpush1.msra.mxu0 0.0
    %3579 = vmatprep.subr.mxu0 0.0
    %3580 = vmatpush1.msra.mxu0 0.0
    %3581 = vmatprep.subr.mxu0 0.0
    %3582 = vmatpush1.msra.mxu0 0.0
    %3583 = vmatprep.subr.mxu0 0.0
    %3584 = vmatpush1.msra.mxu0 0.0
    %3585 = vmatprep.subr.mxu0 0.0
    %3586 = vmatpush1.msra.mxu0 0.0
    %3587 = vmatprep.subr.mxu0 0.0
    %3588 = vmatpush1.msra.mxu0 0.0
    %3589 = vmatprep.subr.mxu0 0.0
    %3590 = vmatpush1.msra.mxu0 0.0
    %3591 = vmatprep.subr.mxu0 0.0
    %3592 = vmatpush1.msra.mxu0 0.0
    %3593 = vmatprep.subr.mxu0 0.0
    %3594 = vmatpush1.msra.mxu0 0.0
    %3595 = vmatprep.subr.mxu0 0.0
    %3596 = vmatpush1.msra.mxu0 0.0
    %3597 = vmatprep.subr.mxu0 0.0
    %3598 = vmatpush1.msra.mxu0 0.0
    %3599 = vmatprep.subr.mxu0 0.0
    %3600 = vmatpush1.msra.mxu0 0.0
    %3601 = vmatprep.subr.mxu0 0.0
    %3602 = vmatpush1.msra.mxu0 0.0
    %3603 = vmatprep.subr.mxu0 0.0
    %3604 = vmatpush1.msra.mxu0 0.0
    %3605 = vmatprep.subr.mxu0 0.0
    %3606 = vmatpush1.msra.mxu0 0.0
    %3607 = vmatprep.subr.mxu0 0.0
    %3608 = vmatpush1.msra.mxu0 0.0
    %3609 = vmatprep.subr.mxu0 0.0
    %3610 = vmatpush1.msra.mxu0 0.0
    %3611 = vmatprep.subr.mxu0 0.0
    %3612 = vmatpush1.msra.mxu0 0.0
    %3613 = vmatprep.subr.mxu0 0.0
    %3614 = vmatpush1.msra.mxu0 0.0
    %3615 = vmatprep.subr.mxu0 0.0
    %3616 = vmatpush1.msra.mxu0 0.0
    %3617 = vmatprep.subr.mxu0 0.0
    %3618 = vmatpush1.msra.mxu0 0.0
    %3619 = vmatprep.subr.mxu0 0.0
    %3620 = vmatpush1.msra.mxu0 0.0
    %3621 = vmatprep.subr.mxu0 0.0
    %3622 = vmatpush1.msra.mxu0 0.0
    %3623 = vmatprep.subr.mxu0 0.0
    %3624 = vmatpush1.msra.mxu0 0.0
    %3625 = vmatprep.subr.mxu0 0.0
    %3626 = vmatpush1.msra.mxu0 0.0
    %3627 = vmatprep.subr.mxu0 0.0
    %3628 = vmatpush1.msra.mxu0 0.0
    %3629 = vmatprep.subr.mxu0 0.0
    %3630 = vmatpush1.msra.mxu0 0.0
    %3631 = vmatprep.subr.mxu0 0.0
    %3632 = vmatpush1.msra.mxu0 0.0
    %3633 = vmatprep.subr.mxu0 0.0
    %3634 = vmatpush1.msra.mxu0 0.0
    %3635 = vmatprep.subr.mxu0 0.0
    %3636 = vmatpush1.msra.mxu0 0.0
    %3637 = vmatprep.mubr.f32.mxu0 0.0
    %3638 = vmatmul.mubr.f32.gmra.mrb[0].mxu0 %v3571
    %v3639 = vpop.f32.mrb[0].mxu0
    %v3640 = vadd.f32 0.0, %v3639
    %v3641 = vpop.f32.mrb[0].mxu0
    %3642 = vdwg.mxu0
    %v3644 = vrot.slane %v3640, 1
    %v3647 = vadd.f32 %v3559, %v3640
    %v3648 = vadd.f32 %v3563, %v3644
    %v3649 = vxor.u32 %v3647, 2147483648
    %v3650 = vxor.u32 %v3648, 2147483648
    %v3651 = vmul.f32 %v3649, 1.442695
    %v3652 = vpow.pop %v3651
    %v3653 = vmul.f32 %v3650, 1.442695
    %v3654 = vpow.pop %v3653
    %v3655 = vadd.f32 %v3652, 1.0
    %v3656 = vadd.f32 %v3654, 1.0
    %v3657 = vrcp.pop %v3655
    %v3658 = vmul.f32 1.0, %v3657
    %v3659 = vrcp.pop %v3656
    %v3660 = vmul.f32 1.0, %v3659
    %v3661 = vtanh.pop %v3647
    %v3662 = vtanh.pop %v3648
    %v3663 = vmul.f32 %v3658, 0.0
    %v3664 = vmul.f32 %v3660, 0.0
    %3667 = vrot.lane.b32.xlu0 %v3661, 96
    %v3668 = vpop.permute.xlu0 %3667
    %3669 = vrot.lane.b32.xlu0 %v3662, 96
    %v3670 = vpop.permute.xlu0 %3669
    %v3673 = vmul.f32 %v3658, %v3668
    %v3674 = vmul.f32 %v3660, %v3670
    %3677 = vrot.lane.b32.xlu0 %v3673, 16
    %v3678 = vpop.permute.xlu0 %3677
    %3679 = vrot.lane.b32.xlu0 %v3674, 16
    %v3680 = vpop.permute.xlu0 %3679
    %v3683 = vadd.f32 %v3663, %v3678
    %v3684 = vadd.f32 %v3664, %v3680
    %v3685 = vtanh.pop %v3683
    %v3686 = vtanh.pop %v3684
    %3689 = vrot.lane.b32.xlu0 %v3685, 32
    %v3690 = vpop.permute.xlu0 %3689
    %3691 = vrot.lane.b32.xlu0 %v3686, 32
    %v3692 = vpop.permute.xlu0 %3691
    %v3695 = vmul.f32 %v3658, %v3690
    %v3696 = vmul.f32 %v3660, %v3692
    %v3699 = vlaneseq
    %v3700 = vshrl.u32 %v3699, 7
    %v3701 = vsub.s32 0, %v3700
    %v3702 = vrot.slane %v3683, %v3701
    %v3703 = vlaneseq
    %v3704 = vshrl.u32 %v3703, 7
    %v3705 = vsub.s32 0, %v3704
    %v3706 = vrot.slane %v3684, %v3705
    %v3707 = vsel %vm1704, %v3706, %v3702
    %3708 = vrot.lane.b32.xlu0 %v3707, 112
    %v3709 = vpop.permute.xlu0 %3708
    %v3711 = vmul.f32 %v3569, %v3709
    %v3712 = vsub.f32 1.0, %v3569
    %v3713 = vmul.f32 %v3712, 0.0
    %v3714 = vadd.f32 %v3711, %v3713
    %v3717 = vlaneseq
    %v3718 = vshrl.u32 %v3717, 7
    %v3719 = vsub.s32 0, %v3718
    %v3720 = vrot.slane %v3695, %v3719
    %v3721 = vlaneseq
    %v3722 = vshrl.u32 %v3721, 7
    %v3723 = vsub.s32 0, %v3722
    %v3724 = vrot.slane %v3696, %v3723
    %v3725 = vsel %vm1704, %v3724, %v3720
    %3726 = vrot.lane.b32.xlu0 %v3725, 80
    %v3727 = vpop.permute.xlu0 %3726
    %v3729 = vmul.f32 %v3569, %v3727
    %v3730 = vadd.f32 %v3729, %v3713
    %vm3731 = vcmp.gt.f32.partialorder %v3477, 1.0
    %v3732 = vsel %vm3731, 1, 0
    %v3733 = vcvt.s32.f32 %v3732
    %v3735 = vsel %vm365, %v3730, 0
    %3737 = vmatprep.subr.mxu0 0.0
    %3738 = vmatpush1.msra.mxu0 %v3565
    %3739 = vmatprep.subr.mxu0 0.0
    %3740 = vmatpush1.msra.mxu0 %v3566
    %3741 = vmatprep.subr.mxu0 0.0
    %3742 = vmatpush1.msra.mxu0 0.0
    %3743 = vmatprep.subr.mxu0 0.0
    %3744 = vmatpush1.msra.mxu0 0.0
    %3745 = vmatprep.subr.mxu0 0.0
    %3746 = vmatpush1.msra.mxu0 0.0
    %3747 = vmatprep.subr.mxu0 0.0
    %3748 = vmatpush1.msra.mxu0 0.0
    %3749 = vmatprep.subr.mxu0 0.0
    %3750 = vmatpush1.msra.mxu0 0.0
    %3751 = vmatprep.subr.mxu0 0.0
    %3752 = vmatpush1.msra.mxu0 0.0
    %3753 = vmatprep.subr.mxu0 0.0
    %3754 = vmatpush1.msra.mxu0 0.0
    %3755 = vmatprep.subr.mxu0 0.0
    %3756 = vmatpush1.msra.mxu0 0.0
    %3757 = vmatprep.subr.mxu0 0.0
    %3758 = vmatpush1.msra.mxu0 0.0
    %3759 = vmatprep.subr.mxu0 0.0
    %3760 = vmatpush1.msra.mxu0 0.0
    %3761 = vmatprep.subr.mxu0 0.0
    %3762 = vmatpush1.msra.mxu0 0.0
    %3763 = vmatprep.subr.mxu0 0.0
    %3764 = vmatpush1.msra.mxu0 0.0
    %3765 = vmatprep.subr.mxu0 0.0
    %3766 = vmatpush1.msra.mxu0 0.0
    %3767 = vmatprep.subr.mxu0 0.0
    %3768 = vmatpush1.msra.mxu0 0.0
    %3769 = vmatprep.subr.mxu0 0.0
    %3770 = vmatpush1.msra.mxu0 0.0
    %3771 = vmatprep.subr.mxu0 0.0
    %3772 = vmatpush1.msra.mxu0 0.0
    %3773 = vmatprep.subr.mxu0 0.0
    %3774 = vmatpush1.msra.mxu0 0.0
    %3775 = vmatprep.subr.mxu0 0.0
    %3776 = vmatpush1.msra.mxu0 0.0
    %3777 = vmatprep.subr.mxu0 0.0
    %3778 = vmatpush1.msra.mxu0 0.0
    %3779 = vmatprep.subr.mxu0 0.0
    %3780 = vmatpush1.msra.mxu0 0.0
    %3781 = vmatprep.subr.mxu0 0.0
    %3782 = vmatpush1.msra.mxu0 0.0
    %3783 = vmatprep.subr.mxu0 0.0
    %3784 = vmatpush1.msra.mxu0 0.0
    %3785 = vmatprep.subr.mxu0 0.0
    %3786 = vmatpush1.msra.mxu0 0.0
    %3787 = vmatprep.subr.mxu0 0.0
    %3788 = vmatpush1.msra.mxu0 0.0
    %3789 = vmatprep.subr.mxu0 0.0
    %3790 = vmatpush1.msra.mxu0 0.0
    %3791 = vmatprep.subr.mxu0 0.0
    %3792 = vmatpush1.msra.mxu0 0.0
    %3793 = vmatprep.subr.mxu0 0.0
    %3794 = vmatpush1.msra.mxu0 0.0
    %3795 = vmatprep.subr.mxu0 0.0
    %3796 = vmatpush1.msra.mxu0 0.0
    %3797 = vmatprep.subr.mxu0 0.0
    %3798 = vmatpush1.msra.mxu0 0.0
    %3799 = vmatprep.subr.mxu0 0.0
    %3800 = vmatpush1.msra.mxu0 0.0
    %3801 = vmatprep.mubr.f32.mxu0 0.0
    %3802 = vmatmul.mubr.f32.gmra.mrb[0].mxu0 %v3735
    %v3803 = vpop.f32.mrb[0].mxu0
    %v3804 = vadd.f32 0.0, %v3803
    %v3805 = vpop.f32.mrb[0].mxu0
    %3806 = vdwg.mxu0
    %v3808 = vrot.slane %v3804, 7
    %v3811 = vadd.f32 %v3559, %v3808
    %v3812 = vadd.f32 %v3563, %v3804
    %v3813 = vxor.u32 %v3811, 2147483648
    %v3814 = vxor.u32 %v3812, 2147483648
    %v3815 = vmul.f32 %v3813, 1.442695
    %v3816 = vpow.pop %v3815
    %v3817 = vmul.f32 %v3814, 1.442695
    %v3818 = vpow.pop %v3817
    %v3819 = vadd.f32 %v3816, 1.0
    %v3820 = vadd.f32 %v3818, 1.0
    %v3821 = vrcp.pop %v3819
    %v3822 = vmul.f32 1.0, %v3821
    %v3823 = vrcp.pop %v3820
    %v3824 = vmul.f32 1.0, %v3823
    %v3825 = vtanh.pop %v3811
    %v3826 = vtanh.pop %v3812
    %v3828 = vrot.slane %v3714, 7
    %3829 = vrot.lane.b32.xlu0 %v3828, 16
    %v3830 = vpop.permute.xlu0 %3829
    %3831 = vrot.lane.b32.xlu0 %v3714, 16
    %v3832 = vpop.permute.xlu0 %3831
    %v3835 = vmul.f32 %v3822, %v3830
    %v3836 = vmul.f32 %v3824, %v3832
    %3839 = vrot.lane.b32.xlu0 %v3825, 96
    %v3840 = vpop.permute.xlu0 %3839
    %3841 = vrot.lane.b32.xlu0 %v3826, 96
    %v3842 = vpop.permute.xlu0 %3841
    %v3845 = vmul.f32 %v3822, %v3840
    %v3846 = vmul.f32 %v3824, %v3842
    %3849 = vrot.lane.b32.xlu0 %v3845, 16
    %v3850 = vpop.permute.xlu0 %3849
    %3851 = vrot.lane.b32.xlu0 %v3846, 16
    %v3852 = vpop.permute.xlu0 %3851
    %v3855 = vadd.f32 %v3835, %v3850
    %v3856 = vadd.f32 %v3836, %v3852
    %v3857 = vtanh.pop %v3855
    %v3858 = vtanh.pop %v3856
    %3861 = vrot.lane.b32.xlu0 %v3857, 32
    %v3862 = vpop.permute.xlu0 %3861
    %3863 = vrot.lane.b32.xlu0 %v3858, 32
    %v3864 = vpop.permute.xlu0 %3863
    %v3867 = vmul.f32 %v3822, %v3862
    %v3868 = vmul.f32 %v3824, %v3864
    %v3871 = vlaneseq
    %v3872 = vshrl.u32 %v3871, 7
    %v3873 = vsub.s32 1, %v3872
    %v3874 = vrot.slane %v3855, %v3873
    %v3875 = vlaneseq
    %v3876 = vshrl.u32 %v3875, 7
    %v3877 = vsub.s32 1, %v3876
    %v3878 = vrot.slane %v3856, %v3877
    %v3879 = vsel %vm1704, %v3878, %v3874
    %3880 = vrot.lane.b32.xlu0 %v3879, 112
    %v3881 = vpop.permute.xlu0 %3880
    %v3883 = vmul.f32 %v3733, %v3881
    %v3884 = vsub.f32 1.0, %v3733
    %v3885 = vmul.f32 %v3884, %v3714
    %v3886 = vadd.f32 %v3883, %v3885
    %v3889 = vlaneseq
    %v3890 = vshrl.u32 %v3889, 7
    %v3891 = vsub.s32 1, %v3890
    %v3892 = vrot.slane %v3867, %v3891
    %v3893 = vlaneseq
    %v3894 = vshrl.u32 %v3893, 7
    %v3895 = vsub.s32 1, %v3894
    %v3896 = vrot.slane %v3868, %v3895
    %v3897 = vsel %vm1704, %v3896, %v3892
    %3898 = vrot.lane.b32.xlu0 %v3897, 80
    %v3899 = vpop.permute.xlu0 %3898
    %v3901 = vmul.f32 %v3733, %v3899
    %v3902 = vmul.f32 %v3884, %v3730
    %v3903 = vadd.f32 %v3901, %v3902
    %vm3904 = vcmp.gt.f32.partialorder %v3477, 2.0
    %v3905 = vsel %vm3904, 1, 0
    %v3906 = vcvt.s32.f32 %v3905
    %v3908 = vsel %vm365, %v3903, 0
    %3910 = vmatprep.subr.mxu0 0.0
    %3911 = vmatpush1.msra.mxu0 %v3565
    %3912 = vmatprep.subr.mxu0 0.0
    %3913 = vmatpush1.msra.mxu0 %v3566
    %3914 = vmatprep.subr.mxu0 0.0
    %3915 = vmatpush1.msra.mxu0 0.0
    %3916 = vmatprep.subr.mxu0 0.0
    %3917 = vmatpush1.msra.mxu0 0.0
    %3918 = vmatprep.subr.mxu0 0.0
    %3919 = vmatpush1.msra.mxu0 0.0
    %3920 = vmatprep.subr.mxu0 0.0
    %3921 = vmatpush1.msra.mxu0 0.0
    %3922 = vmatprep.subr.mxu0 0.0
    %3923 = vmatpush1.msra.mxu0 0.0
    %3924 = vmatprep.subr.mxu0 0.0
    %3925 = vmatpush1.msra.mxu0 0.0
    %3926 = vmatprep.subr.mxu0 0.0
    %3927 = vmatpush1.msra.mxu0 0.0
    %3928 = vmatprep.subr.mxu0 0.0
    %3929 = vmatpush1.msra.mxu0 0.0
    %3930 = vmatprep.subr.mxu0 0.0
    %3931 = vmatpush1.msra.mxu0 0.0
    %3932 = vmatprep.subr.mxu0 0.0
    %3933 = vmatpush1.msra.mxu0 0.0
    %3934 = vmatprep.subr.mxu0 0.0
    %3935 = vmatpush1.msra.mxu0 0.0
    %3936 = vmatprep.subr.mxu0 0.0
    %3937 = vmatpush1.msra.mxu0 0.0
    %3938 = vmatprep.subr.mxu0 0.0
    %3939 = vmatpush1.msra.mxu0 0.0
    %3940 = vmatprep.subr.mxu0 0.0
    %3941 = vmatpush1.msra.mxu0 0.0
    %3942 = vmatprep.subr.mxu0 0.0
    %3943 = vmatpush1.msra.mxu0 0.0
    %3944 = vmatprep.subr.mxu0 0.0
    %3945 = vmatpush1.msra.mxu0 0.0
    %3946 = vmatprep.subr.mxu0 0.0
    %3947 = vmatpush1.msra.mxu0 0.0
    %3948 = vmatprep.subr.mxu0 0.0
    %3949 = vmatpush1.msra.mxu0 0.0
    %3950 = vmatprep.subr.mxu0 0.0
    %3951 = vmatpush1.msra.mxu0 0.0
    %3952 = vmatprep.subr.mxu0 0.0
    %3953 = vmatpush1.msra.mxu0 0.0
    %3954 = vmatprep.subr.mxu0 0.0
    %3955 = vmatpush1.msra.mxu0 0.0
    %3956 = vmatprep.subr.mxu0 0.0
    %3957 = vmatpush1.msra.mxu0 0.0
    %3958 = vmatprep.subr.mxu0 0.0
    %3959 = vmatpush1.msra.mxu0 0.0
    %3960 = vmatprep.subr.mxu0 0.0
    %3961 = vmatpush1.msra.mxu0 0.0
    %3962 = vmatprep.subr.mxu0 0.0
    %3963 = vmatpush1.msra.mxu0 0.0
    %3964 = vmatprep.subr.mxu0 0.0
    %3965 = vmatpush1.msra.mxu0 0.0
    %3966 = vmatprep.subr.mxu0 0.0
    %3967 = vmatpush1.msra.mxu0 0.0
    %3968 = vmatprep.subr.mxu0 0.0
    %3969 = vmatpush1.msra.mxu0 0.0
    %3970 = vmatprep.subr.mxu0 0.0
    %3971 = vmatpush1.msra.mxu0 0.0
    %3972 = vmatprep.subr.mxu0 0.0
    %3973 = vmatpush1.msra.mxu0 0.0
    %3974 = vmatprep.mubr.f32.mxu0 0.0
    %3975 = vmatmul.mubr.f32.gmra.mrb[0].mxu0 %v3908
    %v3976 = vpop.f32.mrb[0].mxu0
    %v3977 = vadd.f32 0.0, %v3976
    %v3978 = vpop.f32.mrb[0].mxu0
    %3979 = vdwg.mxu0
    %v3981 = vrot.slane %v3977, 6
    %v3982 = vrot.slane %v3977, 7
    %v3985 = vadd.f32 %v3559, %v3981
    %v3986 = vadd.f32 %v3563, %v3982
    %v3987 = vxor.u32 %v3985, 2147483648
    %v3988 = vxor.u32 %v3986, 2147483648
    %v3989 = vmul.f32 %v3987, 1.442695
    %v3990 = vpow.pop %v3989
    %v3991 = vmul.f32 %v3988, 1.442695
    %v3992 = vpow.pop %v3991
    %v3993 = vadd.f32 %v3990, 1.0
    %v3994 = vadd.f32 %v3992, 1.0
    %v3995 = vrcp.pop %v3993
    %v3996 = vmul.f32 1.0, %v3995
    %v3997 = vrcp.pop %v3994
    %v3998 = vmul.f32 1.0, %v3997
    %v3999 = vtanh.pop %v3985
    %v4000 = vtanh.pop %v3986
    %v4002 = vrot.slane %v3886, 6
    %v4003 = vrot.slane %v3886, 7
    %4004 = vrot.lane.b32.xlu0 %v4002, 16
    %v4005 = vpop.permute.xlu0 %4004
    %4006 = vrot.lane.b32.xlu0 %v4003, 16
    %v4007 = vpop.permute.xlu0 %4006
    %v4010 = vmul.f32 %v3996, %v4005
    %v4011 = vmul.f32 %v3998, %v4007
    %4014 = vrot.lane.b32.xlu0 %v3999, 96
    %v4015 = vpop.permute.xlu0 %4014
    %4016 = vrot.lane.b32.xlu0 %v4000, 96
    %v4017 = vpop.permute.xlu0 %4016
    %v4020 = vmul.f32 %v3996, %v4015
    %v4021 = vmul.f32 %v3998, %v4017
    %4024 = vrot.lane.b32.xlu0 %v4020, 16
    %v4025 = vpop.permute.xlu0 %4024
    %4026 = vrot.lane.b32.xlu0 %v4021, 16
    %v4027 = vpop.permute.xlu0 %4026
    %v4030 = vadd.f32 %v4010, %v4025
    %v4031 = vadd.f32 %v4011, %v4027
    %v4032 = vtanh.pop %v4030
    %v4033 = vtanh.pop %v4031
    %4036 = vrot.lane.b32.xlu0 %v4032, 32
    %v4037 = vpop.permute.xlu0 %4036
    %4038 = vrot.lane.b32.xlu0 %v4033, 32
    %v4039 = vpop.permute.xlu0 %4038
    %v4042 = vmul.f32 %v3996, %v4037
    %v4043 = vmul.f32 %v3998, %v4039
    %v4046 = vlaneseq
    %v4047 = vshrl.u32 %v4046, 7
    %v4048 = vsub.s32 2, %v4047
    %v4049 = vrot.slane %v4030, %v4048
    %v4050 = vlaneseq
    %v4051 = vshrl.u32 %v4050, 7
    %v4052 = vsub.s32 2, %v4051
    %v4053 = vrot.slane %v4031, %v4052
    %v4054 = vsel %vm1704, %v4053, %v4049
    %4055 = vrot.lane.b32.xlu0 %v4054, 112
    %v4056 = vpop.permute.xlu0 %4055
    %v4058 = vmul.f32 %v3906, %v4056
    %v4059 = vsub.f32 1.0, %v3906
    %v4060 = vmul.f32 %v4059, %v3886
    %v4061 = vadd.f32 %v4058, %v4060
    %v4064 = vlaneseq
    %v4065 = vshrl.u32 %v4064, 7
    %v4066 = vsub.s32 2, %v4065
    %v4067 = vrot.slane %v4042, %v4066
    %v4068 = vlaneseq
    %v4069 = vshrl.u32 %v4068, 7
    %v4070 = vsub.s32 2, %v4069
    %v4071 = vrot.slane %v4043, %v4070
    %v4072 = vsel %vm1704, %v4071, %v4067
    %4073 = vrot.lane.b32.xlu0 %v4072, 80
    %v4074 = vpop.permute.xlu0 %4073
    %v4076 = vmul.f32 %v3906, %v4074
    %v4077 = vmul.f32 %v4059, %v3903
    %v4078 = vadd.f32 %v4076, %v4077
    %vm4079 = vcmp.gt.f32.partialorder %v3477, 3.0
    %v4080 = vsel %vm4079, 1, 0
    %v4081 = vcvt.s32.f32 %v4080
    %v4083 = vsel %vm365, %v4078, 0
    %4085 = vmatprep.subr.mxu0 0.0
    %4086 = vmatpush1.msra.mxu0 %v3565
    %4087 = vmatprep.subr.mxu0 0.0
    %4088 = vmatpush1.msra.mxu0 %v3566
    %4089 = vmatprep.subr.mxu0 0.0
    %4090 = vmatpush1.msra.mxu0 0.0
    %4091 = vmatprep.subr.mxu0 0.0
    %4092 = vmatpush1.msra.mxu0 0.0
    %4093 = vmatprep.subr.mxu0 0.0
    %4094 = vmatpush1.msra.mxu0 0.0
    %4095 = vmatprep.subr.mxu0 0.0
    %4096 = vmatpush1.msra.mxu0 0.0
    %4097 = vmatprep.subr.mxu0 0.0
    %4098 = vmatpush1.msra.mxu0 0.0
    %4099 = vmatprep.subr.mxu0 0.0
    %4100 = vmatpush1.msra.mxu0 0.0
    %4101 = vmatprep.subr.mxu0 0.0
    %4102 = vmatpush1.msra.mxu0 0.0
    %4103 = vmatprep.subr.mxu0 0.0
    %4104 = vmatpush1.msra.mxu0 0.0
    %4105 = vmatprep.subr.mxu0 0.0
    %4106 = vmatpush1.msra.mxu0 0.0
    %4107 = vmatprep.subr.mxu0 0.0
    %4108 = vmatpush1.msra.mxu0 0.0
    %4109 = vmatprep.subr.mxu0 0.0
    %4110 = vmatpush1.msra.mxu0 0.0
    %4111 = vmatprep.subr.mxu0 0.0
    %4112 = vmatpush1.msra.mxu0 0.0
    %4113 = vmatprep.subr.mxu0 0.0
    %4114 = vmatpush1.msra.mxu0 0.0
    %4115 = vmatprep.subr.mxu0 0.0
    %4116 = vmatpush1.msra.mxu0 0.0
    %4117 = vmatprep.subr.mxu0 0.0
    %4118 = vmatpush1.msra.mxu0 0.0
    %4119 = vmatprep.subr.mxu0 0.0
    %4120 = vmatpush1.msra.mxu0 0.0
    %4121 = vmatprep.subr.mxu0 0.0
    %4122 = vmatpush1.msra.mxu0 0.0
    %4123 = vmatprep.subr.mxu0 0.0
    %4124 = vmatpush1.msra.mxu0 0.0
    %4125 = vmatprep.subr.mxu0 0.0
    %4126 = vmatpush1.msra.mxu0 0.0
    %4127 = vmatprep.subr.mxu0 0.0
    %4128 = vmatpush1.msra.mxu0 0.0
    %4129 = vmatprep.subr.mxu0 0.0
    %4130 = vmatpush1.msra.mxu0 0.0
    %4131 = vmatprep.subr.mxu0 0.0
    %4132 = vmatpush1.msra.mxu0 0.0
    %4133 = vmatprep.subr.mxu0 0.0
    %4134 = vmatpush1.msra.mxu0 0.0
    %4135 = vmatprep.subr.mxu0 0.0
    %4136 = vmatpush1.msra.mxu0 0.0
    %4137 = vmatprep.subr.mxu0 0.0
    %4138 = vmatpush1.msra.mxu0 0.0
    %4139 = vmatprep.subr.mxu0 0.0
    %4140 = vmatpush1.msra.mxu0 0.0
    %4141 = vmatprep.subr.mxu0 0.0
    %4142 = vmatpush1.msra.mxu0 0.0
    %4143 = vmatprep.subr.mxu0 0.0
    %4144 = vmatpush1.msra.mxu0 0.0
    %4145 = vmatprep.subr.mxu0 0.0
    %4146 = vmatpush1.msra.mxu0 0.0
    %4147 = vmatprep.subr.mxu0 0.0
    %4148 = vmatpush1.msra.mxu0 0.0
    %4149 = vmatprep.mubr.f32.mxu0 0.0
    %4150 = vmatmul.mubr.f32.gmra.mrb[0].mxu0 %v4083
    %v4151 = vpop.f32.mrb[0].mxu0
    %v4152 = vadd.f32 0.0, %v4151
    %v4153 = vpop.f32.mrb[0].mxu0
    %4154 = vdwg.mxu0
    %v4156 = vrot.slane %v4152, 5
    %v4157 = vrot.slane %v4152, 6
    %v4160 = vadd.f32 %v3559, %v4156
    %v4161 = vadd.f32 %v3563, %v4157
    %v4162 = vxor.u32 %v4160, 2147483648
    %v4163 = vxor.u32 %v4161, 2147483648
    %v4164 = vmul.f32 %v4162, 1.442695
    %v4165 = vpow.pop %v4164
    %v4166 = vmul.f32 %v4163, 1.442695
    %v4167 = vpow.pop %v4166
    %v4168 = vadd.f32 %v4165, 1.0
    %v4169 = vadd.f32 %v4167, 1.0
    %v4170 = vrcp.pop %v4168
    %v4171 = vmul.f32 1.0, %v4170
    %v4172 = vrcp.pop %v4169
    %v4173 = vmul.f32 1.0, %v4172
    %v4174 = vtanh.pop %v4160
    %v4175 = vtanh.pop %v4161
    %v4177 = vrot.slane %v4061, 5
    %v4178 = vrot.slane %v4061, 6
    %4179 = vrot.lane.b32.xlu0 %v4177, 16
    %v4180 = vpop.permute.xlu0 %4179
    %4181 = vrot.lane.b32.xlu0 %v4178, 16
    %v4182 = vpop.permute.xlu0 %4181
    %v4185 = vmul.f32 %v4171, %v4180
    %v4186 = vmul.f32 %v4173, %v4182
    %4189 = vrot.lane.b32.xlu0 %v4174, 96
    %v4190 = vpop.permute.xlu0 %4189
    %4191 = vrot.lane.b32.xlu0 %v4175, 96
    %v4192 = vpop.permute.xlu0 %4191
    %v4195 = vmul.f32 %v4171, %v4190
    %v4196 = vmul.f32 %v4173, %v4192
    %4199 = vrot.lane.b32.xlu0 %v4195, 16
    %v4200 = vpop.permute.xlu0 %4199
    %4201 = vrot.lane.b32.xlu0 %v4196, 16
    %v4202 = vpop.permute.xlu0 %4201
    %v4205 = vadd.f32 %v4185, %v4200
    %v4206 = vadd.f32 %v4186, %v4202
    %v4207 = vtanh.pop %v4205
    %v4208 = vtanh.pop %v4206
    %4211 = vrot.lane.b32.xlu0 %v4207, 32
    %v4212 = vpop.permute.xlu0 %4211
    %4213 = vrot.lane.b32.xlu0 %v4208, 32
    %v4214 = vpop.permute.xlu0 %4213
    %v4217 = vmul.f32 %v4171, %v4212
    %v4218 = vmul.f32 %v4173, %v4214
    %v4221 = vlaneseq
    %v4222 = vshrl.u32 %v4221, 7
    %v4223 = vsub.s32 3, %v4222
    %v4224 = vrot.slane %v4217, %v4223
    %v4225 = vlaneseq
    %v4226 = vshrl.u32 %v4225, 7
    %v4227 = vsub.s32 3, %v4226
    %v4228 = vrot.slane %v4218, %v4227
    %v4229 = vsel %vm1704, %v4228, %v4224
    %4230 = vrot.lane.b32.xlu0 %v4229, 80
    %v4231 = vpop.permute.xlu0 %4230
    %v4233 = vmul.f32 %v4081, %v4231
    %4236 = vrot.lane.b32.xlu0 %v3565, 64
    %v4237 = vpop.permute.xlu0 %4236
    %4238 = vrot.lane.b32.xlu0 %v3566, 64
    %v4239 = vpop.permute.xlu0 %4238
    %4242 = vmatprep.subr.mxu0 0.0
    %4243 = vmatpush1.msra.mxu0 %v4237
    %4244 = vmatprep.subr.mxu0 0.0
    %4245 = vmatpush1.msra.mxu0 %v4239
    %4246 = vmatprep.subr.mxu0 0.0
    %4247 = vmatpush1.msra.mxu0 0.0
    %4248 = vmatprep.subr.mxu0 0.0
    %4249 = vmatpush1.msra.mxu0 0.0
    %4250 = vmatprep.subr.mxu0 0.0
    %4251 = vmatpush1.msra.mxu0 0.0
    %4252 = vmatprep.subr.mxu0 0.0
    %4253 = vmatpush1.msra.mxu0 0.0
    %4254 = vmatprep.subr.mxu0 0.0
    %4255 = vmatpush1.msra.mxu0 0.0
    %4256 = vmatprep.subr.mxu0 0.0
    %4257 = vmatpush1.msra.mxu0 0.0
    %4258 = vmatprep.subr.mxu0 0.0
    %4259 = vmatpush1.msra.mxu0 0.0
    %4260 = vmatprep.subr.mxu0 0.0
    %4261 = vmatpush1.msra.mxu0 0.0
    %4262 = vmatprep.subr.mxu0 0.0
    %4263 = vmatpush1.msra.mxu0 0.0
    %4264 = vmatprep.subr.mxu0 0.0
    %4265 = vmatpush1.msra.mxu0 0.0
    %4266 = vmatprep.subr.mxu0 0.0
    %4267 = vmatpush1.msra.mxu0 0.0
    %4268 = vmatprep.subr.mxu0 0.0
    %4269 = vmatpush1.msra.mxu0 0.0
    %4270 = vmatprep.subr.mxu0 0.0
    %4271 = vmatpush1.msra.mxu0 0.0
    %4272 = vmatprep.subr.mxu0 0.0
    %4273 = vmatpush1.msra.mxu0 0.0
    %4274 = vmatprep.subr.mxu0 0.0
    %4275 = vmatpush1.msra.mxu0 0.0
    %4276 = vmatprep.subr.mxu0 0.0
    %4277 = vmatpush1.msra.mxu0 0.0
    %4278 = vmatprep.subr.mxu0 0.0
    %4279 = vmatpush1.msra.mxu0 0.0
    %4280 = vmatprep.subr.mxu0 0.0
    %4281 = vmatpush1.msra.mxu0 0.0
    %4282 = vmatprep.subr.mxu0 0.0
    %4283 = vmatpush1.msra.mxu0 0.0
    %4284 = vmatprep.subr.mxu0 0.0
    %4285 = vmatpush1.msra.mxu0 0.0
    %4286 = vmatprep.subr.mxu0 0.0
    %4287 = vmatpush1.msra.mxu0 0.0
    %4288 = vmatprep.subr.mxu0 0.0
    %4289 = vmatpush1.msra.mxu0 0.0
    %4290 = vmatprep.subr.mxu0 0.0
    %4291 = vmatpush1.msra.mxu0 0.0
    %4292 = vmatprep.subr.mxu0 0.0
    %4293 = vmatpush1.msra.mxu0 0.0
    %4294 = vmatprep.subr.mxu0 0.0
    %4295 = vmatpush1.msra.mxu0 0.0
    %4296 = vmatprep.subr.mxu0 0.0
    %4297 = vmatpush1.msra.mxu0 0.0
    %4298 = vmatprep.subr.mxu0 0.0
    %4299 = vmatpush1.msra.mxu0 0.0
    %4300 = vmatprep.subr.mxu0 0.0
    %4301 = vmatpush1.msra.mxu0 0.0
    %4302 = vmatprep.subr.mxu0 0.0
    %4303 = vmatpush1.msra.mxu0 0.0
    %4304 = vmatprep.subr.mxu0 0.0
    %4305 = vmatpush1.msra.mxu0 0.0
    %4306 = vmatprep.mubr.f32.mxu0 0.0
    %4307 = vmatmul.mubr.f32.gmra.mrb[0].mxu0 %v3571
    %v4308 = vpop.f32.mrb[0].mxu0
    %v4309 = vadd.f32 0.0, %v4308
    %v4310 = vpop.f32.mrb[0].mxu0
    %4311 = vdwg.mxu0
    %v4313 = vrot.slane %v4309, 5
    %v4314 = vrot.slane %v4309, 6
    %4315 = vrot.lane.b32.xlu0 %v4313, 64
    %v4316 = vpop.permute.xlu0 %4315
    %4317 = vrot.lane.b32.xlu0 %v4314, 64
    %v4318 = vpop.permute.xlu0 %4317
    %v4321 = vadd.f32 %v3559, %v4316
    %v4322 = vadd.f32 %v3563, %v4318
    %v4323 = vxor.u32 %v4321, 2147483648
    %v4324 = vxor.u32 %v4322, 2147483648
    %v4325 = vmul.f32 %v4323, 1.442695
    %v4326 = vpow.pop %v4325
    %v4327 = vmul.f32 %v4324, 1.442695
    %v4328 = vpow.pop %v4327
    %v4329 = vadd.f32 %v4326, 1.0
    %v4330 = vadd.f32 %v4328, 1.0
    %v4331 = vrcp.pop %v4329
    %v4332 = vmul.f32 1.0, %v4331
    %v4333 = vrcp.pop %v4330
    %v4334 = vmul.f32 1.0, %v4333
    %v4335 = vtanh.pop %v4321
    %v4336 = vtanh.pop %v4322
    %v4337 = vmul.f32 %v4332, 0.0
    %v4338 = vmul.f32 %v4334, 0.0
    %4341 = vrot.lane.b32.xlu0 %v4335, 96
    %v4342 = vpop.permute.xlu0 %4341
    %4343 = vrot.lane.b32.xlu0 %v4336, 96
    %v4344 = vpop.permute.xlu0 %4343
    %v4347 = vmul.f32 %v4332, %v4342
    %v4348 = vmul.f32 %v4334, %v4344
    %4351 = vrot.lane.b32.xlu0 %v4347, 16
    %v4352 = vpop.permute.xlu0 %4351
    %4353 = vrot.lane.b32.xlu0 %v4348, 16
    %v4354 = vpop.permute.xlu0 %4353
    %v4357 = vadd.f32 %v4337, %v4352
    %v4358 = vadd.f32 %v4338, %v4354
    %v4359 = vtanh.pop %v4357
    %v4360 = vtanh.pop %v4358
    %4363 = vrot.lane.b32.xlu0 %v4359, 32
    %v4364 = vpop.permute.xlu0 %4363
    %4365 = vrot.lane.b32.xlu0 %v4360, 32
    %v4366 = vpop.permute.xlu0 %4365
    %v4369 = vmul.f32 %v4332, %v4364
    %v4370 = vmul.f32 %v4334, %v4366
    %v4373 = vlaneseq
    %v4374 = vshrl.u32 %v4373, 7
    %v4375 = vsub.s32 3, %v4374
    %v4376 = vrot.slane %v4357, %v4375
    %v4377 = vlaneseq
    %v4378 = vshrl.u32 %v4377, 7
    %v4379 = vsub.s32 3, %v4378
    %v4380 = vrot.slane %v4358, %v4379
    %v4381 = vsel %vm1704, %v4380, %v4376
    %4382 = vrot.lane.b32.xlu0 %v4381, 48
    %v4383 = vpop.permute.xlu0 %4382
    %v4385 = vmul.f32 %v4081, %v4383
    %v4386 = vsub.f32 1.0, %v4081
    %v4387 = vmul.f32 %v4386, 0.0
    %v4388 = vadd.f32 %v4385, %v4387
    %v4391 = vlaneseq
    %v4392 = vshrl.u32 %v4391, 7
    %v4393 = vsub.s32 3, %v4392
    %v4394 = vrot.slane %v4369, %v4393
    %v4395 = vlaneseq
    %v4396 = vshrl.u32 %v4395, 7
    %v4397 = vsub.s32 3, %v4396
    %v4398 = vrot.slane %v4370, %v4397
    %v4399 = vsel %vm1704, %v4398, %v4394
    %4400 = vrot.lane.b32.xlu0 %v4399, 16
    %v4401 = vpop.permute.xlu0 %4400
    %v4403 = vmul.f32 %v4081, %v4401
    %v4404 = vadd.f32 %v4403, %v4387
    %v4406 = vsel %vm365, %v4404, 0
    %4408 = vmatprep.subr.mxu0 0.0
    %4409 = vmatpush1.msra.mxu0 %v4237
    %4410 = vmatprep.subr.mxu0 0.0
    %4411 = vmatpush1.msra.mxu0 %v4239
    %4412 = vmatprep.subr.mxu0 0.0
    %4413 = vmatpush1.msra.mxu0 0.0
    %4414 = vmatprep.subr.mxu0 0.0
    %4415 = vmatpush1.msra.mxu0 0.0
    %4416 = vmatprep.subr.mxu0 0.0
    %4417 = vmatpush1.msra.mxu0 0.0
    %4418 = vmatprep.subr.mxu0 0.0
    %4419 = vmatpush1.msra.mxu0 0.0
    %4420 = vmatprep.subr.mxu0 0.0
    %4421 = vmatpush1.msra.mxu0 0.0
    %4422 = vmatprep.subr.mxu0 0.0
    %4423 = vmatpush1.msra.mxu0 0.0
    %4424 = vmatprep.subr.mxu0 0.0
    %4425 = vmatpush1.msra.mxu0 0.0
    %4426 = vmatprep.subr.mxu0 0.0
    %4427 = vmatpush1.msra.mxu0 0.0
    %4428 = vmatprep.subr.mxu0 0.0
    %4429 = vmatpush1.msra.mxu0 0.0
    %4430 = vmatprep.subr.mxu0 0.0
    %4431 = vmatpush1.msra.mxu0 0.0
    %4432 = vmatprep.subr.mxu0 0.0
    %4433 = vmatpush1.msra.mxu0 0.0
    %4434 = vmatprep.subr.mxu0 0.0
    %4435 = vmatpush1.msra.mxu0 0.0
    %4436 = vmatprep.subr.mxu0 0.0
    %4437 = vmatpush1.msra.mxu0 0.0
    %4438 = vmatprep.subr.mxu0 0.0
    %4439 = vmatpush1.msra.mxu0 0.0
    %4440 = vmatprep.subr.mxu0 0.0
    %4441 = vmatpush1.msra.mxu0 0.0
    %4442 = vmatprep.subr.mxu0 0.0
    %4443 = vmatpush1.msra.mxu0 0.0
    %4444 = vmatprep.subr.mxu0 0.0
    %4445 = vmatpush1.msra.mxu0 0.0
    %4446 = vmatprep.subr.mxu0 0.0
    %4447 = vmatpush1.msra.mxu0 0.0
    %4448 = vmatprep.subr.mxu0 0.0
    %4449 = vmatpush1.msra.mxu0 0.0
    %4450 = vmatprep.subr.mxu0 0.0
    %4451 = vmatpush1.msra.mxu0 0.0
    %4452 = vmatprep.subr.mxu0 0.0
    %4453 = vmatpush1.msra.mxu0 0.0
    %4454 = vmatprep.subr.mxu0 0.0
    %4455 = vmatpush1.msra.mxu0 0.0
    %4456 = vmatprep.subr.mxu0 0.0
    %4457 = vmatpush1.msra.mxu0 0.0
    %4458 = vmatprep.subr.mxu0 0.0
    %4459 = vmatpush1.msra.mxu0 0.0
    %4460 = vmatprep.subr.mxu0 0.0
    %4461 = vmatpush1.msra.mxu0 0.0
    %4462 = vmatprep.subr.mxu0 0.0
    %4463 = vmatpush1.msra.mxu0 0.0
    %4464 = vmatprep.subr.mxu0 0.0
    %4465 = vmatpush1.msra.mxu0 0.0
    %4466 = vmatprep.subr.mxu0 0.0
    %4467 = vmatpush1.msra.mxu0 0.0
    %4468 = vmatprep.subr.mxu0 0.0
    %4469 = vmatpush1.msra.mxu0 0.0
    %4470 = vmatprep.subr.mxu0 0.0
    %4471 = vmatpush1.msra.mxu0 0.0
    %4472 = vmatprep.mubr.f32.mxu0 0.0
    %4473 = vmatmul.mubr.f32.gmra.mrb[0].mxu0 %v4406
    %v4474 = vpop.f32.mrb[0].mxu0
    %v4475 = vadd.f32 0.0, %v4474
    %v4476 = vpop.f32.mrb[0].mxu0
    %4477 = vdwg.mxu0
    %v4479 = vrot.slane %v4475, 6
    %v4480 = vrot.slane %v4475, 7
    %4481 = vrot.lane.b32.xlu0 %v4479, 64
    %v4482 = vpop.permute.xlu0 %4481
    %4483 = vrot.lane.b32.xlu0 %v4480, 64
    %v4484 = vpop.permute.xlu0 %4483
    %v4487 = vadd.f32 %v3559, %v4482
    %v4488 = vadd.f32 %v3563, %v4484
    %v4489 = vxor.u32 %v4487, 2147483648
    %v4490 = vxor.u32 %v4488, 2147483648
    %v4491 = vmul.f32 %v4489, 1.442695
    %v4492 = vpow.pop %v4491
    %v4493 = vmul.f32 %v4490, 1.442695
    %v4494 = vpow.pop %v4493
    %v4495 = vadd.f32 %v4492, 1.0
    %v4496 = vadd.f32 %v4494, 1.0
    %v4497 = vrcp.pop %v4495
    %v4498 = vmul.f32 1.0, %v4497
    %v4499 = vrcp.pop %v4496
    %v4500 = vmul.f32 1.0, %v4499
    %v4501 = vtanh.pop %v4487
    %v4502 = vtanh.pop %v4488
    %v4504 = vrot.slane %v4388, 6
    %v4505 = vrot.slane %v4388, 7
    %4506 = vrot.lane.b32.xlu0 %v4504, 80
    %v4507 = vpop.permute.xlu0 %4506
    %4508 = vrot.lane.b32.xlu0 %v4505, 80
    %v4509 = vpop.permute.xlu0 %4508
    %v4512 = vmul.f32 %v4498, %v4507
    %v4513 = vmul.f32 %v4500, %v4509
    %4516 = vrot.lane.b32.xlu0 %v4501, 96
    %v4517 = vpop.permute.xlu0 %4516
    %4518 = vrot.lane.b32.xlu0 %v4502, 96
    %v4519 = vpop.permute.xlu0 %4518
    %v4522 = vmul.f32 %v4498, %v4517
    %v4523 = vmul.f32 %v4500, %v4519
    %4526 = vrot.lane.b32.xlu0 %v4522, 16
    %v4527 = vpop.permute.xlu0 %4526
    %4528 = vrot.lane.b32.xlu0 %v4523, 16
    %v4529 = vpop.permute.xlu0 %4528
    %v4532 = vadd.f32 %v4512, %v4527
    %v4533 = vadd.f32 %v4513, %v4529
    %v4534 = vtanh.pop %v4532
    %v4535 = vtanh.pop %v4533
    %4538 = vrot.lane.b32.xlu0 %v4534, 32
    %v4539 = vpop.permute.xlu0 %4538
    %4540 = vrot.lane.b32.xlu0 %v4535, 32
    %v4541 = vpop.permute.xlu0 %4540
    %v4544 = vmul.f32 %v4498, %v4539
    %v4545 = vmul.f32 %v4500, %v4541
    %v4548 = vlaneseq
    %v4549 = vshrl.u32 %v4548, 7
    %v4550 = vsub.s32 2, %v4549
    %v4551 = vrot.slane %v4532, %v4550
    %v4552 = vlaneseq
    %v4553 = vshrl.u32 %v4552, 7
    %v4554 = vsub.s32 2, %v4553
    %v4555 = vrot.slane %v4533, %v4554
    %v4556 = vsel %vm1704, %v4555, %v4551
    %4557 = vrot.lane.b32.xlu0 %v4556, 48
    %v4558 = vpop.permute.xlu0 %4557
    %v4560 = vmul.f32 %v3906, %v4558
    %v4561 = vmul.f32 %v4059, %v4388
    %v4562 = vadd.f32 %v4560, %v4561
    %v4565 = vlaneseq
    %v4566 = vshrl.u32 %v4565, 7
    %v4567 = vsub.s32 2, %v4566
    %v4568 = vrot.slane %v4544, %v4567
    %v4569 = vlaneseq
    %v4570 = vshrl.u32 %v4569, 7
    %v4571 = vsub.s32 2, %v4570
    %v4572 = vrot.slane %v4545, %v4571
    %v4573 = vsel %vm1704, %v4572, %v4568
    %4574 = vrot.lane.b32.xlu0 %v4573, 16
    %v4575 = vpop.permute.xlu0 %4574
    %v4577 = vmul.f32 %v3906, %v4575
    %v4578 = vmul.f32 %v4059, %v4404
    %v4579 = vadd.f32 %v4577, %v4578
    %v4581 = vsel %vm365, %v4579, 0
    %4583 = vmatprep.subr.mxu0 0.0
    %4584 = vmatpush1.msra.mxu0 %v4237
    %4585 = vmatprep.subr.mxu0 0.0
    %4586 = vmatpush1.msra.mxu0 %v4239
    %4587 = vmatprep.subr.mxu0 0.0
    %4588 = vmatpush1.msra.mxu0 0.0
    %4589 = vmatprep.subr.mxu0 0.0
    %4590 = vmatpush1.msra.mxu0 0.0
    %4591 = vmatprep.subr.mxu0 0.0
    %4592 = vmatpush1.msra.mxu0 0.0
    %4593 = vmatprep.subr.mxu0 0.0
    %4594 = vmatpush1.msra.mxu0 0.0
    %4595 = vmatprep.subr.mxu0 0.0
    %4596 = vmatpush1.msra.mxu0 0.0
    %4597 = vmatprep.subr.mxu0 0.0
    %4598 = vmatpush1.msra.mxu0 0.0
    %4599 = vmatprep.subr.mxu0 0.0
    %4600 = vmatpush1.msra.mxu0 0.0
    %4601 = vmatprep.subr.mxu0 0.0
    %4602 = vmatpush1.msra.mxu0 0.0
    %4603 = vmatprep.subr.mxu0 0.0
    %4604 = vmatpush1.msra.mxu0 0.0
    %4605 = vmatprep.subr.mxu0 0.0
    %4606 = vmatpush1.msra.mxu0 0.0
    %4607 = vmatprep.subr.mxu0 0.0
    %4608 = vmatpush1.msra.mxu0 0.0
    %4609 = vmatprep.subr.mxu0 0.0
    %4610 = vmatpush1.msra.mxu0 0.0
    %4611 = vmatprep.subr.mxu0 0.0
    %4612 = vmatpush1.msra.mxu0 0.0
    %4613 = vmatprep.subr.mxu0 0.0
    %4614 = vmatpush1.msra.mxu0 0.0
    %4615 = vmatprep.subr.mxu0 0.0
    %4616 = vmatpush1.msra.mxu0 0.0
    %4617 = vmatprep.subr.mxu0 0.0
    %4618 = vmatpush1.msra.mxu0 0.0
    %4619 = vmatprep.subr.mxu0 0.0
    %4620 = vmatpush1.msra.mxu0 0.0
    %4621 = vmatprep.subr.mxu0 0.0
    %4622 = vmatpush1.msra.mxu0 0.0
    %4623 = vmatprep.subr.mxu0 0.0
    %4624 = vmatpush1.msra.mxu0 0.0
    %4625 = vmatprep.subr.mxu0 0.0
    %4626 = vmatpush1.msra.mxu0 0.0
    %4627 = vmatprep.subr.mxu0 0.0
    %4628 = vmatpush1.msra.mxu0 0.0
    %4629 = vmatprep.subr.mxu0 0.0
    %4630 = vmatpush1.msra.mxu0 0.0
    %4631 = vmatprep.subr.mxu0 0.0
    %4632 = vmatpush1.msra.mxu0 0.0
    %4633 = vmatprep.subr.mxu0 0.0
    %4634 = vmatpush1.msra.mxu0 0.0
    %4635 = vmatprep.subr.mxu0 0.0
    %4636 = vmatpush1.msra.mxu0 0.0
    %4637 = vmatprep.subr.mxu0 0.0
    %4638 = vmatpush1.msra.mxu0 0.0
    %4639 = vmatprep.subr.mxu0 0.0
    %4640 = vmatpush1.msra.mxu0 0.0
    %4641 = vmatprep.subr.mxu0 0.0
    %4642 = vmatpush1.msra.mxu0 0.0
    %4643 = vmatprep.subr.mxu0 0.0
    %4644 = vmatpush1.msra.mxu0 0.0
    %4645 = vmatprep.subr.mxu0 0.0
    %4646 = vmatpush1.msra.mxu0 0.0
    %4647 = vmatprep.mubr.f32.mxu0 0.0
    %4648 = vmatmul.mubr.f32.gmra.mrb[0].mxu0 %v4581
    %v4649 = vpop.f32.mrb[0].mxu0
    %v4650 = vadd.f32 0.0, %v4649
    %v4651 = vpop.f32.mrb[0].mxu0
    %4652 = vdwg.mxu0
    %v4654 = vrot.slane %v4650, 7
    %4655 = vrot.lane.b32.xlu0 %v4654, 64
    %v4656 = vpop.permute.xlu0 %4655
    %4657 = vrot.lane.b32.xlu0 %v4650, 64
    %v4658 = vpop.permute.xlu0 %4657
    %v4661 = vadd.f32 %v3559, %v4656
    %v4662 = vadd.f32 %v3563, %v4658
    %v4663 = vxor.u32 %v4661, 2147483648
    %v4664 = vxor.u32 %v4662, 2147483648
    %v4665 = vmul.f32 %v4663, 1.442695
    %v4666 = vpow.pop %v4665
    %v4667 = vmul.f32 %v4664, 1.442695
    %v4668 = vpow.pop %v4667
    %v4669 = vadd.f32 %v4666, 1.0
    %v4670 = vadd.f32 %v4668, 1.0
    %v4671 = vrcp.pop %v4669
    %v4672 = vmul.f32 1.0, %v4671
    %v4673 = vrcp.pop %v4670
    %v4674 = vmul.f32 1.0, %v4673
    %v4675 = vtanh.pop %v4661
    %v4676 = vtanh.pop %v4662
    %v4678 = vrot.slane %v4562, 7
    %4679 = vrot.lane.b32.xlu0 %v4678, 80
    %v4680 = vpop.permute.xlu0 %4679
    %4681 = vrot.lane.b32.xlu0 %v4562, 80
    %v4682 = vpop.permute.xlu0 %4681
    %v4685 = vmul.f32 %v4672, %v4680
    %v4686 = vmul.f32 %v4674, %v4682
    %4689 = vrot.lane.b32.xlu0 %v4675, 96
    %v4690 = vpop.permute.xlu0 %4689
    %4691 = vrot.lane.b32.xlu0 %v4676, 96
    %v4692 = vpop.permute.xlu0 %4691
    %v4695 = vmul.f32 %v4672, %v4690
    %v4696 = vmul.f32 %v4674, %v4692
    %4699 = vrot.lane.b32.xlu0 %v4695, 16
    %v4700 = vpop.permute.xlu0 %4699
    %4701 = vrot.lane.b32.xlu0 %v4696, 16
    %v4702 = vpop.permute.xlu0 %4701
    %v4705 = vadd.f32 %v4685, %v4700
    %v4706 = vadd.f32 %v4686, %v4702
    %v4707 = vtanh.pop %v4705
    %v4708 = vtanh.pop %v4706
    %4711 = vrot.lane.b32.xlu0 %v4707, 32
    %v4712 = vpop.permute.xlu0 %4711
    %4713 = vrot.lane.b32.xlu0 %v4708, 32
    %v4714 = vpop.permute.xlu0 %4713
    %v4717 = vmul.f32 %v4672, %v4712
    %v4718 = vmul.f32 %v4674, %v4714
    %v4721 = vlaneseq
    %v4722 = vshrl.u32 %v4721, 7
    %v4723 = vsub.s32 1, %v4722
    %v4724 = vrot.slane %v4705, %v4723
    %v4725 = vlaneseq
    %v4726 = vshrl.u32 %v4725, 7
    %v4727 = vsub.s32 1, %v4726
    %v4728 = vrot.slane %v4706, %v4727
    %v4729 = vsel %vm1704, %v4728, %v4724
    %4730 = vrot.lane.b32.xlu0 %v4729, 48
    %v4731 = vpop.permute.xlu0 %4730
    %v4733 = vmul.f32 %v3733, %v4731
    %v4734 = vmul.f32 %v3884, %v4562
    %v4735 = vadd.f32 %v4733, %v4734
    %v4738 = vlaneseq
    %v4739 = vshrl.u32 %v4738, 7
    %v4740 = vsub.s32 1, %v4739
    %v4741 = vrot.slane %v4717, %v4740
    %v4742 = vlaneseq
    %v4743 = vshrl.u32 %v4742, 7
    %v4744 = vsub.s32 1, %v4743
    %v4745 = vrot.slane %v4718, %v4744
    %v4746 = vsel %vm1704, %v4745, %v4741
    %4747 = vrot.lane.b32.xlu0 %v4746, 16
    %v4748 = vpop.permute.xlu0 %4747
    %v4750 = vmul.f32 %v3733, %v4748
    %v4751 = vmul.f32 %v3884, %v4579
    %v4752 = vadd.f32 %v4750, %v4751
    %v4754 = vsel %vm365, %v4752, 0
    %4756 = vmatprep.subr.mxu0 0.0
    %4757 = vmatpush1.msra.mxu0 %v4237
    %4758 = vmatprep.subr.mxu0 0.0
    %4759 = vmatpush1.msra.mxu0 %v4239
    %4760 = vmatprep.subr.mxu0 0.0
    %4761 = vmatpush1.msra.mxu0 0.0
    %4762 = vmatprep.subr.mxu0 0.0
    %4763 = vmatpush1.msra.mxu0 0.0
    %4764 = vmatprep.subr.mxu0 0.0
    %4765 = vmatpush1.msra.mxu0 0.0
    %4766 = vmatprep.subr.mxu0 0.0
    %4767 = vmatpush1.msra.mxu0 0.0
    %4768 = vmatprep.subr.mxu0 0.0
    %4769 = vmatpush1.msra.mxu0 0.0
    %4770 = vmatprep.subr.mxu0 0.0
    %4771 = vmatpush1.msra.mxu0 0.0
    %4772 = vmatprep.subr.mxu0 0.0
    %4773 = vmatpush1.msra.mxu0 0.0
    %4774 = vmatprep.subr.mxu0 0.0
    %4775 = vmatpush1.msra.mxu0 0.0
    %4776 = vmatprep.subr.mxu0 0.0
    %4777 = vmatpush1.msra.mxu0 0.0
    %4778 = vmatprep.subr.mxu0 0.0
    %4779 = vmatpush1.msra.mxu0 0.0
    %4780 = vmatprep.subr.mxu0 0.0
    %4781 = vmatpush1.msra.mxu0 0.0
    %4782 = vmatprep.subr.mxu0 0.0
    %4783 = vmatpush1.msra.mxu0 0.0
    %4784 = vmatprep.subr.mxu0 0.0
    %4785 = vmatpush1.msra.mxu0 0.0
    %4786 = vmatprep.subr.mxu0 0.0
    %4787 = vmatpush1.msra.mxu0 0.0
    %4788 = vmatprep.subr.mxu0 0.0
    %4789 = vmatpush1.msra.mxu0 0.0
    %4790 = vmatprep.subr.mxu0 0.0
    %4791 = vmatpush1.msra.mxu0 0.0
    %4792 = vmatprep.subr.mxu0 0.0
    %4793 = vmatpush1.msra.mxu0 0.0
    %4794 = vmatprep.subr.mxu0 0.0
    %4795 = vmatpush1.msra.mxu0 0.0
    %4796 = vmatprep.subr.mxu0 0.0
    %4797 = vmatpush1.msra.mxu0 0.0
    %4798 = vmatprep.subr.mxu0 0.0
    %4799 = vmatpush1.msra.mxu0 0.0
    %4800 = vmatprep.subr.mxu0 0.0
    %4801 = vmatpush1.msra.mxu0 0.0
    %4802 = vmatprep.subr.mxu0 0.0
    %4803 = vmatpush1.msra.mxu0 0.0
    %4804 = vmatprep.subr.mxu0 0.0
    %4805 = vmatpush1.msra.mxu0 0.0
    %4806 = vmatprep.subr.mxu0 0.0
    %4807 = vmatpush1.msra.mxu0 0.0
    %4808 = vmatprep.subr.mxu0 0.0
    %4809 = vmatpush1.msra.mxu0 0.0
    %4810 = vmatprep.subr.mxu0 0.0
    %4811 = vmatpush1.msra.mxu0 0.0
    %4812 = vmatprep.subr.mxu0 0.0
    %4813 = vmatpush1.msra.mxu0 0.0
    %4814 = vmatprep.subr.mxu0 0.0
    %4815 = vmatpush1.msra.mxu0 0.0
    %4816 = vmatprep.subr.mxu0 0.0
    %4817 = vmatpush1.msra.mxu0 0.0
    %4818 = vmatprep.subr.mxu0 0.0
    %4819 = vmatpush1.msra.mxu0 0.0
    %4820 = vmatprep.mubr.f32.mxu0 0.0
    %4821 = vmatmul.mubr.f32.gmra.mrb[0].mxu0 %v4754
    %v4822 = vpop.f32.mrb[0].mxu0
    %v4823 = vadd.f32 0.0, %v4822
    %v4824 = vpop.f32.mrb[0].mxu0
    %4825 = vdwg.mxu0
    %v4827 = vrot.slane %v4823, 1
    %4828 = vrot.lane.b32.xlu0 %v4823, 64
    %v4829 = vpop.permute.xlu0 %4828
    %4830 = vrot.lane.b32.xlu0 %v4827, 64
    %v4831 = vpop.permute.xlu0 %4830
    %v4834 = vadd.f32 %v3559, %v4829
    %v4835 = vadd.f32 %v3563, %v4831
    %v4836 = vxor.u32 %v4834, 2147483648
    %v4837 = vxor.u32 %v4835, 2147483648
    %v4838 = vmul.f32 %v4836, 1.442695
    %v4839 = vpow.pop %v4838
    %v4840 = vmul.f32 %v4837, 1.442695
    %v4841 = vpow.pop %v4840
    %v4842 = vadd.f32 %v4839, 1.0
    %v4843 = vadd.f32 %v4841, 1.0
    %v4844 = vrcp.pop %v4842
    %v4845 = vmul.f32 1.0, %v4844
    %v4846 = vrcp.pop %v4843
    %v4847 = vmul.f32 1.0, %v4846
    %v4848 = vtanh.pop %v4834
    %v4849 = vtanh.pop %v4835
    %v4851 = vrot.slane %v4735, 1
    %4852 = vrot.lane.b32.xlu0 %v4735, 80
    %v4853 = vpop.permute.xlu0 %4852
    %4854 = vrot.lane.b32.xlu0 %v4851, 80
    %v4855 = vpop.permute.xlu0 %4854
    %v4858 = vmul.f32 %v4845, %v4853
    %v4859 = vmul.f32 %v4847, %v4855
    %4862 = vrot.lane.b32.xlu0 %v4848, 96
    %v4863 = vpop.permute.xlu0 %4862
    %4864 = vrot.lane.b32.xlu0 %v4849, 96
    %v4865 = vpop.permute.xlu0 %4864
    %v4868 = vmul.f32 %v4845, %v4863
    %v4869 = vmul.f32 %v4847, %v4865
    %4872 = vrot.lane.b32.xlu0 %v4868, 16
    %v4873 = vpop.permute.xlu0 %4872
    %4874 = vrot.lane.b32.xlu0 %v4869, 16
    %v4875 = vpop.permute.xlu0 %4874
    %v4878 = vadd.f32 %v4858, %v4873
    %v4879 = vadd.f32 %v4859, %v4875
    %v4880 = vtanh.pop %v4878
    %v4881 = vtanh.pop %v4879
    %4884 = vrot.lane.b32.xlu0 %v4880, 32
    %v4885 = vpop.permute.xlu0 %4884
    %4886 = vrot.lane.b32.xlu0 %v4881, 32
    %v4887 = vpop.permute.xlu0 %4886
    %v4890 = vmul.f32 %v4845, %v4885
    %v4891 = vmul.f32 %v4847, %v4887
    %v4894 = vlaneseq
    %v4895 = vshrl.u32 %v4894, 7
    %v4896 = vsub.s32 0, %v4895
    %v4897 = vrot.slane %v4890, %v4896
    %v4898 = vlaneseq
    %v4899 = vshrl.u32 %v4898, 7
    %v4900 = vsub.s32 0, %v4899
    %v4901 = vrot.slane %v4891, %v4900
    %v4902 = vsel %vm1704, %v4901, %v4897
    %4903 = vrot.lane.b32.xlu0 %v4902, 16
    %v4904 = vpop.permute.xlu0 %4903
    %v4906 = vmul.f32 %v3569, %v4904
    %v4907 = vld [vmem:[%s14] sm:$0x3]
    %4909 = vrot.lane.b32.xlu0 %v4906, 16
    %v4910 = vpop.permute.xlu0 %4909
    %v4912 = vsel %vm365, %v3729, %v4910
    %v4915 = vunpack.c.l.s4 1966171168
    %v4916 = vunpack.c.0.s8 %v4915
    %v4917 = vlaneseq
    %v4918 = vshrl.u32 %v4917, 7
    %v4919 = vsub.s32 %v4916, %v4918
    %v4920 = vrot.slane %v4912, %v4919
    %v4921 = vcombine.high %v4920, %v4920
    %v4923 = vunpack.c.l.s4 1966171168
    %v4924 = vunpack.c.0.s8 %v4923
    %v4925 = vlaneseq
    %v4926 = vshrl.u32 %v4925, 7
    %v4927 = vsub.s32 %v4924, %v4926
    %v4928 = vrot.slane %v4920, %v4927
    %v4930 = vunpack.c.l.s4 1966171168
    %v4931 = vunpack.c.0.s8 %v4930
    %v4932 = vlaneseq
    %v4933 = vshrl.u32 %v4932, 7
    %v4934 = vsub.s32 %v4931, %v4933
    %v4935 = vrot.slane %v4921, %v4934
    %vm4938 = vcmask 253952
    %4939 = vst.msk [vmem:[#allocation2] sm:$0x1] %vm4938, %v4928
    %4940 = vst.msk [vmem:[#allocation2 + $0x4] sm:$0x1] %vm4938, %v4935
    %v4941 = vld [vmem:[%s13] sm:$0xff]
    %v4942 = vld [vmem:[%s13 + $0x8] sm:$0xff]
    %v4943 = vld [vmem:[%s13 + $0x10] sm:$0xff]
    %v4944 = vld [vmem:[%s13 + $0x18] sm:$0xff]
    %v4945 = vlaneseq
    %v4946 = vshrl.u32 %v4945, 7
    %v4947 = vsub.s32 0, %v4946
    %v4948 = vrot.slane %v4907, %v4947
    %v4949 = vsel %vm63, %v4912, 0
    %4951 = vmatprep.subr.mxu0 0.0
    %4952 = vmatpush1.msra.mxu0 %v4941
    %4953 = vmatprep.subr.mxu0 0.0
    %4954 = vmatpush1.msra.mxu0 %v4942
    %4955 = vmatprep.subr.mxu0 0.0
    %4956 = vmatpush1.msra.mxu0 %v4943
    %4957 = vmatprep.subr.mxu0 0.0
    %4958 = vmatpush1.msra.mxu0 %v4944
    %4959 = vmatprep.subr.mxu0 0.0
    %4960 = vmatpush1.msra.mxu0 0.0
    %4961 = vmatprep.subr.mxu0 0.0
    %4962 = vmatpush1.msra.mxu0 0.0
    %4963 = vmatprep.subr.mxu0 0.0
    %4964 = vmatpush1.msra.mxu0 0.0
    %4965 = vmatprep.subr.mxu0 0.0
    %4966 = vmatpush1.msra.mxu0 0.0
    %4967 = vmatprep.subr.mxu0 0.0
    %4968 = vmatpush1.msra.mxu0 0.0
    %4969 = vmatprep.subr.mxu0 0.0
    %4970 = vmatpush1.msra.mxu0 0.0
    %4971 = vmatprep.subr.mxu0 0.0
    %4972 = vmatpush1.msra.mxu0 0.0
    %4973 = vmatprep.subr.mxu0 0.0
    %4974 = vmatpush1.msra.mxu0 0.0
    %4975 = vmatprep.subr.mxu0 0.0
    %4976 = vmatpush1.msra.mxu0 0.0
    %4977 = vmatprep.subr.mxu0 0.0
    %4978 = vmatpush1.msra.mxu0 0.0
    %4979 = vmatprep.subr.mxu0 0.0
    %4980 = vmatpush1.msra.mxu0 0.0
    %4981 = vmatprep.subr.mxu0 0.0
    %4982 = vmatpush1.msra.mxu0 0.0
    %4983 = vmatprep.subr.mxu0 0.0
    %4984 = vmatpush1.msra.mxu0 0.0
    %4985 = vmatprep.subr.mxu0 0.0
    %4986 = vmatpush1.msra.mxu0 0.0
    %4987 = vmatprep.subr.mxu0 0.0
    %4988 = vmatpush1.msra.mxu0 0.0
    %4989 = vmatprep.subr.mxu0 0.0
    %4990 = vmatpush1.msra.mxu0 0.0
    %4991 = vmatprep.subr.mxu0 0.0
    %4992 = vmatpush1.msra.mxu0 0.0
    %4993 = vmatprep.subr.mxu0 0.0
    %4994 = vmatpush1.msra.mxu0 0.0
    %4995 = vmatprep.subr.mxu0 0.0
    %4996 = vmatpush1.msra.mxu0 0.0
    %4997 = vmatprep.subr.mxu0 0.0
    %4998 = vmatpush1.msra.mxu0 0.0
    %4999 = vmatprep.subr.mxu0 0.0
    %5000 = vmatpush1.msra.mxu0 0.0
    %5001 = vmatprep.subr.mxu0 0.0
    %5002 = vmatpush1.msra.mxu0 0.0
    %5003 = vmatprep.subr.mxu0 0.0
    %5004 = vmatpush1.msra.mxu0 0.0
    %5005 = vmatprep.subr.mxu0 0.0
    %5006 = vmatpush1.msra.mxu0 0.0
    %5007 = vmatprep.subr.mxu0 0.0
    %5008 = vmatpush1.msra.mxu0 0.0
    %5009 = vmatprep.subr.mxu0 0.0
    %5010 = vmatpush1.msra.mxu0 0.0
    %5011 = vmatprep.subr.mxu0 0.0
    %5012 = vmatpush1.msra.mxu0 0.0
    %5013 = vmatprep.subr.mxu0 0.0
    %5014 = vmatpush1.msra.mxu0 0.0
    %5015 = vmatprep.mubr.f32.mxu0 0.0
    %5016 = vmatmul.mubr.f32.gmra.mrb[0].mxu0 %v4949
    %v5017 = vpop.f32.mrb[0].mxu0
    %v5018 = vadd.f32 %v4948, %v5017
    %v5019 = vpop.f32.mrb[0].mxu0
    %5020 = vdwg.mxu0
    %v5021 = vtanh.pop %v5018
    %v5022 = vlaneseq
    %v5023 = vshrl.u32 %v5022, 7
    %v5024 = vsub.s32 1, %v5023
    %v5025 = vrot.slane %v4907, %v5024
    %v5026 = vmul.f32 %v5021, %v5025
    %vm5027 = vcmask 254976
    %v5028 = vsel %vm5027, %v5026, 0.0
    %5029 = vadd.xlane.f32.xlu0 %v5028
    %v5030 = vpop.xlane.xlu0 %5029
    %5032 = vrot.lane.b32.xlu0 %v4750, 16
    %v5033 = vpop.permute.xlu0 %5032
    %v5035 = vsel %vm365, %v3901, %v5033
    %v5038 = vunpack.c.l.s4 1966171168
    %v5039 = vunpack.c.0.s8 %v5038
    %v5040 = vlaneseq
    %v5041 = vshrl.u32 %v5040, 7
    %v5042 = vsub.s32 %v5039, %v5041
    %v5043 = vrot.slane %v5035, %v5042
    %v5044 = vcombine.high %v5043, %v5043
    %v5046 = vunpack.c.l.s4 1966171168
    %v5047 = vunpack.c.0.s8 %v5046
    %v5048 = vlaneseq
    %v5049 = vshrl.u32 %v5048, 7
    %v5050 = vsub.s32 %v5047, %v5049
    %v5051 = vrot.slane %v5043, %v5050
    %v5053 = vunpack.c.l.s4 1966171168
    %v5054 = vunpack.c.0.s8 %v5053
    %v5055 = vlaneseq
    %v5056 = vshrl.u32 %v5055, 7
    %v5057 = vsub.s32 %v5054, %v5056
    %v5058 = vrot.slane %v5044, %v5057
    %5061 = vst.msk [vmem:[#allocation2 + $0x1] sm:$0x1] %vm4938, %v5051
    %5062 = vst.msk [vmem:[#allocation2 + $0x5] sm:$0x1] %vm4938, %v5058
    %v5063 = vld [vmem:[%s13] sm:$0xff]
    %v5064 = vld [vmem:[%s13 + $0x8] sm:$0xff]
    %v5065 = vld [vmem:[%s13 + $0x10] sm:$0xff]
    %v5066 = vld [vmem:[%s13 + $0x18] sm:$0xff]
    %v5067 = vsel %vm63, %v5035, 0
    %5069 = vmatprep.subr.mxu0 0.0
    %5070 = vmatpush1.msra.mxu0 %v5063
    %5071 = vmatprep.subr.mxu0 0.0
    %5072 = vmatpush1.msra.mxu0 %v5064
    %5073 = vmatprep.subr.mxu0 0.0
    %5074 = vmatpush1.msra.mxu0 %v5065
    %5075 = vmatprep.subr.mxu0 0.0
    %5076 = vmatpush1.msra.mxu0 %v5066
    %5077 = vmatprep.subr.mxu0 0.0
    %5078 = vmatpush1.msra.mxu0 0.0
    %5079 = vmatprep.subr.mxu0 0.0
    %5080 = vmatpush1.msra.mxu0 0.0
    %5081 = vmatprep.subr.mxu0 0.0
    %5082 = vmatpush1.msra.mxu0 0.0
    %5083 = vmatprep.subr.mxu0 0.0
    %5084 = vmatpush1.msra.mxu0 0.0
    %5085 = vmatprep.subr.mxu0 0.0
    %5086 = vmatpush1.msra.mxu0 0.0
    %5087 = vmatprep.subr.mxu0 0.0
    %5088 = vmatpush1.msra.mxu0 0.0
    %5089 = vmatprep.subr.mxu0 0.0
    %5090 = vmatpush1.msra.mxu0 0.0
    %5091 = vmatprep.subr.mxu0 0.0
    %5092 = vmatpush1.msra.mxu0 0.0
    %5093 = vmatprep.subr.mxu0 0.0
    %5094 = vmatpush1.msra.mxu0 0.0
    %5095 = vmatprep.subr.mxu0 0.0
    %5096 = vmatpush1.msra.mxu0 0.0
    %5097 = vmatprep.subr.mxu0 0.0
    %5098 = vmatpush1.msra.mxu0 0.0
    %5099 = vmatprep.subr.mxu0 0.0
    %5100 = vmatpush1.msra.mxu0 0.0
    %5101 = vmatprep.subr.mxu0 0.0
    %5102 = vmatpush1.msra.mxu0 0.0
    %5103 = vmatprep.subr.mxu0 0.0
    %5104 = vmatpush1.msra.mxu0 0.0
    %5105 = vmatprep.subr.mxu0 0.0
    %5106 = vmatpush1.msra.mxu0 0.0
    %5107 = vmatprep.subr.mxu0 0.0
    %5108 = vmatpush1.msra.mxu0 0.0
    %5109 = vmatprep.subr.mxu0 0.0
    %5110 = vmatpush1.msra.mxu0 0.0
    %5111 = vmatprep.subr.mxu0 0.0
    %5112 = vmatpush1.msra.mxu0 0.0
    %5113 = vmatprep.subr.mxu0 0.0
    %5114 = vmatpush1.msra.mxu0 0.0
    %5115 = vmatprep.subr.mxu0 0.0
    %5116 = vmatpush1.msra.mxu0 0.0
    %5117 = vmatprep.subr.mxu0 0.0
    %5118 = vmatpush1.msra.mxu0 0.0
    %5119 = vmatprep.subr.mxu0 0.0
    %5120 = vmatpush1.msra.mxu0 0.0
    %5121 = vmatprep.subr.mxu0 0.0
    %5122 = vmatpush1.msra.mxu0 0.0
    %5123 = vmatprep.subr.mxu0 0.0
    %5124 = vmatpush1.msra.mxu0 0.0
    %5125 = vmatprep.subr.mxu0 0.0
    %5126 = vmatpush1.msra.mxu0 0.0
    %5127 = vmatprep.subr.mxu0 0.0
    %5128 = vmatpush1.msra.mxu0 0.0
    %5129 = vmatprep.subr.mxu0 0.0
    %5130 = vmatpush1.msra.mxu0 0.0
    %5131 = vmatprep.subr.mxu0 0.0
    %5132 = vmatpush1.msra.mxu0 0.0
    %5133 = vmatprep.mubr.f32.mxu0 0.0
    %5134 = vmatmul.mubr.f32.gmra.mrb[0].mxu0 %v5067
    %v5135 = vpop.f32.mrb[0].mxu0
    %v5136 = vadd.f32 %v4948, %v5135
    %v5137 = vpop.f32.mrb[0].mxu0
    %5138 = vdwg.mxu0
    %v5139 = vtanh.pop %v5136
    %v5140 = vmul.f32 %v5139, %v5025
    %v5141 = vsel %vm5027, %v5140, 0.0
    %5142 = vadd.xlane.f32.xlu0 %v5141
    %v5143 = vpop.xlane.xlu0 %5142
    %5145 = vrot.lane.b32.xlu0 %v4577, 16
    %v5146 = vpop.permute.xlu0 %5145
    %v5148 = vsel %vm365, %v4076, %v5146
    %v5151 = vunpack.c.l.s4 1966171168
    %v5152 = vunpack.c.0.s8 %v5151
    %v5153 = vlaneseq
    %v5154 = vshrl.u32 %v5153, 7
    %v5155 = vsub.s32 %v5152, %v5154
    %v5156 = vrot.slane %v5148, %v5155
    %v5157 = vcombine.high %v5156, %v5156
    %v5159 = vunpack.c.l.s4 1966171168
    %v5160 = vunpack.c.0.s8 %v5159
    %v5161 = vlaneseq
    %v5162 = vshrl.u32 %v5161, 7
    %v5163 = vsub.s32 %v5160, %v5162
    %v5164 = vrot.slane %v5156, %v5163
    %v5166 = vunpack.c.l.s4 1966171168
    %v5167 = vunpack.c.0.s8 %v5166
    %v5168 = vlaneseq
    %v5169 = vshrl.u32 %v5168, 7
    %v5170 = vsub.s32 %v5167, %v5169
    %v5171 = vrot.slane %v5157, %v5170
    %5174 = vst.msk [vmem:[#allocation2 + $0x2] sm:$0x1] %vm4938, %v5164
    %5175 = vst.msk [vmem:[#allocation2 + $0x6] sm:$0x1] %vm4938, %v5171
    %v5176 = vld [vmem:[%s13] sm:$0xff]
    %v5177 = vld [vmem:[%s13 + $0x8] sm:$0xff]
    %v5178 = vld [vmem:[%s13 + $0x10] sm:$0xff]
    %v5179 = vld [vmem:[%s13 + $0x18] sm:$0xff]
    %v5180 = vsel %vm63, %v5148, 0
    %5182 = vmatprep.subr.mxu0 0.0
    %5183 = vmatpush1.msra.mxu0 %v5176
    %5184 = vmatprep.subr.mxu0 0.0
    %5185 = vmatpush1.msra.mxu0 %v5177
    %5186 = vmatprep.subr.mxu0 0.0
    %5187 = vmatpush1.msra.mxu0 %v5178
    %5188 = vmatprep.subr.mxu0 0.0
    %5189 = vmatpush1.msra.mxu0 %v5179
    %5190 = vmatprep.subr.mxu0 0.0
    %5191 = vmatpush1.msra.mxu0 0.0
    %5192 = vmatprep.subr.mxu0 0.0
    %5193 = vmatpush1.msra.mxu0 0.0
    %5194 = vmatprep.subr.mxu0 0.0
    %5195 = vmatpush1.msra.mxu0 0.0
    %5196 = vmatprep.subr.mxu0 0.0
    %5197 = vmatpush1.msra.mxu0 0.0
    %5198 = vmatprep.subr.mxu0 0.0
    %5199 = vmatpush1.msra.mxu0 0.0
    %5200 = vmatprep.subr.mxu0 0.0
    %5201 = vmatpush1.msra.mxu0 0.0
    %5202 = vmatprep.subr.mxu0 0.0
    %5203 = vmatpush1.msra.mxu0 0.0
    %5204 = vmatprep.subr.mxu0 0.0
    %5205 = vmatpush1.msra.mxu0 0.0
    %5206 = vmatprep.subr.mxu0 0.0
    %5207 = vmatpush1.msra.mxu0 0.0
    %5208 = vmatprep.subr.mxu0 0.0
    %5209 = vmatpush1.msra.mxu0 0.0
    %5210 = vmatprep.subr.mxu0 0.0
    %5211 = vmatpush1.msra.mxu0 0.0
    %5212 = vmatprep.subr.mxu0 0.0
    %5213 = vmatpush1.msra.mxu0 0.0
    %5214 = vmatprep.subr.mxu0 0.0
    %5215 = vmatpush1.msra.mxu0 0.0
    %5216 = vmatprep.subr.mxu0 0.0
    %5217 = vmatpush1.msra.mxu0 0.0
    %5218 = vmatprep.subr.mxu0 0.0
    %5219 = vmatpush1.msra.mxu0 0.0
    %5220 = vmatprep.subr.mxu0 0.0
    %5221 = vmatpush1.msra.mxu0 0.0
    %5222 = vmatprep.subr.mxu0 0.0
    %5223 = vmatpush1.msra.mxu0 0.0
    %5224 = vmatprep.subr.mxu0 0.0
    %5225 = vmatpush1.msra.mxu0 0.0
    %5226 = vmatprep.subr.mxu0 0.0
    %5227 = vmatpush1.msra.mxu0 0.0
    %5228 = vmatprep.subr.mxu0 0.0
    %5229 = vmatpush1.msra.mxu0 0.0
    %5230 = vmatprep.subr.mxu0 0.0
    %5231 = vmatpush1.msra.mxu0 0.0
    %5232 = vmatprep.subr.mxu0 0.0
    %5233 = vmatpush1.msra.mxu0 0.0
    %5234 = vmatprep.subr.mxu0 0.0
    %5235 = vmatpush1.msra.mxu0 0.0
    %5236 = vmatprep.subr.mxu0 0.0
    %5237 = vmatpush1.msra.mxu0 0.0
    %5238 = vmatprep.subr.mxu0 0.0
    %5239 = vmatpush1.msra.mxu0 0.0
    %5240 = vmatprep.subr.mxu0 0.0
    %5241 = vmatpush1.msra.mxu0 0.0
    %5242 = vmatprep.subr.mxu0 0.0
    %5243 = vmatpush1.msra.mxu0 0.0
    %5244 = vmatprep.subr.mxu0 0.0
    %5245 = vmatpush1.msra.mxu0 0.0
    %5246 = vmatprep.mubr.f32.mxu0 0.0
    %5247 = vmatmul.mubr.f32.gmra.mrb[0].mxu0 %v5180
    %v5248 = vpop.f32.mrb[0].mxu0
    %v5249 = vadd.f32 %v4948, %v5248
    %v5250 = vpop.f32.mrb[0].mxu0
    %5251 = vdwg.mxu0
    %v5252 = vtanh.pop %v5249
    %v5253 = vmul.f32 %v5252, %v5025
    %v5254 = vsel %vm5027, %v5253, 0.0
    %5255 = vadd.xlane.f32.xlu0 %v5254
    %v5256 = vpop.xlane.xlu0 %5255
    %5258 = vrot.lane.b32.xlu0 %v4403, 16
    %v5259 = vpop.permute.xlu0 %5258
    %v5261 = vsel %vm365, %v4233, %v5259
    %v5264 = vunpack.c.l.s4 1966171168
    %v5265 = vunpack.c.0.s8 %v5264
    %v5266 = vlaneseq
    %v5267 = vshrl.u32 %v5266, 7
    %v5268 = vsub.s32 %v5265, %v5267
    %v5269 = vrot.slane %v5261, %v5268
    %v5270 = vcombine.high %v5269, %v5269
    %v5272 = vunpack.c.l.s4 1966171168
    %v5273 = vunpack.c.0.s8 %v5272
    %v5274 = vlaneseq
    %v5275 = vshrl.u32 %v5274, 7
    %v5276 = vsub.s32 %v5273, %v5275
    %v5277 = vrot.slane %v5269, %v5276
    %v5279 = vunpack.c.l.s4 1966171168
    %v5280 = vunpack.c.0.s8 %v5279
    %v5281 = vlaneseq
    %v5282 = vshrl.u32 %v5281, 7
    %v5283 = vsub.s32 %v5280, %v5282
    %v5284 = vrot.slane %v5270, %v5283
    %5287 = vst.msk [vmem:[#allocation2 + $0x3] sm:$0x1] %vm4938, %v5277
    %5288 = vst.msk [vmem:[#allocation2 + $0x7] sm:$0x1] %vm4938, %v5284
    %v5289 = vld [vmem:[%s13] sm:$0xff]
    %v5290 = vld [vmem:[%s13 + $0x8] sm:$0xff]
    %v5291 = vld [vmem:[%s13 + $0x10] sm:$0xff]
    %v5292 = vld [vmem:[%s13 + $0x18] sm:$0xff]
    %v5293 = vsel %vm63, %v5261, 0
    %5295 = vmatprep.subr.mxu0 0.0
    %5296 = vmatpush1.msra.mxu0 %v5289
    %5297 = vmatprep.subr.mxu0 0.0
    %5298 = vmatpush1.msra.mxu0 %v5290
    %5299 = vmatprep.subr.mxu0 0.0
    %5300 = vmatpush1.msra.mxu0 %v5291
    %5301 = vmatprep.subr.mxu0 0.0
    %5302 = vmatpush1.msra.mxu0 %v5292
    %5303 = vmatprep.subr.mxu0 0.0
    %5304 = vmatpush1.msra.mxu0 0.0
    %5305 = vmatprep.subr.mxu0 0.0
    %5306 = vmatpush1.msra.mxu0 0.0
    %5307 = vmatprep.subr.mxu0 0.0
    %5308 = vmatpush1.msra.mxu0 0.0
    %5309 = vmatprep.subr.mxu0 0.0
    %5310 = vmatpush1.msra.mxu0 0.0
    %5311 = vmatprep.subr.mxu0 0.0
    %5312 = vmatpush1.msra.mxu0 0.0
    %5313 = vmatprep.subr.mxu0 0.0
    %5314 = vmatpush1.msra.mxu0 0.0
    %5315 = vmatprep.subr.mxu0 0.0
    %5316 = vmatpush1.msra.mxu0 0.0
    %5317 = vmatprep.subr.mxu0 0.0
    %5318 = vmatpush1.msra.mxu0 0.0
    %5319 = vmatprep.subr.mxu0 0.0
    %5320 = vmatpush1.msra.mxu0 0.0
    %5321 = vmatprep.subr.mxu0 0.0
    %5322 = vmatpush1.msra.mxu0 0.0
    %5323 = vmatprep.subr.mxu0 0.0
    %5324 = vmatpush1.msra.mxu0 0.0
    %5325 = vmatprep.subr.mxu0 0.0
    %5326 = vmatpush1.msra.mxu0 0.0
    %5327 = vmatprep.subr.mxu0 0.0
    %5328 = vmatpush1.msra.mxu0 0.0
    %5329 = vmatprep.subr.mxu0 0.0
    %5330 = vmatpush1.msra.mxu0 0.0
    %5331 = vmatprep.subr.mxu0 0.0
    %5332 = vmatpush1.msra.mxu0 0.0
    %5333 = vmatprep.subr.mxu0 0.0
    %5334 = vmatpush1.msra.mxu0 0.0
    %5335 = vmatprep.subr.mxu0 0.0
    %5336 = vmatpush1.msra.mxu0 0.0
    %5337 = vmatprep.subr.mxu0 0.0
    %5338 = vmatpush1.msra.mxu0 0.0
    %5339 = vmatprep.subr.mxu0 0.0
    %5340 = vmatpush1.msra.mxu0 0.0
    %5341 = vmatprep.subr.mxu0 0.0
    %5342 = vmatpush1.msra.mxu0 0.0
    %5343 = vmatprep.subr.mxu0 0.0
    %5344 = vmatpush1.msra.mxu0 0.0
    %5345 = vmatprep.subr.mxu0 0.0
    %5346 = vmatpush1.msra.mxu0 0.0
    %5347 = vmatprep.subr.mxu0 0.0
    %5348 = vmatpush1.msra.mxu0 0.0
    %5349 = vmatprep.subr.mxu0 0.0
    %5350 = vmatpush1.msra.mxu0 0.0
    %5351 = vmatprep.subr.mxu0 0.0
    %5352 = vmatpush1.msra.mxu0 0.0
    %5353 = vmatprep.subr.mxu0 0.0
    %5354 = vmatpush1.msra.mxu0 0.0
    %5355 = vmatprep.subr.mxu0 0.0
    %5356 = vmatpush1.msra.mxu0 0.0
    %5357 = vmatprep.subr.mxu0 0.0
    %5358 = vmatpush1.msra.mxu0 0.0
    %5359 = vmatprep.mubr.f32.mxu0 0.0
    %5360 = vmatmul.mubr.f32.gmra.mrb[0].mxu0 %v5293
    %v5361 = vpop.f32.mrb[0].mxu0
    %v5362 = vadd.f32 %v4948, %v5361
    %v5363 = vpop.f32.mrb[0].mxu0
    %5364 = vdwg.mxu0
    %v5365 = vtanh.pop %v5362
    %v5366 = vmul.f32 %v5365, %v5025
    %v5367 = vsel %vm5027, %v5366, 0.0
    %5368 = vadd.xlane.f32.xlu0 %v5367
    %v5369 = vpop.xlane.xlu0 %5368
    %vm5370 = vcmask 7168
    %v5371 = vsel %vm5370, %v5030, %v5143
    %vm5372 = vcmask 15360
    %v5373 = vsel %vm5372, %v5371, %v5256
    %vm5374 = vcmask 23552
    %v5375 = vsel %vm5374, %v5373, %v5369
    %vm5376 = vcmp.gt.f32.partialorder %v3472, 0.5
    %v5377 = vsel %vm5376, %v5375, -1e-32
    %v5378 = vsel %vm3473, %v5377, -inf
    %5379 = vmax.xlane.f32.xlu0 %v5378
    %v5380 = vpop.xlane.xlu0 %5379
    %v5381 = vsub.f32 %v5377, %v5380
    %v5382 = vmul.f32 %v5381, 1.442695
    %v5383 = vpow.pop %v5382
    %v5384 = vsel %vm3473, %v5383, 0.0
    %5385 = vadd.xlane.f32.xlu0 %v5384
    %v5386 = vpop.xlane.xlu0 %5385
    %v5387 = vrcp.pop %v5386
    %v5388 = vmul.f32 %v5383, %v5387
    %5390 = vset.pattern.permute.xlu0 0
    %5391 = vperm.xlu0 %5390, %v5388
    %v5392 = vpop.permute.xlu0 %5391
    %v5394 = vmul.f32 %v5392, %v4912
    %v5395 = vadd.f32 %v5394, 0.0
    %5396 = vset.pattern.permute.xlu0 1
    %5397 = vperm.xlu0 %5396, %v5388
    %v5398 = vpop.permute.xlu0 %5397
    %v5400 = vmul.f32 %v5398, %v5035
    %v5401 = vadd.f32 %v5395, %v5400
    %5402 = vset.pattern.permute.xlu0 2
    %5403 = vperm.xlu0 %5402, %v5388
    %v5404 = vpop.permute.xlu0 %5403
    %v5406 = vmul.f32 %v5404, %v5148
    %v5407 = vadd.f32 %v5401, %v5406
    %5408 = vset.pattern.permute.xlu0 3
    %5409 = vperm.xlu0 %5408, %v5388
    %v5410 = vpop.permute.xlu0 %5409
    %v5412 = vmul.f32 %v5410, %v5261
    %v5413 = vadd.f32 %v5407, %v5412
    %5414 = vst.msk [vmem:[#allocation4] sm:$0x3] %vm5027, %v5413
    // Predicated region
    $region62: #{hierbert_forward.1} parent=1 // pred_check
      _
    $region63: #{hierbert_forward.1} parent=1 // pred_check_branch
      %5416 = sbr.rel (0) target = $region65
    $region64: #{hierbert_forward.1} parent=1 // pred_region
      %s5418 = ssub.s32 128, 128
      %5419 = vsyncadd [#allocation3], %s5418
      %s5420 = sshll.u32 [#allocation2], 4
      %s5421 = int_to_ptr.vmem [resolvable:$true] %s5420
      %5426 = dma.vmem_to_hbm [thread:$0]  %s5421, 128, %s15, [#allocation3], 64, 64, 4
    $region65: #{hierbert_forward.1} parent=1 // pred_fallthru
      _
    // Predicated region
    $region66: #{hierbert_forward.1} parent=1 // pred_check
      _
    $region67: #{hierbert_forward.1} parent=1 // pred_check_branch
      %5428 = sbr.rel (0) target = $region69
    $region68: #{hierbert_forward.1} parent=1 // pred_region
      %s5430 = ssub.s32 32, 32
      %5431 = vsyncadd [#allocation5], %s5430
      %s5433 = sshll.u32 [#allocation4], 4
      %s5434 = int_to_ptr.vmem [resolvable:$true] %s5433
      %5436 = dma.vmem_to_hbm [thread:$0]  %s5434, 32, %s16, [#allocation5]
    $region69: #{hierbert_forward.1} parent=1 // pred_fallthru
      _
    // Predicated region
    $region70: #{hierbert_forward.1} parent=1 // pred_check
      _
    $region71: #{hierbert_forward.1} parent=1 // pred_check_branch
      %5438 = sbr.rel (0) target = $region73
    $region72: #{hierbert_forward.1} parent=1 // pred_region
      %5439 = dma.done [#allocation3], 128
    $region73: #{hierbert_forward.1} parent=1 // pred_fallthru
      _
    // Predicated region
    $region74: #{hierbert_forward.1} parent=1 // pred_check
      _
    $region75: #{hierbert_forward.1} parent=1 // pred_check_branch
      %5441 = sbr.rel (0) target = $region77
    $region76: #{hierbert_forward.1} parent=1 // pred_region
      %5442 = dma.done [#allocation5], 32
    $region77: #{hierbert_forward.1} parent=1 // pred_fallthru
      _
    %5443 = vsyncpa [#allocation3], 1
    %5444 = vsyncpa [#allocation5], 1

</llo_original>
